<compile_context>
chip_gen: v5e
topology: v5e:2x2
jax: 0.10.0
libtpu: 0.0.40
codegen_flags: <defaults>
</compile_context>

<pallas_src>
import functools
import math

import jax
import jax.numpy as jnp
from jax.experimental import pallas as pl
from jax.experimental.pallas import tpu as pltpu


def _conv_bn_relu_kernel(x_ref, w_ref, shift_ref, o_ref, *,
                         ks, dil, d, h, lanes_in, lanes_out):
    """Fused conv + BN-shift + ReLU for one batch element.

    x_ref     : (1, d + 2*pad, h + 2*pad, (w + 2*pad) * inc)  bf16 padded volume
    w_ref     : (ks*ks, lanes_in, lanes_out) bf16 per-(kd,kh) weights with the
                kw taps folded into block-diagonal offsets (BN scale folded in)
    shift_ref : (1, lanes_out) f32 BN shift (tiled over W, zero in padded cols)
    o_ref     : (1, d*h, lanes_out) f32
    """
    rows = d * h
    acc = jnp.zeros((rows, lanes_out), jnp.float32)
    t = 0
    for kd in range(ks):
        for kh in range(ks):
            # Full trailing-lane slab for this (kd, kh): no lane-offset slicing,
            # the 3 kw taps live in the weight's K dimension.
            a = x_ref[0,
                      kd * dil: kd * dil + d,
                      kh * dil: kh * dil + h,
                      :]                                  # (d, h, lanes_in)
            a = a.reshape(rows, lanes_in)
            acc = acc + jnp.dot(a, w_ref[t],
                                preferred_element_type=jnp.float32)
            t += 1
    o_ref[0] = jnp.maximum(acc + shift_ref[...], 0.0).astype(o_ref.dtype)


def basic_convolution_block(x_ncdhw, weight, gamma, beta, run_mean, run_var,
                            *, ks=3, stride=1, dilation=1, eps=1e-5):
    """x_ncdhw: (N, inc, D, H, W) f32.  weight: (ks^3, inc, outc) torchsparse layout."""
    n, inc, d, h, w = x_ncdhw.shape
    k3, inc_w, outc = weight.shape
    assert k3 == ks ** 3 and inc_w == inc
    assert ks % 2 == 1
    assert stride == 1  # TODO(synk): stride>1 torchsparse downsampling not implemented
    dil = dilation
    pad = dil * (ks // 2)
    hp, wp = h + 2 * pad, w + 2 * pad

    # ---- fold eval-mode BatchNorm scale into the conv weights --------------
    scale = gamma / jnp.sqrt(run_var + eps)                       # (outc,)
    shift = (beta - run_mean * scale).astype(jnp.float32)         # (outc,)
    w_s = weight.astype(jnp.float32) * scale[None, None, :]       # (k3, inc, outc)

    # ---- lane-dense output: pad outc so W*outc_pad is a multiple of 128 ----
    outc_step = 128 // math.gcd(w, 128)
    outc_pad = -(-outc // outc_step) * outc_step                  # >= outc
    lanes_out = w * outc_pad
    lanes_in = wp * inc

    w_sp = jnp.pad(w_s, ((0, 0), (0, 0), (0, outc_pad - outc)))   # zero pad cols
    w5 = w_sp.reshape(ks, ks, ks, inc, outc_pad)                  # (kd,kh,kw,c,o)

    # fold kw into a block-diagonal-with-offset weight per (kd, kh):
    #   rows indexed by padded-W position v and input channel c,
    #   cols indexed by output-W position u and output channel o,
    #   nonzero iff v == u + kw*dil.
    u_idx = jnp.arange(w)
    v_idx = jnp.arange(wp)
    k_idx = jnp.arange(ks)
    sel = (v_idx[None, :, None] ==
           (u_idx[None, None, :] + k_idx[:, None, None] * dil)).astype(jnp.float32)
    w9 = jnp.einsum('kvu,dhkco->dhvcuo', sel, w5)                 # (ks,ks,wp,inc,w,outc_pad)
    w9 = w9.reshape(ks * ks, lanes_in, lanes_out).astype(jnp.bfloat16)

    shift_p = jnp.pad(shift, (0, outc_pad - outc))                # zeros in pad cols
    shift_row = jnp.tile(shift_p, (w,)).reshape(1, lanes_out)     # (1, W*outc_pad) f32

    # ---- activation: NCDHW -> NDHWC bf16, 'same' pad, merge (W, C) lanes ----
    x = jnp.transpose(x_ncdhw, (0, 2, 3, 4, 1)).astype(jnp.bfloat16)
    xp = jnp.pad(x, ((0, 0), (pad, pad), (pad, pad), (pad, pad), (0, 0)))
    xm = xp.reshape(n, d + 2 * pad, hp, lanes_in)                 # no halo duplication

    rows = d * h
    kernel = functools.partial(_conv_bn_relu_kernel, ks=ks, dil=dil, d=d, h=h,
                               lanes_in=lanes_in, lanes_out=lanes_out)

    out = pl.pallas_call(
        kernel,
        out_shape=jax.ShapeDtypeStruct((n, rows, lanes_out), jnp.float32),
        grid_spec=pltpu.PrefetchScalarGridSpec(
            num_scalar_prefetch=0,
            grid=(n,),
            in_specs=[
                pl.BlockSpec((1, d + 2 * pad, hp, lanes_in),
                             lambda b: (b, 0, 0, 0)),
                # constant block index -> weights stay resident across steps
                pl.BlockSpec((ks * ks, lanes_in, lanes_out),
                             lambda b: (0, 0, 0)),
                pl.BlockSpec((1, lanes_out), lambda b: (0, 0)),
            ],
            out_specs=pl.BlockSpec((1, rows, lanes_out),
                                   lambda b: (b, 0, 0)),
        ),
        compiler_params=pltpu.CompilerParams(
            dimension_semantics=("parallel",),
            # demo-scale VMEM need is ~2 MiB; 32 MiB is ample and safe on
            # v7x's 64 MiB as well as v5e/v6e's 128 MiB.
            vmem_limit_bytes=32 * 1024 * 1024),
    )(xm, w9, shift_row)

    # (n, D*H, W*outc_pad) -> (n, D, H, W, outc) -> NCDHW; padded channel
    # columns are exact zeros (zero weights + zero shift) and are dropped.
    out = out.reshape(n, d, h, w, outc_pad)[..., :outc]
    return jnp.transpose(out, (0, 4, 1, 2, 3))


def _reference_f32(x_ncdhw, weight, gamma, beta, run_mean, run_var,
                   *, ks=3, dilation=1, eps=1e-5):
    """Plain-JAX reference: f32 math on the same bf16-rounded operands."""
    dil = dilation
    pad = dil * (ks // 2)
    scale = gamma / jnp.sqrt(run_var + eps)
    shift = beta - run_mean * scale
    w_s = (weight.astype(jnp.float32) * scale[None, None, :]
           ).astype(jnp.bfloat16).astype(jnp.float32)
    x = jnp.transpose(x_ncdhw, (0, 2, 3, 4, 1)).astype(jnp.bfloat16).astype(jnp.float32)
    n, d, h, w, _ = x.shape
    xp = jnp.pad(x, ((0, 0), (pad, pad), (pad, pad), (pad, pad), (0, 0)))
    acc = jnp.zeros((n, d, h, w, weight.shape[-1]), jnp.float32)
    t = 0
    for kd in range(ks):
        for kh in range(ks):
            for kw in range(ks):
                sl = xp[:, kd * dil: kd * dil + d,
                        kh * dil: kh * dil + h,
                        kw * dil: kw * dil + w, :]
                acc = acc + jnp.einsum('ndhwc,co->ndhwo', sl, w_s[t])
                t += 1
    y = jnp.maximum(acc + shift, 0.0)
    return jnp.transpose(y, (0, 4, 1, 2, 3))


if __name__ == "__main__":
    # small deterministic setup: batch=2, inc=4, outc=12, spatial=16^3, ks=3
    # (outc=12 deliberately exercises the lane-padding path: 16*12 -> 16*16=256 lanes)
    N, INC, OUTC = 2, 4, 12
    D = H = W = 16
    KS = 3

    key = jax.random.PRNGKey(0)
    kx, kwt, kg, kb, km, kv = jax.random.split(key, 6)

    x = jax.random.normal(kx, (N, INC, D, H, W), dtype=jnp.float32)

    fan_in = KS ** 3 * INC
    weight = jax.random.normal(kwt, (KS ** 3, INC, OUTC), dtype=jnp.float32)
    weight = weight * (1.0 / jnp.sqrt(fan_in))

    gamma = 1.0 + 0.1 * jax.random.normal(kg, (OUTC,), dtype=jnp.float32)
    beta = 0.1 * jax.random.normal(kb, (OUTC,), dtype=jnp.float32)
    run_mean = 0.1 * jax.random.normal(km, (OUTC,), dtype=jnp.float32)
    run_var = 1.0 + 0.1 * jax.random.uniform(kv, (OUTC,), dtype=jnp.float32)

    out = basic_convolution_block(x, weight, gamma, beta, run_mean, run_var,
                                  ks=KS, stride=1, dilation=1)
    out = jax.block_until_ready(out)

    ref = _reference_f32(x, weight, gamma, beta, run_mean, run_var,
                         ks=KS, dilation=1)

    assert out.shape == (N, OUTC, D, H, W), out.shape
    assert bool(jnp.all(out >= 0.0))  # ReLU
    max_err = float(jnp.max(jnp.abs(out - ref)))
    # bf16 operands on the MXU vs f32 reference on bf16-rounded operands.
    assert bool(jnp.allclose(out, ref, atol=1e-2, rtol=1e-2)), max_err
    print("KERNEL_OK")
</pallas_src>

<mosaic_0001>
module attributes {stable_mosaic.version = 11 : i64} {
  func.func @_conv_bn_relu_kernel(%arg0: i32, %arg1: memref<1x18x18x72xbf16, #tpu.memory_space<vmem>>, %arg2: memref<9x72x256xbf16, #tpu.memory_space<vmem>>, %arg3: memref<1x256xf32, #tpu.memory_space<vmem>>, %arg4: memref<1x256x256xf32, #tpu.memory_space<vmem>>) attributes {dimension_semantics = [#tpu.dimension_semantics<parallel>], iteration_bounds = array<i64: 2>, scalar_prefetch = 0 : i64, scratch_operands = 0 : i64, tpu.core_type = #tpu.core_type<tc>, window_params = [{transform_indices = @transform_0, window_bounds = array<i64: 1, 18, 18, 72>}, {pipeline_mode = #tpu.pipeline_mode<synchronous>, transform_indices = @transform_1, window_bounds = array<i64: 9, 72, 256>}, {pipeline_mode = #tpu.pipeline_mode<synchronous>, transform_indices = @transform_2, window_bounds = array<i64: 1, 256>}, {transform_indices = @transform_3, window_bounds = array<i64: 1, 256, 256>}]} {
    %cst = arith.constant 0.000000e+00 : f32
    %0 = vector.broadcast %cst : f32 to vector<256x256xf32>
    %c0 = arith.constant 0 : index
    %c0_0 = arith.constant 0 : index
    %c0_1 = arith.constant 0 : index
    %c0_2 = arith.constant 0 : index
    %1 = vector.load %arg1[%c0, %c0_0, %c0_1, %c0_2] : memref<1x18x18x72xbf16, #tpu.memory_space<vmem>>, vector<1x16x16x72xbf16>
    %2 = vector.shape_cast %1 : vector<1x16x16x72xbf16> to vector<16x16x72xbf16>
    %3 = vector.shape_cast %2 : vector<16x16x72xbf16> to vector<256x72xbf16>
    %c0_3 = arith.constant 0 : index
    %c0_4 = arith.constant 0 : index
    %c0_5 = arith.constant 0 : index
    %4 = vector.load %arg2[%c0_3, %c0_4, %c0_5] : memref<9x72x256xbf16, #tpu.memory_space<vmem>>, vector<1x72x256xbf16>
    %5 = vector.shape_cast %4 : vector<1x72x256xbf16> to vector<72x256xbf16>
    %cst_6 = arith.constant dense<0.000000e+00> : vector<256x256xf32>
    %6 = tpu.matmul %3, %5, %cst_6 {dimension_numbers = #tpu.dot_dimension_numbers<[1], [0], [0], [1], [0, 0, 1, 1], [], []>} : vector<256x72xbf16>, vector<72x256xbf16>, vector<256x256xf32> -> vector<256x256xf32>
    %7 = arith.addf %0, %6 : vector<256x256xf32>
    %c0_7 = arith.constant 0 : index
    %c0_8 = arith.constant 0 : index
    %c1 = arith.constant 1 : index
    %c0_9 = arith.constant 0 : index
    %8 = vector.load %arg1[%c0_7, %c0_8, %c1, %c0_9] : memref<1x18x18x72xbf16, #tpu.memory_space<vmem>>, vector<1x16x16x72xbf16>
    %9 = vector.shape_cast %8 : vector<1x16x16x72xbf16> to vector<16x16x72xbf16>
    %10 = vector.shape_cast %9 : vector<16x16x72xbf16> to vector<256x72xbf16>
    %c1_10 = arith.constant 1 : index
    %c0_11 = arith.constant 0 : index
    %c0_12 = arith.constant 0 : index
    %11 = vector.load %arg2[%c1_10, %c0_11, %c0_12] : memref<9x72x256xbf16, #tpu.memory_space<vmem>>, vector<1x72x256xbf16>
    %12 = vector.shape_cast %11 : vector<1x72x256xbf16> to vector<72x256xbf16>
    %cst_13 = arith.constant dense<0.000000e+00> : vector<256x256xf32>
    %13 = tpu.matmul %10, %12, %cst_13 {dimension_numbers = #tpu.dot_dimension_numbers<[1], [0], [0], [1], [0, 0, 1, 1], [], []>} : vector<256x72xbf16>, vector<72x256xbf16>, vector<256x256xf32> -> vector<256x256xf32>
    %14 = arith.addf %7, %13 : vector<256x256xf32>
    %c0_14 = arith.constant 0 : index
    %c0_15 = arith.constant 0 : index
    %c2 = arith.constant 2 : index
    %c0_16 = arith.constant 0 : index
    %15 = vector.load %arg1[%c0_14, %c0_15, %c2, %c0_16] : memref<1x18x18x72xbf16, #tpu.memory_space<vmem>>, vector<1x16x16x72xbf16>
    %16 = vector.shape_cast %15 : vector<1x16x16x72xbf16> to vector<16x16x72xbf16>
    %17 = vector.shape_cast %16 : vector<16x16x72xbf16> to vector<256x72xbf16>
    %c2_17 = arith.constant 2 : index
    %c0_18 = arith.constant 0 : index
    %c0_19 = arith.constant 0 : index
    %18 = vector.load %arg2[%c2_17, %c0_18, %c0_19] : memref<9x72x256xbf16, #tpu.memory_space<vmem>>, vector<1x72x256xbf16>
    %19 = vector.shape_cast %18 : vector<1x72x256xbf16> to vector<72x256xbf16>
    %cst_20 = arith.constant dense<0.000000e+00> : vector<256x256xf32>
    %20 = tpu.matmul %17, %19, %cst_20 {dimension_numbers = #tpu.dot_dimension_numbers<[1], [0], [0], [1], [0, 0, 1, 1], [], []>} : vector<256x72xbf16>, vector<72x256xbf16>, vector<256x256xf32> -> vector<256x256xf32>
    %21 = arith.addf %14, %20 : vector<256x256xf32>
    %c0_21 = arith.constant 0 : index
    %c1_22 = arith.constant 1 : index
    %c0_23 = arith.constant 0 : index
    %c0_24 = arith.constant 0 : index
    %22 = vector.load %arg1[%c0_21, %c1_22, %c0_23, %c0_24] : memref<1x18x18x72xbf16, #tpu.memory_space<vmem>>, vector<1x16x16x72xbf16>
    %23 = vector.shape_cast %22 : vector<1x16x16x72xbf16> to vector<16x16x72xbf16>
    %24 = vector.shape_cast %23 : vector<16x16x72xbf16> to vector<256x72xbf16>
    %c3 = arith.constant 3 : index
    %c0_25 = arith.constant 0 : index
    %c0_26 = arith.constant 0 : index
    %25 = vector.load %arg2[%c3, %c0_25, %c0_26] : memref<9x72x256xbf16, #tpu.memory_space<vmem>>, vector<1x72x256xbf16>
    %26 = vector.shape_cast %25 : vector<1x72x256xbf16> to vector<72x256xbf16>
    %cst_27 = arith.constant dense<0.000000e+00> : vector<256x256xf32>
    %27 = tpu.matmul %24, %26, %cst_27 {dimension_numbers = #tpu.dot_dimension_numbers<[1], [0], [0], [1], [0, 0, 1, 1], [], []>} : vector<256x72xbf16>, vector<72x256xbf16>, vector<256x256xf32> -> vector<256x256xf32>
    %28 = arith.addf %21, %27 : vector<256x256xf32>
    %c0_28 = arith.constant 0 : index
    %c1_29 = arith.constant 1 : index
    %c1_30 = arith.constant 1 : index
    %c0_31 = arith.constant 0 : index
    %29 = vector.load %arg1[%c0_28, %c1_29, %c1_30, %c0_31] : memref<1x18x18x72xbf16, #tpu.memory_space<vmem>>, vector<1x16x16x72xbf16>
    %30 = vector.shape_cast %29 : vector<1x16x16x72xbf16> to vector<16x16x72xbf16>
    %31 = vector.shape_cast %30 : vector<16x16x72xbf16> to vector<256x72xbf16>
    %c4 = arith.constant 4 : index
    %c0_32 = arith.constant 0 : index
    %c0_33 = arith.constant 0 : index
    %32 = vector.load %arg2[%c4, %c0_32, %c0_33] : memref<9x72x256xbf16, #tpu.memory_space<vmem>>, vector<1x72x256xbf16>
    %33 = vector.shape_cast %32 : vector<1x72x256xbf16> to vector<72x256xbf16>
    %cst_34 = arith.constant dense<0.000000e+00> : vector<256x256xf32>
    %34 = tpu.matmul %31, %33, %cst_34 {dimension_numbers = #tpu.dot_dimension_numbers<[1], [0], [0], [1], [0, 0, 1, 1], [], []>} : vector<256x72xbf16>, vector<72x256xbf16>, vector<256x256xf32> -> vector<256x256xf32>
    %35 = arith.addf %28, %34 : vector<256x256xf32>
    %c0_35 = arith.constant 0 : index
    %c1_36 = arith.constant 1 : index
    %c2_37 = arith.constant 2 : index
    %c0_38 = arith.constant 0 : index
    %36 = vector.load %arg1[%c0_35, %c1_36, %c2_37, %c0_38] : memref<1x18x18x72xbf16, #tpu.memory_space<vmem>>, vector<1x16x16x72xbf16>
    %37 = vector.shape_cast %36 : vector<1x16x16x72xbf16> to vector<16x16x72xbf16>
    %38 = vector.shape_cast %37 : vector<16x16x72xbf16> to vector<256x72xbf16>
    %c5 = arith.constant 5 : index
    %c0_39 = arith.constant 0 : index
    %c0_40 = arith.constant 0 : index
    %39 = vector.load %arg2[%c5, %c0_39, %c0_40] : memref<9x72x256xbf16, #tpu.memory_space<vmem>>, vector<1x72x256xbf16>
    %40 = vector.shape_cast %39 : vector<1x72x256xbf16> to vector<72x256xbf16>
    %cst_41 = arith.constant dense<0.000000e+00> : vector<256x256xf32>
    %41 = tpu.matmul %38, %40, %cst_41 {dimension_numbers = #tpu.dot_dimension_numbers<[1], [0], [0], [1], [0, 0, 1, 1], [], []>} : vector<256x72xbf16>, vector<72x256xbf16>, vector<256x256xf32> -> vector<256x256xf32>
    %42 = arith.addf %35, %41 : vector<256x256xf32>
    %c0_42 = arith.constant 0 : index
    %c2_43 = arith.constant 2 : index
    %c0_44 = arith.constant 0 : index
    %c0_45 = arith.constant 0 : index
    %43 = vector.load %arg1[%c0_42, %c2_43, %c0_44, %c0_45] : memref<1x18x18x72xbf16, #tpu.memory_space<vmem>>, vector<1x16x16x72xbf16>
    %44 = vector.shape_cast %43 : vector<1x16x16x72xbf16> to vector<16x16x72xbf16>
    %45 = vector.shape_cast %44 : vector<16x16x72xbf16> to vector<256x72xbf16>
    %c6 = arith.constant 6 : index
    %c0_46 = arith.constant 0 : index
    %c0_47 = arith.constant 0 : index
    %46 = vector.load %arg2[%c6, %c0_46, %c0_47] : memref<9x72x256xbf16, #tpu.memory_space<vmem>>, vector<1x72x256xbf16>
    %47 = vector.shape_cast %46 : vector<1x72x256xbf16> to vector<72x256xbf16>
    %cst_48 = arith.constant dense<0.000000e+00> : vector<256x256xf32>
    %48 = tpu.matmul %45, %47, %cst_48 {dimension_numbers = #tpu.dot_dimension_numbers<[1], [0], [0], [1], [0, 0, 1, 1], [], []>} : vector<256x72xbf16>, vector<72x256xbf16>, vector<256x256xf32> -> vector<256x256xf32>
    %49 = arith.addf %42, %48 : vector<256x256xf32>
    %c0_49 = arith.constant 0 : index
    %c2_50 = arith.constant 2 : index
    %c1_51 = arith.constant 1 : index
    %c0_52 = arith.constant 0 : index
    %50 = vector.load %arg1[%c0_49, %c2_50, %c1_51, %c0_52] : memref<1x18x18x72xbf16, #tpu.memory_space<vmem>>, vector<1x16x16x72xbf16>
    %51 = vector.shape_cast %50 : vector<1x16x16x72xbf16> to vector<16x16x72xbf16>
    %52 = vector.shape_cast %51 : vector<16x16x72xbf16> to vector<256x72xbf16>
    %c7 = arith.constant 7 : index
    %c0_53 = arith.constant 0 : index
    %c0_54 = arith.constant 0 : index
    %53 = vector.load %arg2[%c7, %c0_53, %c0_54] : memref<9x72x256xbf16, #tpu.memory_space<vmem>>, vector<1x72x256xbf16>
    %54 = vector.shape_cast %53 : vector<1x72x256xbf16> to vector<72x256xbf16>
    %cst_55 = arith.constant dense<0.000000e+00> : vector<256x256xf32>
    %55 = tpu.matmul %52, %54, %cst_55 {dimension_numbers = #tpu.dot_dimension_numbers<[1], [0], [0], [1], [0, 0, 1, 1], [], []>} : vector<256x72xbf16>, vector<72x256xbf16>, vector<256x256xf32> -> vector<256x256xf32>
    %56 = arith.addf %49, %55 : vector<256x256xf32>
    %c0_56 = arith.constant 0 : index
    %c2_57 = arith.constant 2 : index
    %c2_58 = arith.constant 2 : index
    %c0_59 = arith.constant 0 : index
    %57 = vector.load %arg1[%c0_56, %c2_57, %c2_58, %c0_59] : memref<1x18x18x72xbf16, #tpu.memory_space<vmem>>, vector<1x16x16x72xbf16>
    %58 = vector.shape_cast %57 : vector<1x16x16x72xbf16> to vector<16x16x72xbf16>
    %59 = vector.shape_cast %58 : vector<16x16x72xbf16> to vector<256x72xbf16>
    %c8 = arith.constant 8 : index
    %c0_60 = arith.constant 0 : index
    %c0_61 = arith.constant 0 : index
    %60 = vector.load %arg2[%c8, %c0_60, %c0_61] : memref<9x72x256xbf16, #tpu.memory_space<vmem>>, vector<1x72x256xbf16>
    %61 = vector.shape_cast %60 : vector<1x72x256xbf16> to vector<72x256xbf16>
    %cst_62 = arith.constant dense<0.000000e+00> : vector<256x256xf32>
    %62 = tpu.matmul %59, %61, %cst_62 {dimension_numbers = #tpu.dot_dimension_numbers<[1], [0], [0], [1], [0, 0, 1, 1], [], []>} : vector<256x72xbf16>, vector<72x256xbf16>, vector<256x256xf32> -> vector<256x256xf32>
    %63 = arith.addf %56, %62 : vector<256x256xf32>
    %c0_63 = arith.constant 0 : index
    %c0_64 = arith.constant 0 : index
    %64 = vector.load %arg3[%c0_63, %c0_64] : memref<1x256xf32, #tpu.memory_space<vmem>>, vector<1x256xf32>
    %65 = vector.broadcast %64 : vector<1x256xf32> to vector<256x256xf32>
    %66 = arith.addf %63, %65 : vector<256x256xf32>
    %cst_65 = arith.constant 0.000000e+00 : f32
    %67 = vector.broadcast %cst_65 : f32 to vector<256x256xf32>
    %68 = arith.maximumf %66, %67 : vector<256x256xf32>
    %c0_66 = arith.constant 0 : index
    %c0_67 = arith.constant 0 : index
    %c0_68 = arith.constant 0 : index
    %69 = vector.load %arg4[%c0_66, %c0_67, %c0_68] : memref<1x256x256xf32, #tpu.memory_space<vmem>>, vector<1x256x256xf32>
    %70 = vector.shape_cast %69 : vector<1x256x256xf32> to vector<256x256xf32>
    %71 = vector.shape_cast %68 : vector<256x256xf32> to vector<1x256x256xf32>
    tpu.vector_store %arg4[%c0_66, %c0_67, %c0_68], %71 {strides = array<i32>} : memref<1x256x256xf32, #tpu.memory_space<vmem>>, vector<1x256x256xf32>,
    return
  }
  func.func @transform_0(%arg0: i32) -> (i32, i32, i32, i32) {
    %c0_i32 = arith.constant 0 : i32
    %c0_i32_0 = arith.constant 0 : i32
    %c0_i32_1 = arith.constant 0 : i32
    %c0_i32_2 = arith.constant 0 : i32
    return %arg0, %c0_i32, %c0_i32_0, %c0_i32_1 : i32, i32, i32, i32
  }
  func.func @transform_1(%arg0: i32) -> (i32, i32, i32) {
    %c0_i32 = arith.constant 0 : i32
    %c0_i32_0 = arith.constant 0 : i32
    %c0_i32_1 = arith.constant 0 : i32
    %c0_i32_2 = arith.constant 0 : i32
    return %c0_i32, %c0_i32_0, %c0_i32_1 : i32, i32, i32
  }
  func.func @transform_2(%arg0: i32) -> (i32, i32) {
    %c0_i32 = arith.constant 0 : i32
    %c0_i32_0 = arith.constant 0 : i32
    %c0_i32_1 = arith.constant 0 : i32
    return %c0_i32, %c0_i32_0 : i32, i32
  }
  func.func @transform_3(%arg0: i32) -> (i32, i32, i32) {
    %c0_i32 = arith.constant 0 : i32
    %c0_i32_0 = arith.constant 0 : i32
    %c0_i32_1 = arith.constant 0 : i32
    return %arg0, %c0_i32, %c0_i32_0 : i32, i32, i32
  }
}

</mosaic_0001>

<llo_original>
// kernel: tpu_custom_call.1
$region0: #{tpu_custom_call.1}
  #allocation0 [shape = 'u32[]', space=smem, size = 0x4, offset = 0x4, fixed_abs, tag = 'smem constant byte address 0x4 - core index']
  #allocation1 [shape = 'u32[72,128]{1,0:T(1,128)}', space=vmem, size = 0x9000, scoped, tag = 'internal scratch']
  %s0 = inlined_call_operand.vmem [shape: bf16[2,18,18,72], index: 0, kind: input, shape index: {}]
  %s1 = inlined_call_operand.vmem [shape: bf16[9,72,256], index: 1, kind: input, shape index: {}]
  %s2 = inlined_call_operand.vmem [shape: f32[1,256], index: 2, kind: input, shape index: {}]
  %s3 = inlined_call_operand.hbm [shape: f32[2,256,256], index: 3, kind: output, shape index: {}]
  %s4 = sld [smem:[#allocation0]]
  $region45: #{tpu_custom_call.1} parent=0
    _
  %s6 = ssub.s32 1, %s4
  %s7 = scalar_select 0, %s6, %s4
  $region1: #{tpu_custom_call.1} parent=0
    #allocation2 [shape = 'u8[524288]{0}', space=vmem, size = 0x80000, scoped, tag = 'output window, operand 0']
    #allocation3 [shape = 's32[2]{0}', space=sflag, size = 0x8, scoped, tag = 'scoped memory for tpu_custom_call.1']
    %8 = vsyncpa [#allocation3], 0
    %s9 = scalar_lea.sflag [#allocation3], 1
    %10 = vsyncpa %s9, 0
    loop: start=0, step=1, limit=4
    $region2: #{tpu_custom_call.1} parent=1 // loop_pre_header
      _
    $region3: #{tpu_custom_call.1} parent=1 // loop_header
      %s12 = sphi 0, %s16
      %p13 = scmp.ge.s32.totalorder %s12, 4
      %s22 = sphi 0, %s24
      %s25 = sphi 0, %s22
      %s26 = sphi 0, %s25
      %s42 = sphi 0, %s26
      %s46 = sphi 0, %s46
      %s48 = sphi 0, %s46
      %s49 = sphi 0, %s48
      %s63 = sphi 0, %s49
      %s67 = sphi 0, %s67
      %s69 = sphi 0, %s67
      %s70 = sphi 0, %s69
      %s84 = sphi 0, %s70
      %s90 = sphi 0, %s92
      %s93 = sphi 0, %s90
      %s94 = sphi 0, %s93
      %s110 = sphi 0, %s94
    $region4: #{tpu_custom_call.1} parent=1 // loop_header_branch
      %15 = sbr.rel (%p13) target = $region8
    $region5: #{tpu_custom_call.1} parent=1 // loop_body
      %s17 = ssub.s32 %s12, 1
      %s18 = ssub.s32 %s12, 2
      %s19 = sadd.s32 %s12, 1
      %s20 = ssub.s32 %s12, %s19
      %p21 = scmp.eq.s32.totalorder %s20, 0
      %s23 = sadd.s32 %s22, 1
      %s24 = scalar_select %p21, %s22, %s23
      %p27 = pneg %p21
      %p28 = scmp.eq.s32.totalorder %s12, 1
      %p29 = por %p27, %p28
      %p30 = scmp.ne.s32.totalorder %s22, %s25
      %p31 = scmp.eq.s32.totalorder %s12, 0
      %p32 = por %p30, %p31
      %p33 = scmp.ne.s32.totalorder %s22, %s25
      %p34 = scmp.eq.s32.totalorder %s17, 1
      %p35 = por %p33, %p34
      %p36 = scmp.ne.s32.totalorder %s25, %s26
      %p37 = scmp.eq.s32.totalorder %s17, 0
      %p38 = por %p36, %p37
      %p39 = scmp.ne.s32.totalorder %s25, %s26
      %p40 = scmp.eq.s32.totalorder %s18, 1
      %p41 = por %p39, %p40
      %p43 = scmp.ne.s32.totalorder %s26, %s42
      %p44 = scmp.eq.s32.totalorder %s18, 0
      %p45 = por %p43, %p44
      %s47 = sadd.s32 %s46, 1
      %p50 = scmp.eq.s32.totalorder %s12, 1
      %p51 = scmp.ne.s32.totalorder %s46, %s48
      %p52 = scmp.eq.s32.totalorder %s12, 0
      %p53 = por %p51, %p52
      %p54 = scmp.ne.s32.totalorder %s46, %s48
      %p55 = scmp.eq.s32.totalorder %s17, 1
      %p56 = por %p54, %p55
      %p57 = scmp.ne.s32.totalorder %s48, %s49
      %p58 = scmp.eq.s32.totalorder %s17, 0
      %p59 = por %p57, %p58
      %p60 = scmp.ne.s32.totalorder %s48, %s49
      %p61 = scmp.eq.s32.totalorder %s18, 1
      %p62 = por %p60, %p61
      %p64 = scmp.ne.s32.totalorder %s49, %s63
      %p65 = scmp.eq.s32.totalorder %s18, 0
      %p66 = por %p64, %p65
      %s68 = sadd.s32 %s67, 1
      %p71 = scmp.eq.s32.totalorder %s12, 1
      %p72 = scmp.ne.s32.totalorder %s67, %s69
      %p73 = scmp.eq.s32.totalorder %s12, 0
      %p74 = por %p72, %p73
      %p75 = scmp.ne.s32.totalorder %s67, %s69
      %p76 = scmp.eq.s32.totalorder %s17, 1
      %p77 = por %p75, %p76
      %p78 = scmp.ne.s32.totalorder %s69, %s70
      %p79 = scmp.eq.s32.totalorder %s17, 0
      %p80 = por %p78, %p79
      %p81 = scmp.ne.s32.totalorder %s69, %s70
      %p82 = scmp.eq.s32.totalorder %s18, 1
      %p83 = por %p81, %p82
      %p85 = scmp.ne.s32.totalorder %s70, %s84
      %p86 = scmp.eq.s32.totalorder %s18, 0
      %p87 = por %p85, %p86
      %s88 = ssub.s32 %s12, %s19
      %p89 = scmp.eq.s32.totalorder %s88, 0
      %s91 = sadd.s32 %s90, 1
      %s92 = scalar_select %p89, %s90, %s91
      %p95 = pneg %p89
      %p96 = scmp.eq.s32.totalorder %s12, 1
      %p97 = por %p95, %p96
      %p98 = scmp.ne.s32.totalorder %s90, %s93
      %p99 = scmp.eq.s32.totalorder %s12, 0
      %p100 = por %p98, %p99
      %p101 = scmp.ne.s32.totalorder %s90, %s93
      %p102 = scmp.eq.s32.totalorder %s17, 1
      %p103 = por %p101, %p102
      %p104 = scmp.ne.s32.totalorder %s93, %s94
      %p105 = scmp.eq.s32.totalorder %s17, 0
      %p106 = por %p104, %p105
      %p107 = scmp.ne.s32.totalorder %s93, %s94
      %p108 = scmp.eq.s32.totalorder %s18, 1
      %p109 = por %p107, %p108
      %p111 = scmp.ne.s32.totalorder %s94, %s110
      %p112 = scmp.eq.s32.totalorder %s18, 0
      %p113 = por %p111, %p112
      %p114 = scmp.le.s32.totalorder 1, %s12
      %p115 = scmp.lt.s32.totalorder %s12, 3
      %p116 = pnand %p114, %p115
      %p117 = pneg %p116
      // Predicated region
      $region9: #{tpu_custom_call.1} parent=5 // pred_check
        _
      $region10: #{tpu_custom_call.1} parent=5 // pred_check_branch
        %119 = sbr.rel (%p116) target = $region12
      $region11: #{tpu_custom_call.1} parent=5 // pred_region
        %s120 = ssub.s32 %s12, 1
        // Predicated region
        $region13: #{tpu_custom_call.1} parent=11 // pred_check
          %p121 = pneg %p59
        $region14: #{tpu_custom_call.1} parent=11 // pred_check_branch
          %123 = sbr.rel (%p121) target = $region16
        $region15: #{tpu_custom_call.1} parent=11 // pred_region
          _
        $region16: #{tpu_custom_call.1} parent=11 // pred_fallthru
          _
        // Predicated region
        $region17: #{tpu_custom_call.1} parent=11 // pred_check
          %p124 = pneg %p80
        $region18: #{tpu_custom_call.1} parent=11 // pred_check_branch
          %126 = sbr.rel (%p124) target = $region20
        $region19: #{tpu_custom_call.1} parent=11 // pred_region
          _
        $region20: #{tpu_custom_call.1} parent=11 // pred_fallthru
          _
      $region12: #{tpu_custom_call.1} parent=5 // pred_fallthru
        _
      %p127 = scmp.lt.s32.totalorder %s12, 2
      // Predicated region
      $region21: #{tpu_custom_call.1} parent=5 // pred_check
        %p128 = pneg %p127
      $region22: #{tpu_custom_call.1} parent=5 // pred_check_branch
        %130 = sbr.rel (%p128) target = $region24
      $region23: #{tpu_custom_call.1} parent=5 // pred_region
        // Predicated region
        $region25: #{tpu_custom_call.1} parent=23 // pred_check
          %p131 = pneg %p32
        $region26: #{tpu_custom_call.1} parent=23 // pred_check_branch
          %133 = sbr.rel (%p131) target = $region28
        $region27: #{tpu_custom_call.1} parent=23 // pred_region
          %p134 = scmp.lt.s32.totalorder %s12, 1
          %s135 = scalar_select %p134, %s12, 1
          %s136 = smul.addr %s135, 54
          %s137 = smul.addr %s136, 4
          %s138 = scalar_lea.vmem %s0, %s137
        $region28: #{tpu_custom_call.1} parent=23 // pred_fallthru
          _
      $region24: #{tpu_custom_call.1} parent=5 // pred_fallthru
        _
      %p139 = scmp.le.s32.totalorder 1, %s12
      %p140 = scmp.lt.s32.totalorder %s12, 3
      %p141 = pnand %p139, %p140
      %p142 = pneg %p141
      // Predicated region
      $region29: #{tpu_custom_call.1} parent=5 // pred_check
        _
      $region30: #{tpu_custom_call.1} parent=5 // pred_check_branch
        %144 = sbr.rel (%p141) target = $region32
      $region31: #{tpu_custom_call.1} parent=5 // pred_region
        %s145 = ssub.s32 %s12, 1
        %p146 = scmp.lt.s32.totalorder %s17, 1
        %s147 = scalar_select %p146, %s17, 1
        %s148 = smul.addr %s147, 54
        %s149 = smul.addr %s148, 4
        %s150 = scalar_lea.vmem %s0, %s149
        %p151 = pneg %p38
        %p152 = pneg %p35
        %p153 = pneg %p59
        %p154 = pneg %p56
        %p155 = pneg %p80
        %p156 = pneg %p77
        %p157 = pneg %p106
        %p158 = pneg %p103
        %s159 = sand.u32 %s93, 1
        %s160 = scalar_lea.sflag [#allocation3], %s159
        %s161 = sand.u32 %s93, 1
        %s162 = smul.addr %s161, 512
        %s163 = scalar_lea.vmem [#allocation2], %s162
        %p164 = scmp.lt.s32.totalorder %s17, 1
        %s165 = scalar_select %p164, %s17, 1
        %s166 = smul.addr %s165, 54
        %s167 = smul.addr %s166, 4
        %s168 = scalar_lea.vmem %s0, %s167
        %v170 = vld [vmem:[%s168] sm:$0xf]
        %v171 = vld [vmem:[%s168 + $0x4] sm:$0xf]
        %v172 = vld [vmem:[%s168 + $0xc] sm:$0xf]
        %v173 = vld [vmem:[%s168 + $0x10] sm:$0xf]
        %v174 = vld [vmem:[%s168 + $0x18] sm:$0xf]
        %v175 = vld [vmem:[%s168 + $0x1c] sm:$0xf]
        %v176 = vld [vmem:[%s168 + $0x24] sm:$0xf]
        %v177 = vld [vmem:[%s168 + $0x28] sm:$0xf]
        %v178 = vld [vmem:[%s168 + $0x30] sm:$0xf]
        %v179 = vld [vmem:[%s168 + $0x34] sm:$0xf]
        %v180 = vld [vmem:[%s168 + $0x3c] sm:$0xf]
        %v181 = vld [vmem:[%s168 + $0x40] sm:$0xf]
        %v182 = vld [vmem:[%s168 + $0x48] sm:$0xf]
        %v183 = vld [vmem:[%s168 + $0x4c] sm:$0xf]
        %v184 = vld [vmem:[%s168 + $0x54] sm:$0xf]
        %v185 = vld [vmem:[%s168 + $0x58] sm:$0xf]
        %v186 = vld [vmem:[%s168 + $0x60] sm:$0xf]
        %v187 = vld [vmem:[%s168 + $0x64] sm:$0xf]
        %v188 = vld [vmem:[%s168 + $0x6c] sm:$0xf]
        %v189 = vld [vmem:[%s168 + $0x70] sm:$0xf]
        %v190 = vld [vmem:[%s168 + $0x78] sm:$0xf]
        %v191 = vld [vmem:[%s168 + $0x7c] sm:$0xf]
        %v192 = vld [vmem:[%s168 + $0x84] sm:$0xf]
        %v193 = vld [vmem:[%s168 + $0x88] sm:$0xf]
        %v194 = vld [vmem:[%s168 + $0x90] sm:$0xf]
        %v195 = vld [vmem:[%s168 + $0x94] sm:$0xf]
        %v196 = vld [vmem:[%s168 + $0x9c] sm:$0xf]
        %v197 = vld [vmem:[%s168 + $0xa0] sm:$0xf]
        %v198 = vld [vmem:[%s168 + $0xa8] sm:$0xf]
        %v199 = vld [vmem:[%s168 + $0xac] sm:$0xf]
        %v200 = vld [vmem:[%s168 + $0xb4] sm:$0xf]
        %v201 = vld [vmem:[%s168 + $0xb8] sm:$0xf]
        %v202 = vld [vmem:[%s1] sm:$0xff]
        %v203 = vld [vmem:[%s1 + $0x8] sm:$0xff]
        %v204 = vld [vmem:[%s1 + $0x10] sm:$0xff]
        %v205 = vld [vmem:[%s1 + $0x18] sm:$0xff]
        %v206 = vld [vmem:[%s1 + $0x20] sm:$0xff]
        %v207 = vld [vmem:[%s1 + $0x28] sm:$0xff]
        %v208 = vld [vmem:[%s1 + $0x30] sm:$0xff]
        %v209 = vld [vmem:[%s1 + $0x38] sm:$0xff]
        %v210 = vld [vmem:[%s1 + $0x40] sm:$0xff]
        %v211 = vld [vmem:[%s168 + $0x8] sm:$0x1]
        %v212 = vld [vmem:[%s168 + $0x14] sm:$0x1]
        %v213 = vld [vmem:[%s168 + $0x20] sm:$0x1]
        %v214 = vld [vmem:[%s168 + $0x2c] sm:$0x1]
        %v215 = vld [vmem:[%s168 + $0x38] sm:$0x1]
        %v216 = vld [vmem:[%s168 + $0x44] sm:$0x1]
        %v217 = vld [vmem:[%s168 + $0x50] sm:$0x1]
        %v218 = vld [vmem:[%s168 + $0x5c] sm:$0x1]
        %v219 = vld [vmem:[%s168 + $0x68] sm:$0x1]
        %v220 = vld [vmem:[%s168 + $0x74] sm:$0x1]
        %v221 = vld [vmem:[%s168 + $0x80] sm:$0x1]
        %v222 = vld [vmem:[%s168 + $0x8c] sm:$0x1]
        %v223 = vld [vmem:[%s168 + $0x98] sm:$0x1]
        %v224 = vld [vmem:[%s168 + $0xa4] sm:$0x1]
        %v225 = vld [vmem:[%s168 + $0xb0] sm:$0x1]
        %v226 = vld [vmem:[%s168 + $0xbc] sm:$0x1]
        %vm227 = vsmask.f32 3328
        %vm228 = vsmask.f32 7440
        %vm229 = vmor %vm227, %vm228
        %v231 = vshrl.u32 %v170, 16
        %v233 = vrot.slane %v231, 4
        %v234 = vshll.u32 %v170, 16
        %v236 = vrot.slane %v234, 5
        %v237 = vor.u32 %v233, %v236
        %v238 = vrot.slane %v237, 4
        %v240 = vshll.u32 %v171, 16
        %v242 = vrot.slane %v240, 5
        %v243 = vsel %vm229, %v238, %v242
        %v244 = vshrl.u32 %v171, 16
        %v246 = vrot.slane %v244, 4
        %v247 = vor.u32 %v246, %v242
        %v248 = vrot.slane %v247, 4
        %v250 = vshll.u32 %v211, 16
        %v252 = vrot.slane %v250, 5
        %v253 = vsel %vm229, %v248, %v252
        %v255 = vshrl.u32 %v172, 16
        %v257 = vrot.slane %v255, 4
        %v258 = vshll.u32 %v172, 16
        %v260 = vrot.slane %v258, 5
        %v261 = vor.u32 %v257, %v260
        %v262 = vrot.slane %v261, 4
        %v264 = vshll.u32 %v173, 16
        %v266 = vrot.slane %v264, 5
        %v267 = vsel %vm229, %v262, %v266
        %v268 = vshrl.u32 %v173, 16
        %v270 = vrot.slane %v268, 4
        %v271 = vor.u32 %v270, %v266
        %v272 = vrot.slane %v271, 4
        %v274 = vshll.u32 %v212, 16
        %v276 = vrot.slane %v274, 5
        %v277 = vsel %vm229, %v272, %v276
        %v279 = vshrl.u32 %v174, 16
        %v281 = vrot.slane %v279, 4
        %v282 = vshll.u32 %v174, 16
        %v284 = vrot.slane %v282, 5
        %v285 = vor.u32 %v281, %v284
        %v286 = vrot.slane %v285, 4
        %v288 = vshll.u32 %v175, 16
        %v290 = vrot.slane %v288, 5
        %v291 = vsel %vm229, %v286, %v290
        %v292 = vshrl.u32 %v175, 16
        %v294 = vrot.slane %v292, 4
        %v295 = vor.u32 %v294, %v290
        %v296 = vrot.slane %v295, 4
        %v298 = vshll.u32 %v213, 16
        %v300 = vrot.slane %v298, 5
        %v301 = vsel %vm229, %v296, %v300
        %v303 = vshrl.u32 %v176, 16
        %v305 = vrot.slane %v303, 4
        %v306 = vshll.u32 %v176, 16
        %v308 = vrot.slane %v306, 5
        %v309 = vor.u32 %v305, %v308
        %v310 = vrot.slane %v309, 4
        %v312 = vshll.u32 %v177, 16
        %v314 = vrot.slane %v312, 5
        %v315 = vsel %vm229, %v310, %v314
        %v316 = vshrl.u32 %v177, 16
        %v318 = vrot.slane %v316, 4
        %v319 = vor.u32 %v318, %v314
        %v320 = vrot.slane %v319, 4
        %v322 = vshll.u32 %v214, 16
        %v324 = vrot.slane %v322, 5
        %v325 = vsel %vm229, %v320, %v324
        %v327 = vshrl.u32 %v178, 16
        %v329 = vrot.slane %v327, 4
        %v330 = vshll.u32 %v178, 16
        %v332 = vrot.slane %v330, 5
        %v333 = vor.u32 %v329, %v332
        %v334 = vrot.slane %v333, 4
        %v336 = vshll.u32 %v179, 16
        %v338 = vrot.slane %v336, 5
        %v339 = vsel %vm229, %v334, %v338
        %v340 = vshrl.u32 %v179, 16
        %v342 = vrot.slane %v340, 4
        %v343 = vor.u32 %v342, %v338
        %v344 = vrot.slane %v343, 4
        %v346 = vshll.u32 %v215, 16
        %v348 = vrot.slane %v346, 5
        %v349 = vsel %vm229, %v344, %v348
        %v351 = vshrl.u32 %v180, 16
        %v353 = vrot.slane %v351, 4
        %v354 = vshll.u32 %v180, 16
        %v356 = vrot.slane %v354, 5
        %v357 = vor.u32 %v353, %v356
        %v358 = vrot.slane %v357, 4
        %v360 = vshll.u32 %v181, 16
        %v362 = vrot.slane %v360, 5
        %v363 = vsel %vm229, %v358, %v362
        %v364 = vshrl.u32 %v181, 16
        %v366 = vrot.slane %v364, 4
        %v367 = vor.u32 %v366, %v362
        %v368 = vrot.slane %v367, 4
        %v370 = vshll.u32 %v216, 16
        %v372 = vrot.slane %v370, 5
        %v373 = vsel %vm229, %v368, %v372
        %v375 = vshrl.u32 %v182, 16
        %v377 = vrot.slane %v375, 4
        %v378 = vshll.u32 %v182, 16
        %v380 = vrot.slane %v378, 5
        %v381 = vor.u32 %v377, %v380
        %v382 = vrot.slane %v381, 4
        %v384 = vshll.u32 %v183, 16
        %v386 = vrot.slane %v384, 5
        %v387 = vsel %vm229, %v382, %v386
        %v388 = vshrl.u32 %v183, 16
        %v390 = vrot.slane %v388, 4
        %v391 = vor.u32 %v390, %v386
        %v392 = vrot.slane %v391, 4
        %v394 = vshll.u32 %v217, 16
        %v396 = vrot.slane %v394, 5
        %v397 = vsel %vm229, %v392, %v396
        %v399 = vshrl.u32 %v184, 16
        %v401 = vrot.slane %v399, 4
        %v402 = vshll.u32 %v184, 16
        %v404 = vrot.slane %v402, 5
        %v405 = vor.u32 %v401, %v404
        %v406 = vrot.slane %v405, 4
        %v408 = vshll.u32 %v185, 16
        %v410 = vrot.slane %v408, 5
        %v411 = vsel %vm229, %v406, %v410
        %v412 = vshrl.u32 %v185, 16
        %v414 = vrot.slane %v412, 4
        %v415 = vor.u32 %v414, %v410
        %v416 = vrot.slane %v415, 4
        %v418 = vshll.u32 %v218, 16
        %v420 = vrot.slane %v418, 5
        %v421 = vsel %vm229, %v416, %v420
        %v423 = vshrl.u32 %v186, 16
        %v425 = vrot.slane %v423, 4
        %v426 = vshll.u32 %v186, 16
        %v428 = vrot.slane %v426, 5
        %v429 = vor.u32 %v425, %v428
        %v430 = vrot.slane %v429, 4
        %v432 = vshll.u32 %v187, 16
        %v434 = vrot.slane %v432, 5
        %v435 = vsel %vm229, %v430, %v434
        %v436 = vshrl.u32 %v187, 16
        %v438 = vrot.slane %v436, 4
        %v439 = vor.u32 %v438, %v434
        %v440 = vrot.slane %v439, 4
        %v442 = vshll.u32 %v219, 16
        %v444 = vrot.slane %v442, 5
        %v445 = vsel %vm229, %v440, %v444
        %v447 = vshrl.u32 %v188, 16
        %v449 = vrot.slane %v447, 4
        %v450 = vshll.u32 %v188, 16
        %v452 = vrot.slane %v450, 5
        %v453 = vor.u32 %v449, %v452
        %v454 = vrot.slane %v453, 4
        %v456 = vshll.u32 %v189, 16
        %v458 = vrot.slane %v456, 5
        %v459 = vsel %vm229, %v454, %v458
        %v460 = vshrl.u32 %v189, 16
        %v462 = vrot.slane %v460, 4
        %v463 = vor.u32 %v462, %v458
        %v464 = vrot.slane %v463, 4
        %v466 = vshll.u32 %v220, 16
        %v468 = vrot.slane %v466, 5
        %v469 = vsel %vm229, %v464, %v468
        %v471 = vshrl.u32 %v190, 16
        %v473 = vrot.slane %v471, 4
        %v474 = vshll.u32 %v190, 16
        %v476 = vrot.slane %v474, 5
        %v477 = vor.u32 %v473, %v476
        %v478 = vrot.slane %v477, 4
        %v480 = vshll.u32 %v191, 16
        %v482 = vrot.slane %v480, 5
        %v483 = vsel %vm229, %v478, %v482
        %v484 = vshrl.u32 %v191, 16
        %v486 = vrot.slane %v484, 4
        %v487 = vor.u32 %v486, %v482
        %v488 = vrot.slane %v487, 4
        %v490 = vshll.u32 %v221, 16
        %v492 = vrot.slane %v490, 5
        %v493 = vsel %vm229, %v488, %v492
        %v495 = vshrl.u32 %v192, 16
        %v497 = vrot.slane %v495, 4
        %v498 = vshll.u32 %v192, 16
        %v500 = vrot.slane %v498, 5
        %v501 = vor.u32 %v497, %v500
        %v502 = vrot.slane %v501, 4
        %v504 = vshll.u32 %v193, 16
        %v506 = vrot.slane %v504, 5
        %v507 = vsel %vm229, %v502, %v506
        %v508 = vshrl.u32 %v193, 16
        %v510 = vrot.slane %v508, 4
        %v511 = vor.u32 %v510, %v506
        %v512 = vrot.slane %v511, 4
        %v514 = vshll.u32 %v222, 16
        %v516 = vrot.slane %v514, 5
        %v517 = vsel %vm229, %v512, %v516
        %v519 = vshrl.u32 %v194, 16
        %v521 = vrot.slane %v519, 4
        %v522 = vshll.u32 %v194, 16
        %v524 = vrot.slane %v522, 5
        %v525 = vor.u32 %v521, %v524
        %v526 = vrot.slane %v525, 4
        %v528 = vshll.u32 %v195, 16
        %v530 = vrot.slane %v528, 5
        %v531 = vsel %vm229, %v526, %v530
        %v532 = vshrl.u32 %v195, 16
        %v534 = vrot.slane %v532, 4
        %v535 = vor.u32 %v534, %v530
        %v536 = vrot.slane %v535, 4
        %v538 = vshll.u32 %v223, 16
        %v540 = vrot.slane %v538, 5
        %v541 = vsel %vm229, %v536, %v540
        %v543 = vshrl.u32 %v196, 16
        %v545 = vrot.slane %v543, 4
        %v546 = vshll.u32 %v196, 16
        %v548 = vrot.slane %v546, 5
        %v549 = vor.u32 %v545, %v548
        %v550 = vrot.slane %v549, 4
        %v552 = vshll.u32 %v197, 16
        %v554 = vrot.slane %v552, 5
        %v555 = vsel %vm229, %v550, %v554
        %v556 = vshrl.u32 %v197, 16
        %v558 = vrot.slane %v556, 4
        %v559 = vor.u32 %v558, %v554
        %v560 = vrot.slane %v559, 4
        %v562 = vshll.u32 %v224, 16
        %v564 = vrot.slane %v562, 5
        %v565 = vsel %vm229, %v560, %v564
        %v567 = vshrl.u32 %v198, 16
        %v569 = vrot.slane %v567, 4
        %v570 = vshll.u32 %v198, 16
        %v572 = vrot.slane %v570, 5
        %v573 = vor.u32 %v569, %v572
        %v574 = vrot.slane %v573, 4
        %v576 = vshll.u32 %v199, 16
        %v578 = vrot.slane %v576, 5
        %v579 = vsel %vm229, %v574, %v578
        %v580 = vshrl.u32 %v199, 16
        %v582 = vrot.slane %v580, 4
        %v583 = vor.u32 %v582, %v578
        %v584 = vrot.slane %v583, 4
        %v586 = vshll.u32 %v225, 16
        %v588 = vrot.slane %v586, 5
        %v589 = vsel %vm229, %v584, %v588
        %v591 = vshrl.u32 %v200, 16
        %v593 = vrot.slane %v591, 4
        %v594 = vshll.u32 %v200, 16
        %v596 = vrot.slane %v594, 5
        %v597 = vor.u32 %v593, %v596
        %v598 = vrot.slane %v597, 4
        %v600 = vshll.u32 %v201, 16
        %v602 = vrot.slane %v600, 5
        %v603 = vsel %vm229, %v598, %v602
        %v604 = vshrl.u32 %v201, 16
        %v606 = vrot.slane %v604, 4
        %v607 = vor.u32 %v606, %v602
        %v608 = vrot.slane %v607, 4
        %v610 = vshll.u32 %v226, 16
        %v612 = vrot.slane %v610, 5
        %v613 = vsel %vm229, %v608, %v612
        %s614 = scalar_lea.vmem %s1, 72
        %v615 = vld [vmem:[%s614] sm:$0xff]
        %v616 = vld [vmem:[%s614 + $0x8] sm:$0xff]
        %v617 = vld [vmem:[%s614 + $0x10] sm:$0xff]
        %v618 = vld [vmem:[%s614 + $0x18] sm:$0xff]
        %v619 = vld [vmem:[%s614 + $0x20] sm:$0xff]
        %v620 = vld [vmem:[%s614 + $0x28] sm:$0xff]
        %v621 = vld [vmem:[%s614 + $0x30] sm:$0xff]
        %v622 = vld [vmem:[%s614 + $0x38] sm:$0xff]
        %v623 = vld [vmem:[%s614 + $0x40] sm:$0xff]
        %v624 = vunpack.c.l.b16 %v243
        %v625 = vunpack.c.l.b16 %v253
        %v626 = vunpack.c.l.b16 %v267
        %v627 = vunpack.c.l.b16 %v277
        %v628 = vunpack.c.l.b16 %v291
        %v629 = vunpack.c.l.b16 %v301
        %v630 = vunpack.c.l.b16 %v315
        %v631 = vunpack.c.l.b16 %v325
        %v632 = vunpack.c.l.b16 %v339
        %v633 = vunpack.c.l.b16 %v349
        %v634 = vunpack.c.l.b16 %v363
        %v635 = vunpack.c.l.b16 %v373
        %v636 = vunpack.c.l.b16 %v387
        %v637 = vunpack.c.l.b16 %v397
        %v638 = vunpack.c.l.b16 %v411
        %v639 = vunpack.c.l.b16 %v421
        %v640 = vunpack.c.l.b16 %v435
        %v641 = vunpack.c.l.b16 %v445
        %v642 = vunpack.c.l.b16 %v459
        %v643 = vunpack.c.l.b16 %v469
        %v644 = vunpack.c.l.b16 %v483
        %v645 = vunpack.c.l.b16 %v493
        %v646 = vunpack.c.l.b16 %v507
        %v647 = vunpack.c.l.b16 %v517
        %v648 = vunpack.c.l.b16 %v531
        %v649 = vunpack.c.l.b16 %v541
        %v650 = vunpack.c.l.b16 %v555
        %v651 = vunpack.c.l.b16 %v565
        %v652 = vunpack.c.l.b16 %v579
        %v653 = vunpack.c.l.b16 %v589
        %v654 = vunpack.c.l.b16 %v603
        %v655 = vunpack.c.l.b16 %v613
        %v656 = vpack.c.b16 %v625, %v624
        %v657 = vpack.c.b16 %v627, %v626
        %v658 = vpack.c.b16 %v629, %v628
        %v659 = vpack.c.b16 %v631, %v630
        %v660 = vpack.c.b16 %v633, %v632
        %v661 = vpack.c.b16 %v635, %v634
        %v662 = vpack.c.b16 %v637, %v636
        %v663 = vpack.c.b16 %v639, %v638
        %v664 = vpack.c.b16 %v641, %v640
        %v665 = vpack.c.b16 %v643, %v642
        %v666 = vpack.c.b16 %v645, %v644
        %v667 = vpack.c.b16 %v647, %v646
        %v668 = vpack.c.b16 %v649, %v648
        %v669 = vpack.c.b16 %v651, %v650
        %v670 = vpack.c.b16 %v653, %v652
        %v671 = vpack.c.b16 %v655, %v654
        %v681 = vunpack.c.l.b16 %v615
        %v682 = vunpack.c.h.b16 %v615
        %v683 = vunpack.c.l.b16 %v616
        %v684 = vunpack.c.h.b16 %v616
        %v685 = vunpack.c.l.b16 %v617
        %v686 = vunpack.c.h.b16 %v617
        %v687 = vunpack.c.l.b16 %v618
        %v688 = vunpack.c.h.b16 %v618
        %v689 = vunpack.c.l.b16 %v619
        %v690 = vunpack.c.h.b16 %v619
        %v691 = vunpack.c.l.b16 %v620
        %v692 = vunpack.c.h.b16 %v620
        %v693 = vunpack.c.l.b16 %v621
        %v694 = vunpack.c.h.b16 %v621
        %v695 = vunpack.c.l.b16 %v622
        %v696 = vunpack.c.h.b16 %v622
        %v697 = vunpack.c.l.b16 %v623
        %v698 = vunpack.c.h.b16 %v623
        %v699 = vpack.c.b16 %v683, %v681
        %v700 = vpack.c.b16 %v684, %v682
        %v701 = vpack.c.b16 %v687, %v685
        %v702 = vpack.c.b16 %v688, %v686
        %v703 = vpack.c.b16 %v691, %v689
        %v704 = vpack.c.b16 %v692, %v690
        %v705 = vpack.c.b16 %v695, %v693
        %v706 = vpack.c.b16 %v696, %v694
        %v707 = vpack.c.b16 %v697, %v697
        %v708 = vpack.c.b16 %v698, %v698
        %vm717 = vcmask 588800
        %v719 = vsel %vm717, %v656, 0
        %v722 = vsel %vm717, %v657, 0
        %v725 = vsel %vm717, %v658, 0
        %v728 = vsel %vm717, %v659, 0
        %v731 = vsel %vm717, %v660, 0
        %v734 = vsel %vm717, %v661, 0
        %v737 = vsel %vm717, %v662, 0
        %v740 = vsel %vm717, %v663, 0
        %v743 = vsel %vm717, %v664, 0
        %v746 = vsel %vm717, %v665, 0
        %v749 = vsel %vm717, %v666, 0
        %v752 = vsel %vm717, %v667, 0
        %v755 = vsel %vm717, %v668, 0
        %v758 = vsel %vm717, %v669, 0
        %v761 = vsel %vm717, %v670, 0
        %v764 = vsel %vm717, %v671, 0
        %vm766 = vcmask 1043456
        %v768 = vsel %vm766, %v707, 0
        %v771 = vsel %vm766, %v708, 0
        %773 = vmatpush.bf16.msra.mxu0 0
        %774 = vmatpush.bf16.msra.mxu0 0
        %775 = vmatpush.bf16.msra.mxu0 0
        %776 = vmatpush.bf16.msra.mxu0 %v768
        %777 = vmatpush.bf16.msra.mxu0 %v705
        %778 = vmatpush.bf16.msra.mxu0 %v703
        %779 = vmatpush.bf16.msra.mxu0 %v701
        %780 = vmatpush.bf16.msra.mxu0 %v699
        %781 = vmatmul.bf16.gmra.mxu0 %v719
        %v782 = vpop.f32.mrf.mxu0
        %v783 = vadd.f32 0.0, %v782
        %v784 = vpop.f32.mrf.mxu0
        %v785 = vadd.f32 0.0, %v784
        %786 = vmatmul.bf16.gmra.mxu0 %v722
        %v787 = vpop.f32.mrf.mxu0
        %v788 = vadd.f32 0.0, %v787
        %v789 = vpop.f32.mrf.mxu0
        %v790 = vadd.f32 0.0, %v789
        %791 = vmatmul.bf16.gmra.mxu0 %v725
        %v792 = vpop.f32.mrf.mxu0
        %v793 = vadd.f32 0.0, %v792
        %v794 = vpop.f32.mrf.mxu0
        %v795 = vadd.f32 0.0, %v794
        %796 = vmatmul.bf16.gmra.mxu0 %v728
        %v797 = vpop.f32.mrf.mxu0
        %v798 = vadd.f32 0.0, %v797
        %v799 = vpop.f32.mrf.mxu0
        %v800 = vadd.f32 0.0, %v799
        %801 = vmatmul.bf16.gmra.mxu0 %v731
        %v802 = vpop.f32.mrf.mxu0
        %v803 = vadd.f32 0.0, %v802
        %v804 = vpop.f32.mrf.mxu0
        %v805 = vadd.f32 0.0, %v804
        %806 = vmatmul.bf16.gmra.mxu0 %v734
        %v807 = vpop.f32.mrf.mxu0
        %v808 = vadd.f32 0.0, %v807
        %v809 = vpop.f32.mrf.mxu0
        %v810 = vadd.f32 0.0, %v809
        %811 = vmatmul.bf16.gmra.mxu0 %v737
        %v812 = vpop.f32.mrf.mxu0
        %v813 = vadd.f32 0.0, %v812
        %v814 = vpop.f32.mrf.mxu0
        %v815 = vadd.f32 0.0, %v814
        %816 = vmatmul.bf16.gmra.mxu0 %v740
        %v817 = vpop.f32.mrf.mxu0
        %v818 = vadd.f32 0.0, %v817
        %v819 = vpop.f32.mrf.mxu0
        %v820 = vadd.f32 0.0, %v819
        %821 = vmatmul.bf16.gmra.mxu0 %v743
        %v822 = vpop.f32.mrf.mxu0
        %v823 = vadd.f32 0.0, %v822
        %v824 = vpop.f32.mrf.mxu0
        %v825 = vadd.f32 0.0, %v824
        %826 = vmatmul.bf16.gmra.mxu0 %v746
        %v827 = vpop.f32.mrf.mxu0
        %v828 = vadd.f32 0.0, %v827
        %v829 = vpop.f32.mrf.mxu0
        %v830 = vadd.f32 0.0, %v829
        %831 = vmatmul.bf16.gmra.mxu0 %v749
        %v832 = vpop.f32.mrf.mxu0
        %v833 = vadd.f32 0.0, %v832
        %v834 = vpop.f32.mrf.mxu0
        %v835 = vadd.f32 0.0, %v834
        %836 = vmatmul.bf16.gmra.mxu0 %v752
        %v837 = vpop.f32.mrf.mxu0
        %v838 = vadd.f32 0.0, %v837
        %v839 = vpop.f32.mrf.mxu0
        %v840 = vadd.f32 0.0, %v839
        %841 = vmatmul.bf16.gmra.mxu0 %v755
        %v842 = vpop.f32.mrf.mxu0
        %v843 = vadd.f32 0.0, %v842
        %v844 = vpop.f32.mrf.mxu0
        %v845 = vadd.f32 0.0, %v844
        %846 = vmatmul.bf16.gmra.mxu0 %v758
        %v847 = vpop.f32.mrf.mxu0
        %v848 = vadd.f32 0.0, %v847
        %v849 = vpop.f32.mrf.mxu0
        %v850 = vadd.f32 0.0, %v849
        %851 = vmatmul.bf16.gmra.mxu0 %v761
        %v852 = vpop.f32.mrf.mxu0
        %v853 = vadd.f32 0.0, %v852
        %v854 = vpop.f32.mrf.mxu0
        %v855 = vadd.f32 0.0, %v854
        %856 = vmatmul.bf16.gmra.mxu0 %v764
        %v857 = vpop.f32.mrf.mxu0
        %v858 = vadd.f32 0.0, %v857
        %v859 = vpop.f32.mrf.mxu0
        %v860 = vadd.f32 0.0, %v859
        %861 = vdwg.mxu0
        %862 = vmatpush.bf16.msra.mxu0 0
        %863 = vmatpush.bf16.msra.mxu0 0
        %864 = vmatpush.bf16.msra.mxu0 0
        %865 = vmatpush.bf16.msra.mxu0 %v771
        %866 = vmatpush.bf16.msra.mxu0 %v706
        %867 = vmatpush.bf16.msra.mxu0 %v704
        %868 = vmatpush.bf16.msra.mxu0 %v702
        %869 = vmatpush.bf16.msra.mxu0 %v700
        %870 = vmatmul.bf16.gmra.mxu0 %v719
        %v871 = vpop.f32.mrf.mxu0
        %v872 = vadd.f32 0.0, %v871
        %v873 = vpop.f32.mrf.mxu0
        %v874 = vadd.f32 0.0, %v873
        %875 = vmatmul.bf16.gmra.mxu0 %v722
        %v876 = vpop.f32.mrf.mxu0
        %v877 = vadd.f32 0.0, %v876
        %v878 = vpop.f32.mrf.mxu0
        %v879 = vadd.f32 0.0, %v878
        %880 = vmatmul.bf16.gmra.mxu0 %v725
        %v881 = vpop.f32.mrf.mxu0
        %v882 = vadd.f32 0.0, %v881
        %v883 = vpop.f32.mrf.mxu0
        %v884 = vadd.f32 0.0, %v883
        %885 = vmatmul.bf16.gmra.mxu0 %v728
        %v886 = vpop.f32.mrf.mxu0
        %v887 = vadd.f32 0.0, %v886
        %v888 = vpop.f32.mrf.mxu0
        %v889 = vadd.f32 0.0, %v888
        %890 = vmatmul.bf16.gmra.mxu0 %v731
        %v891 = vpop.f32.mrf.mxu0
        %v892 = vadd.f32 0.0, %v891
        %v893 = vpop.f32.mrf.mxu0
        %v894 = vadd.f32 0.0, %v893
        %895 = vmatmul.bf16.gmra.mxu0 %v734
        %v896 = vpop.f32.mrf.mxu0
        %v897 = vadd.f32 0.0, %v896
        %v898 = vpop.f32.mrf.mxu0
        %v899 = vadd.f32 0.0, %v898
        %900 = vmatmul.bf16.gmra.mxu0 %v737
        %v901 = vpop.f32.mrf.mxu0
        %v902 = vadd.f32 0.0, %v901
        %v903 = vpop.f32.mrf.mxu0
        %v904 = vadd.f32 0.0, %v903
        %905 = vmatmul.bf16.gmra.mxu0 %v740
        %v906 = vpop.f32.mrf.mxu0
        %v907 = vadd.f32 0.0, %v906
        %v908 = vpop.f32.mrf.mxu0
        %v909 = vadd.f32 0.0, %v908
        %910 = vmatmul.bf16.gmra.mxu0 %v743
        %v911 = vpop.f32.mrf.mxu0
        %v912 = vadd.f32 0.0, %v911
        %v913 = vpop.f32.mrf.mxu0
        %v914 = vadd.f32 0.0, %v913
        %915 = vmatmul.bf16.gmra.mxu0 %v746
        %v916 = vpop.f32.mrf.mxu0
        %v917 = vadd.f32 0.0, %v916
        %v918 = vpop.f32.mrf.mxu0
        %v919 = vadd.f32 0.0, %v918
        %920 = vmatmul.bf16.gmra.mxu0 %v749
        %v921 = vpop.f32.mrf.mxu0
        %v922 = vadd.f32 0.0, %v921
        %v923 = vpop.f32.mrf.mxu0
        %v924 = vadd.f32 0.0, %v923
        %925 = vmatmul.bf16.gmra.mxu0 %v752
        %v926 = vpop.f32.mrf.mxu0
        %v927 = vadd.f32 0.0, %v926
        %v928 = vpop.f32.mrf.mxu0
        %v929 = vadd.f32 0.0, %v928
        %930 = vmatmul.bf16.gmra.mxu0 %v755
        %v931 = vpop.f32.mrf.mxu0
        %v932 = vadd.f32 0.0, %v931
        %v933 = vpop.f32.mrf.mxu0
        %v934 = vadd.f32 0.0, %v933
        %935 = vmatmul.bf16.gmra.mxu0 %v758
        %v936 = vpop.f32.mrf.mxu0
        %v937 = vadd.f32 0.0, %v936
        %v938 = vpop.f32.mrf.mxu0
        %v939 = vadd.f32 0.0, %v938
        %940 = vmatmul.bf16.gmra.mxu0 %v761
        %v941 = vpop.f32.mrf.mxu0
        %v942 = vadd.f32 0.0, %v941
        %v943 = vpop.f32.mrf.mxu0
        %v944 = vadd.f32 0.0, %v943
        %945 = vmatmul.bf16.gmra.mxu0 %v764
        %v946 = vpop.f32.mrf.mxu0
        %v947 = vadd.f32 0.0, %v946
        %v948 = vpop.f32.mrf.mxu0
        %v949 = vadd.f32 0.0, %v948
        %950 = vdwg.mxu0
        %v983 = vunpack.c.l.b16 %v170
        %v984 = vunpack.c.l.b16 %v171
        %v985 = vunpack.c.l.b16 %v172
        %v986 = vunpack.c.l.b16 %v173
        %v987 = vunpack.c.l.b16 %v174
        %v988 = vunpack.c.l.b16 %v175
        %v989 = vunpack.c.l.b16 %v176
        %v990 = vunpack.c.l.b16 %v177
        %v991 = vunpack.c.l.b16 %v178
        %v992 = vunpack.c.l.b16 %v179
        %v993 = vunpack.c.l.b16 %v180
        %v994 = vunpack.c.l.b16 %v181
        %v995 = vunpack.c.l.b16 %v182
        %v996 = vunpack.c.l.b16 %v183
        %v997 = vunpack.c.l.b16 %v184
        %v998 = vunpack.c.l.b16 %v185
        %v999 = vunpack.c.l.b16 %v186
        %v1000 = vunpack.c.l.b16 %v187
        %v1001 = vunpack.c.l.b16 %v188
        %v1002 = vunpack.c.l.b16 %v189
        %v1003 = vunpack.c.l.b16 %v190
        %v1004 = vunpack.c.l.b16 %v191
        %v1005 = vunpack.c.l.b16 %v192
        %v1006 = vunpack.c.l.b16 %v193
        %v1007 = vunpack.c.l.b16 %v194
        %v1008 = vunpack.c.l.b16 %v195
        %v1009 = vunpack.c.l.b16 %v196
        %v1010 = vunpack.c.l.b16 %v197
        %v1011 = vunpack.c.l.b16 %v198
        %v1012 = vunpack.c.l.b16 %v199
        %v1013 = vunpack.c.l.b16 %v200
        %v1014 = vunpack.c.l.b16 %v201
        %v1015 = vpack.c.b16 %v984, %v983
        %v1016 = vpack.c.b16 %v986, %v985
        %v1017 = vpack.c.b16 %v988, %v987
        %v1018 = vpack.c.b16 %v990, %v989
        %v1019 = vpack.c.b16 %v992, %v991
        %v1020 = vpack.c.b16 %v994, %v993
        %v1021 = vpack.c.b16 %v996, %v995
        %v1022 = vpack.c.b16 %v998, %v997
        %v1023 = vpack.c.b16 %v1000, %v999
        %v1024 = vpack.c.b16 %v1002, %v1001
        %v1025 = vpack.c.b16 %v1004, %v1003
        %v1026 = vpack.c.b16 %v1006, %v1005
        %v1027 = vpack.c.b16 %v1008, %v1007
        %v1028 = vpack.c.b16 %v1010, %v1009
        %v1029 = vpack.c.b16 %v1012, %v1011
        %v1030 = vpack.c.b16 %v1014, %v1013
        %v1040 = vunpack.c.l.b16 %v202
        %v1041 = vunpack.c.h.b16 %v202
        %v1042 = vunpack.c.l.b16 %v203
        %v1043 = vunpack.c.h.b16 %v203
        %v1044 = vunpack.c.l.b16 %v204
        %v1045 = vunpack.c.h.b16 %v204
        %v1046 = vunpack.c.l.b16 %v205
        %v1047 = vunpack.c.h.b16 %v205
        %v1048 = vunpack.c.l.b16 %v206
        %v1049 = vunpack.c.h.b16 %v206
        %v1050 = vunpack.c.l.b16 %v207
        %v1051 = vunpack.c.h.b16 %v207
        %v1052 = vunpack.c.l.b16 %v208
        %v1053 = vunpack.c.h.b16 %v208
        %v1054 = vunpack.c.l.b16 %v209
        %v1055 = vunpack.c.h.b16 %v209
        %v1056 = vunpack.c.l.b16 %v210
        %v1057 = vunpack.c.h.b16 %v210
        %v1058 = vpack.c.b16 %v1042, %v1040
        %v1059 = vpack.c.b16 %v1043, %v1041
        %v1060 = vpack.c.b16 %v1046, %v1044
        %v1061 = vpack.c.b16 %v1047, %v1045
        %v1062 = vpack.c.b16 %v1050, %v1048
        %v1063 = vpack.c.b16 %v1051, %v1049
        %v1064 = vpack.c.b16 %v1054, %v1052
        %v1065 = vpack.c.b16 %v1055, %v1053
        %v1066 = vpack.c.b16 %v1056, %v1056
        %v1067 = vpack.c.b16 %v1057, %v1057
        %v1077 = vsel %vm717, %v1015, 0
        %v1080 = vsel %vm717, %v1016, 0
        %v1083 = vsel %vm717, %v1017, 0
        %v1086 = vsel %vm717, %v1018, 0
        %v1089 = vsel %vm717, %v1019, 0
        %v1092 = vsel %vm717, %v1020, 0
        %v1095 = vsel %vm717, %v1021, 0
        %v1098 = vsel %vm717, %v1022, 0
        %v1101 = vsel %vm717, %v1023, 0
        %v1104 = vsel %vm717, %v1024, 0
        %v1107 = vsel %vm717, %v1025, 0
        %v1110 = vsel %vm717, %v1026, 0
        %v1113 = vsel %vm717, %v1027, 0
        %v1116 = vsel %vm717, %v1028, 0
        %v1119 = vsel %vm717, %v1029, 0
        %v1122 = vsel %vm717, %v1030, 0
        %v1125 = vsel %vm766, %v1066, 0
        %v1128 = vsel %vm766, %v1067, 0
        %1130 = vmatpush.bf16.msra.mxu0 0
        %1131 = vmatpush.bf16.msra.mxu0 0
        %1132 = vmatpush.bf16.msra.mxu0 0
        %1133 = vmatpush.bf16.msra.mxu0 %v1125
        %1134 = vmatpush.bf16.msra.mxu0 %v1064
        %1135 = vmatpush.bf16.msra.mxu0 %v1062
        %1136 = vmatpush.bf16.msra.mxu0 %v1060
        %1137 = vmatpush.bf16.msra.mxu0 %v1058
        %1138 = vmatmul.bf16.gmra.mxu0 %v1077
        %v1139 = vpop.f32.mrf.mxu0
        %v1140 = vadd.f32 %v783, %v1139
        %v1141 = vpop.f32.mrf.mxu0
        %v1142 = vadd.f32 %v785, %v1141
        %1143 = vmatmul.bf16.gmra.mxu0 %v1080
        %v1144 = vpop.f32.mrf.mxu0
        %v1145 = vadd.f32 %v788, %v1144
        %v1146 = vpop.f32.mrf.mxu0
        %v1147 = vadd.f32 %v790, %v1146
        %1148 = vmatmul.bf16.gmra.mxu0 %v1083
        %v1149 = vpop.f32.mrf.mxu0
        %v1150 = vadd.f32 %v793, %v1149
        %v1151 = vpop.f32.mrf.mxu0
        %v1152 = vadd.f32 %v795, %v1151
        %1153 = vmatmul.bf16.gmra.mxu0 %v1086
        %v1154 = vpop.f32.mrf.mxu0
        %v1155 = vadd.f32 %v798, %v1154
        %v1156 = vpop.f32.mrf.mxu0
        %v1157 = vadd.f32 %v800, %v1156
        %1158 = vmatmul.bf16.gmra.mxu0 %v1089
        %v1159 = vpop.f32.mrf.mxu0
        %v1160 = vadd.f32 %v803, %v1159
        %v1161 = vpop.f32.mrf.mxu0
        %v1162 = vadd.f32 %v805, %v1161
        %1163 = vmatmul.bf16.gmra.mxu0 %v1092
        %v1164 = vpop.f32.mrf.mxu0
        %v1165 = vadd.f32 %v808, %v1164
        %v1166 = vpop.f32.mrf.mxu0
        %v1167 = vadd.f32 %v810, %v1166
        %1168 = vmatmul.bf16.gmra.mxu0 %v1095
        %v1169 = vpop.f32.mrf.mxu0
        %v1170 = vadd.f32 %v813, %v1169
        %v1171 = vpop.f32.mrf.mxu0
        %v1172 = vadd.f32 %v815, %v1171
        %1173 = vmatmul.bf16.gmra.mxu0 %v1098
        %v1174 = vpop.f32.mrf.mxu0
        %v1175 = vadd.f32 %v818, %v1174
        %v1176 = vpop.f32.mrf.mxu0
        %v1177 = vadd.f32 %v820, %v1176
        %1178 = vmatmul.bf16.gmra.mxu0 %v1101
        %v1179 = vpop.f32.mrf.mxu0
        %v1180 = vadd.f32 %v823, %v1179
        %v1181 = vpop.f32.mrf.mxu0
        %v1182 = vadd.f32 %v825, %v1181
        %1183 = vmatmul.bf16.gmra.mxu0 %v1104
        %v1184 = vpop.f32.mrf.mxu0
        %v1185 = vadd.f32 %v828, %v1184
        %v1186 = vpop.f32.mrf.mxu0
        %v1187 = vadd.f32 %v830, %v1186
        %1188 = vmatmul.bf16.gmra.mxu0 %v1107
        %v1189 = vpop.f32.mrf.mxu0
        %v1190 = vadd.f32 %v833, %v1189
        %v1191 = vpop.f32.mrf.mxu0
        %v1192 = vadd.f32 %v835, %v1191
        %1193 = vmatmul.bf16.gmra.mxu0 %v1110
        %v1194 = vpop.f32.mrf.mxu0
        %v1195 = vadd.f32 %v838, %v1194
        %v1196 = vpop.f32.mrf.mxu0
        %v1197 = vadd.f32 %v840, %v1196
        %1198 = vmatmul.bf16.gmra.mxu0 %v1113
        %v1199 = vpop.f32.mrf.mxu0
        %v1200 = vadd.f32 %v843, %v1199
        %v1201 = vpop.f32.mrf.mxu0
        %v1202 = vadd.f32 %v845, %v1201
        %1203 = vmatmul.bf16.gmra.mxu0 %v1116
        %v1204 = vpop.f32.mrf.mxu0
        %v1205 = vadd.f32 %v848, %v1204
        %v1206 = vpop.f32.mrf.mxu0
        %v1207 = vadd.f32 %v850, %v1206
        %1208 = vmatmul.bf16.gmra.mxu0 %v1119
        %v1209 = vpop.f32.mrf.mxu0
        %v1210 = vadd.f32 %v853, %v1209
        %v1211 = vpop.f32.mrf.mxu0
        %v1212 = vadd.f32 %v855, %v1211
        %1213 = vmatmul.bf16.gmra.mxu0 %v1122
        %v1214 = vpop.f32.mrf.mxu0
        %v1215 = vadd.f32 %v858, %v1214
        %v1216 = vpop.f32.mrf.mxu0
        %v1217 = vadd.f32 %v860, %v1216
        %1218 = vdwg.mxu0
        %1219 = vmatpush.bf16.msra.mxu0 0
        %1220 = vmatpush.bf16.msra.mxu0 0
        %1221 = vmatpush.bf16.msra.mxu0 0
        %1222 = vmatpush.bf16.msra.mxu0 %v1128
        %1223 = vmatpush.bf16.msra.mxu0 %v1065
        %1224 = vmatpush.bf16.msra.mxu0 %v1063
        %1225 = vmatpush.bf16.msra.mxu0 %v1061
        %1226 = vmatpush.bf16.msra.mxu0 %v1059
        %1227 = vmatmul.bf16.gmra.mxu0 %v1077
        %v1228 = vpop.f32.mrf.mxu0
        %v1229 = vadd.f32 %v872, %v1228
        %v1230 = vpop.f32.mrf.mxu0
        %v1231 = vadd.f32 %v874, %v1230
        %1232 = vmatmul.bf16.gmra.mxu0 %v1080
        %v1233 = vpop.f32.mrf.mxu0
        %v1234 = vadd.f32 %v877, %v1233
        %v1235 = vpop.f32.mrf.mxu0
        %v1236 = vadd.f32 %v879, %v1235
        %1237 = vmatmul.bf16.gmra.mxu0 %v1083
        %v1238 = vpop.f32.mrf.mxu0
        %v1239 = vadd.f32 %v882, %v1238
        %v1240 = vpop.f32.mrf.mxu0
        %v1241 = vadd.f32 %v884, %v1240
        %1242 = vmatmul.bf16.gmra.mxu0 %v1086
        %v1243 = vpop.f32.mrf.mxu0
        %v1244 = vadd.f32 %v887, %v1243
        %v1245 = vpop.f32.mrf.mxu0
        %v1246 = vadd.f32 %v889, %v1245
        %1247 = vmatmul.bf16.gmra.mxu0 %v1089
        %v1248 = vpop.f32.mrf.mxu0
        %v1249 = vadd.f32 %v892, %v1248
        %v1250 = vpop.f32.mrf.mxu0
        %v1251 = vadd.f32 %v894, %v1250
        %1252 = vmatmul.bf16.gmra.mxu0 %v1092
        %v1253 = vpop.f32.mrf.mxu0
        %v1254 = vadd.f32 %v897, %v1253
        %v1255 = vpop.f32.mrf.mxu0
        %v1256 = vadd.f32 %v899, %v1255
        %1257 = vmatmul.bf16.gmra.mxu0 %v1095
        %v1258 = vpop.f32.mrf.mxu0
        %v1259 = vadd.f32 %v902, %v1258
        %v1260 = vpop.f32.mrf.mxu0
        %v1261 = vadd.f32 %v904, %v1260
        %1262 = vmatmul.bf16.gmra.mxu0 %v1098
        %v1263 = vpop.f32.mrf.mxu0
        %v1264 = vadd.f32 %v907, %v1263
        %v1265 = vpop.f32.mrf.mxu0
        %v1266 = vadd.f32 %v909, %v1265
        %1267 = vmatmul.bf16.gmra.mxu0 %v1101
        %v1268 = vpop.f32.mrf.mxu0
        %v1269 = vadd.f32 %v912, %v1268
        %v1270 = vpop.f32.mrf.mxu0
        %v1271 = vadd.f32 %v914, %v1270
        %1272 = vmatmul.bf16.gmra.mxu0 %v1104
        %v1273 = vpop.f32.mrf.mxu0
        %v1274 = vadd.f32 %v917, %v1273
        %v1275 = vpop.f32.mrf.mxu0
        %v1276 = vadd.f32 %v919, %v1275
        %1277 = vmatmul.bf16.gmra.mxu0 %v1107
        %v1278 = vpop.f32.mrf.mxu0
        %v1279 = vadd.f32 %v922, %v1278
        %v1280 = vpop.f32.mrf.mxu0
        %v1281 = vadd.f32 %v924, %v1280
        %1282 = vmatmul.bf16.gmra.mxu0 %v1110
        %v1283 = vpop.f32.mrf.mxu0
        %v1284 = vadd.f32 %v927, %v1283
        %v1285 = vpop.f32.mrf.mxu0
        %v1286 = vadd.f32 %v929, %v1285
        %1287 = vmatmul.bf16.gmra.mxu0 %v1113
        %v1288 = vpop.f32.mrf.mxu0
        %v1289 = vadd.f32 %v932, %v1288
        %v1290 = vpop.f32.mrf.mxu0
        %v1291 = vadd.f32 %v934, %v1290
        %1292 = vmatmul.bf16.gmra.mxu0 %v1116
        %v1293 = vpop.f32.mrf.mxu0
        %v1294 = vadd.f32 %v937, %v1293
        %v1295 = vpop.f32.mrf.mxu0
        %v1296 = vadd.f32 %v939, %v1295
        %1297 = vmatmul.bf16.gmra.mxu0 %v1119
        %v1298 = vpop.f32.mrf.mxu0
        %v1299 = vadd.f32 %v942, %v1298
        %v1300 = vpop.f32.mrf.mxu0
        %v1301 = vadd.f32 %v944, %v1300
        %1302 = vmatmul.bf16.gmra.mxu0 %v1122
        %v1303 = vpop.f32.mrf.mxu0
        %v1304 = vadd.f32 %v947, %v1303
        %v1305 = vpop.f32.mrf.mxu0
        %v1306 = vadd.f32 %v949, %v1305
        %1307 = vdwg.mxu0
        %v1308 = vld [vmem:[%s168] sm:$0xe]
        %v1309 = vld [vmem:[%s168 + $0xc] sm:$0xe]
        %v1310 = vld [vmem:[%s168 + $0x18] sm:$0xe]
        %v1311 = vld [vmem:[%s168 + $0x24] sm:$0xe]
        %v1312 = vld [vmem:[%s168 + $0x30] sm:$0xe]
        %v1313 = vld [vmem:[%s168 + $0x3c] sm:$0xe]
        %v1314 = vld [vmem:[%s168 + $0x48] sm:$0xe]
        %v1315 = vld [vmem:[%s168 + $0x54] sm:$0xe]
        %v1316 = vld [vmem:[%s168 + $0x60] sm:$0xe]
        %v1317 = vld [vmem:[%s168 + $0x6c] sm:$0xe]
        %v1318 = vld [vmem:[%s168 + $0x78] sm:$0xe]
        %v1319 = vld [vmem:[%s168 + $0x84] sm:$0xe]
        %v1320 = vld [vmem:[%s168 + $0x90] sm:$0xe]
        %v1321 = vld [vmem:[%s168 + $0x9c] sm:$0xe]
        %v1322 = vld [vmem:[%s168 + $0xa8] sm:$0xe]
        %v1323 = vld [vmem:[%s168 + $0xb4] sm:$0xe]
        %vm1356 = vcmask 1042432
        %vm1357 = vcmask 1046532
        %vm1358 = vmor %vm1356, %vm1357
        %v1359 = vrot.slane %v1308, 5
        %v1360 = vrot.slane %v1359, 4
        %v1361 = vrot.slane %v171, 5
        %v1362 = vsel %vm1358, %v1360, %v1361
        %v1363 = vrot.slane %v1361, 4
        %v1364 = vrot.slane %v211, 5
        %v1365 = vsel %vm1358, %v1363, %v1364
        %v1366 = vrot.slane %v1309, 5
        %v1367 = vrot.slane %v1366, 4
        %v1368 = vrot.slane %v173, 5
        %v1369 = vsel %vm1358, %v1367, %v1368
        %v1370 = vrot.slane %v1368, 4
        %v1371 = vrot.slane %v212, 5
        %v1372 = vsel %vm1358, %v1370, %v1371
        %v1373 = vrot.slane %v1310, 5
        %v1374 = vrot.slane %v1373, 4
        %v1375 = vrot.slane %v175, 5
        %v1376 = vsel %vm1358, %v1374, %v1375
        %v1377 = vrot.slane %v1375, 4
        %v1378 = vrot.slane %v213, 5
        %v1379 = vsel %vm1358, %v1377, %v1378
        %v1380 = vrot.slane %v1311, 5
        %v1381 = vrot.slane %v1380, 4
        %v1382 = vrot.slane %v177, 5
        %v1383 = vsel %vm1358, %v1381, %v1382
        %v1384 = vrot.slane %v1382, 4
        %v1385 = vrot.slane %v214, 5
        %v1386 = vsel %vm1358, %v1384, %v1385
        %v1387 = vrot.slane %v1312, 5
        %v1388 = vrot.slane %v1387, 4
        %v1389 = vrot.slane %v179, 5
        %v1390 = vsel %vm1358, %v1388, %v1389
        %v1391 = vrot.slane %v1389, 4
        %v1392 = vrot.slane %v215, 5
        %v1393 = vsel %vm1358, %v1391, %v1392
        %v1394 = vrot.slane %v1313, 5
        %v1395 = vrot.slane %v1394, 4
        %v1396 = vrot.slane %v181, 5
        %v1397 = vsel %vm1358, %v1395, %v1396
        %v1398 = vrot.slane %v1396, 4
        %v1399 = vrot.slane %v216, 5
        %v1400 = vsel %vm1358, %v1398, %v1399
        %v1401 = vrot.slane %v1314, 5
        %v1402 = vrot.slane %v1401, 4
        %v1403 = vrot.slane %v183, 5
        %v1404 = vsel %vm1358, %v1402, %v1403
        %v1405 = vrot.slane %v1403, 4
        %v1406 = vrot.slane %v217, 5
        %v1407 = vsel %vm1358, %v1405, %v1406
        %v1408 = vrot.slane %v1315, 5
        %v1409 = vrot.slane %v1408, 4
        %v1410 = vrot.slane %v185, 5
        %v1411 = vsel %vm1358, %v1409, %v1410
        %v1412 = vrot.slane %v1410, 4
        %v1413 = vrot.slane %v218, 5
        %v1414 = vsel %vm1358, %v1412, %v1413
        %v1415 = vrot.slane %v1316, 5
        %v1416 = vrot.slane %v1415, 4
        %v1417 = vrot.slane %v187, 5
        %v1418 = vsel %vm1358, %v1416, %v1417
        %v1419 = vrot.slane %v1417, 4
        %v1420 = vrot.slane %v219, 5
        %v1421 = vsel %vm1358, %v1419, %v1420
        %v1422 = vrot.slane %v1317, 5
        %v1423 = vrot.slane %v1422, 4
        %v1424 = vrot.slane %v189, 5
        %v1425 = vsel %vm1358, %v1423, %v1424
        %v1426 = vrot.slane %v1424, 4
        %v1427 = vrot.slane %v220, 5
        %v1428 = vsel %vm1358, %v1426, %v1427
        %v1429 = vrot.slane %v1318, 5
        %v1430 = vrot.slane %v1429, 4
        %v1431 = vrot.slane %v191, 5
        %v1432 = vsel %vm1358, %v1430, %v1431
        %v1433 = vrot.slane %v1431, 4
        %v1434 = vrot.slane %v221, 5
        %v1435 = vsel %vm1358, %v1433, %v1434
        %v1436 = vrot.slane %v1319, 5
        %v1437 = vrot.slane %v1436, 4
        %v1438 = vrot.slane %v193, 5
        %v1439 = vsel %vm1358, %v1437, %v1438
        %v1440 = vrot.slane %v1438, 4
        %v1441 = vrot.slane %v222, 5
        %v1442 = vsel %vm1358, %v1440, %v1441
        %v1443 = vrot.slane %v1320, 5
        %v1444 = vrot.slane %v1443, 4
        %v1445 = vrot.slane %v195, 5
        %v1446 = vsel %vm1358, %v1444, %v1445
        %v1447 = vrot.slane %v1445, 4
        %v1448 = vrot.slane %v223, 5
        %v1449 = vsel %vm1358, %v1447, %v1448
        %v1450 = vrot.slane %v1321, 5
        %v1451 = vrot.slane %v1450, 4
        %v1452 = vrot.slane %v197, 5
        %v1453 = vsel %vm1358, %v1451, %v1452
        %v1454 = vrot.slane %v1452, 4
        %v1455 = vrot.slane %v224, 5
        %v1456 = vsel %vm1358, %v1454, %v1455
        %v1457 = vrot.slane %v1322, 5
        %v1458 = vrot.slane %v1457, 4
        %v1459 = vrot.slane %v199, 5
        %v1460 = vsel %vm1358, %v1458, %v1459
        %v1461 = vrot.slane %v1459, 4
        %v1462 = vrot.slane %v225, 5
        %v1463 = vsel %vm1358, %v1461, %v1462
        %v1464 = vrot.slane %v1323, 5
        %v1465 = vrot.slane %v1464, 4
        %v1466 = vrot.slane %v201, 5
        %v1467 = vsel %vm1358, %v1465, %v1466
        %v1468 = vrot.slane %v1466, 4
        %v1469 = vrot.slane %v226, 5
        %v1470 = vsel %vm1358, %v1468, %v1469
        %s1471 = scalar_lea.vmem %s1, 144
        %v1472 = vld [vmem:[%s1471] sm:$0xff]
        %v1473 = vld [vmem:[%s1471 + $0x8] sm:$0xff]
        %v1474 = vld [vmem:[%s1471 + $0x10] sm:$0xff]
        %v1475 = vld [vmem:[%s1471 + $0x18] sm:$0xff]
        %v1476 = vld [vmem:[%s1471 + $0x20] sm:$0xff]
        %v1477 = vld [vmem:[%s1471 + $0x28] sm:$0xff]
        %v1478 = vld [vmem:[%s1471 + $0x30] sm:$0xff]
        %v1479 = vld [vmem:[%s1471 + $0x38] sm:$0xff]
        %v1480 = vld [vmem:[%s1471 + $0x40] sm:$0xff]
        %v1481 = vunpack.c.l.b16 %v1362
        %v1482 = vunpack.c.l.b16 %v1365
        %v1483 = vunpack.c.l.b16 %v1369
        %v1484 = vunpack.c.l.b16 %v1372
        %v1485 = vunpack.c.l.b16 %v1376
        %v1486 = vunpack.c.l.b16 %v1379
        %v1487 = vunpack.c.l.b16 %v1383
        %v1488 = vunpack.c.l.b16 %v1386
        %v1489 = vunpack.c.l.b16 %v1390
        %v1490 = vunpack.c.l.b16 %v1393
        %v1491 = vunpack.c.l.b16 %v1397
        %v1492 = vunpack.c.l.b16 %v1400
        %v1493 = vunpack.c.l.b16 %v1404
        %v1494 = vunpack.c.l.b16 %v1407
        %v1495 = vunpack.c.l.b16 %v1411
        %v1496 = vunpack.c.l.b16 %v1414
        %v1497 = vunpack.c.l.b16 %v1418
        %v1498 = vunpack.c.l.b16 %v1421
        %v1499 = vunpack.c.l.b16 %v1425
        %v1500 = vunpack.c.l.b16 %v1428
        %v1501 = vunpack.c.l.b16 %v1432
        %v1502 = vunpack.c.l.b16 %v1435
        %v1503 = vunpack.c.l.b16 %v1439
        %v1504 = vunpack.c.l.b16 %v1442
        %v1505 = vunpack.c.l.b16 %v1446
        %v1506 = vunpack.c.l.b16 %v1449
        %v1507 = vunpack.c.l.b16 %v1453
        %v1508 = vunpack.c.l.b16 %v1456
        %v1509 = vunpack.c.l.b16 %v1460
        %v1510 = vunpack.c.l.b16 %v1463
        %v1511 = vunpack.c.l.b16 %v1467
        %v1512 = vunpack.c.l.b16 %v1470
        %v1513 = vpack.c.b16 %v1482, %v1481
        %v1514 = vpack.c.b16 %v1484, %v1483
        %v1515 = vpack.c.b16 %v1486, %v1485
        %v1516 = vpack.c.b16 %v1488, %v1487
        %v1517 = vpack.c.b16 %v1490, %v1489
        %v1518 = vpack.c.b16 %v1492, %v1491
        %v1519 = vpack.c.b16 %v1494, %v1493
        %v1520 = vpack.c.b16 %v1496, %v1495
        %v1521 = vpack.c.b16 %v1498, %v1497
        %v1522 = vpack.c.b16 %v1500, %v1499
        %v1523 = vpack.c.b16 %v1502, %v1501
        %v1524 = vpack.c.b16 %v1504, %v1503
        %v1525 = vpack.c.b16 %v1506, %v1505
        %v1526 = vpack.c.b16 %v1508, %v1507
        %v1527 = vpack.c.b16 %v1510, %v1509
        %v1528 = vpack.c.b16 %v1512, %v1511
        %v1538 = vunpack.c.l.b16 %v1472
        %v1539 = vunpack.c.h.b16 %v1472
        %v1540 = vunpack.c.l.b16 %v1473
        %v1541 = vunpack.c.h.b16 %v1473
        %v1542 = vunpack.c.l.b16 %v1474
        %v1543 = vunpack.c.h.b16 %v1474
        %v1544 = vunpack.c.l.b16 %v1475
        %v1545 = vunpack.c.h.b16 %v1475
        %v1546 = vunpack.c.l.b16 %v1476
        %v1547 = vunpack.c.h.b16 %v1476
        %v1548 = vunpack.c.l.b16 %v1477
        %v1549 = vunpack.c.h.b16 %v1477
        %v1550 = vunpack.c.l.b16 %v1478
        %v1551 = vunpack.c.h.b16 %v1478
        %v1552 = vunpack.c.l.b16 %v1479
        %v1553 = vunpack.c.h.b16 %v1479
        %v1554 = vunpack.c.l.b16 %v1480
        %v1555 = vunpack.c.h.b16 %v1480
        %v1556 = vpack.c.b16 %v1540, %v1538
        %v1557 = vpack.c.b16 %v1541, %v1539
        %v1558 = vpack.c.b16 %v1544, %v1542
        %v1559 = vpack.c.b16 %v1545, %v1543
        %v1560 = vpack.c.b16 %v1548, %v1546
        %v1561 = vpack.c.b16 %v1549, %v1547
        %v1562 = vpack.c.b16 %v1552, %v1550
        %v1563 = vpack.c.b16 %v1553, %v1551
        %v1564 = vpack.c.b16 %v1554, %v1554
        %v1565 = vpack.c.b16 %v1555, %v1555
        %v1575 = vsel %vm717, %v1513, 0
        %v1578 = vsel %vm717, %v1514, 0
        %v1581 = vsel %vm717, %v1515, 0
        %v1584 = vsel %vm717, %v1516, 0
        %v1587 = vsel %vm717, %v1517, 0
        %v1590 = vsel %vm717, %v1518, 0
        %v1593 = vsel %vm717, %v1519, 0
        %v1596 = vsel %vm717, %v1520, 0
        %v1599 = vsel %vm717, %v1521, 0
        %v1602 = vsel %vm717, %v1522, 0
        %v1605 = vsel %vm717, %v1523, 0
        %v1608 = vsel %vm717, %v1524, 0
        %v1611 = vsel %vm717, %v1525, 0
        %v1614 = vsel %vm717, %v1526, 0
        %v1617 = vsel %vm717, %v1527, 0
        %v1620 = vsel %vm717, %v1528, 0
        %v1623 = vsel %vm766, %v1564, 0
        %v1626 = vsel %vm766, %v1565, 0
        %1628 = vmatpush.bf16.msra.mxu0 0
        %1629 = vmatpush.bf16.msra.mxu0 0
        %1630 = vmatpush.bf16.msra.mxu0 0
        %1631 = vmatpush.bf16.msra.mxu0 %v1623
        %1632 = vmatpush.bf16.msra.mxu0 %v1562
        %1633 = vmatpush.bf16.msra.mxu0 %v1560
        %1634 = vmatpush.bf16.msra.mxu0 %v1558
        %1635 = vmatpush.bf16.msra.mxu0 %v1556
        %1636 = vmatmul.bf16.gmra.mxu0 %v1575
        %v1637 = vpop.f32.mrf.mxu0
        %v1638 = vadd.f32 0.0, %v1637
        %v1639 = vpop.f32.mrf.mxu0
        %v1640 = vadd.f32 0.0, %v1639
        %1641 = vmatmul.bf16.gmra.mxu0 %v1578
        %v1642 = vpop.f32.mrf.mxu0
        %v1643 = vadd.f32 0.0, %v1642
        %v1644 = vpop.f32.mrf.mxu0
        %v1645 = vadd.f32 0.0, %v1644
        %1646 = vmatmul.bf16.gmra.mxu0 %v1581
        %v1647 = vpop.f32.mrf.mxu0
        %v1648 = vadd.f32 0.0, %v1647
        %v1649 = vpop.f32.mrf.mxu0
        %v1650 = vadd.f32 0.0, %v1649
        %1651 = vmatmul.bf16.gmra.mxu0 %v1584
        %v1652 = vpop.f32.mrf.mxu0
        %v1653 = vadd.f32 0.0, %v1652
        %v1654 = vpop.f32.mrf.mxu0
        %v1655 = vadd.f32 0.0, %v1654
        %1656 = vmatmul.bf16.gmra.mxu0 %v1587
        %v1657 = vpop.f32.mrf.mxu0
        %v1658 = vadd.f32 0.0, %v1657
        %v1659 = vpop.f32.mrf.mxu0
        %v1660 = vadd.f32 0.0, %v1659
        %1661 = vmatmul.bf16.gmra.mxu0 %v1590
        %v1662 = vpop.f32.mrf.mxu0
        %v1663 = vadd.f32 0.0, %v1662
        %v1664 = vpop.f32.mrf.mxu0
        %v1665 = vadd.f32 0.0, %v1664
        %1666 = vmatmul.bf16.gmra.mxu0 %v1593
        %v1667 = vpop.f32.mrf.mxu0
        %v1668 = vadd.f32 0.0, %v1667
        %v1669 = vpop.f32.mrf.mxu0
        %v1670 = vadd.f32 0.0, %v1669
        %1671 = vmatmul.bf16.gmra.mxu0 %v1596
        %v1672 = vpop.f32.mrf.mxu0
        %v1673 = vadd.f32 0.0, %v1672
        %v1674 = vpop.f32.mrf.mxu0
        %v1675 = vadd.f32 0.0, %v1674
        %1676 = vmatmul.bf16.gmra.mxu0 %v1599
        %v1677 = vpop.f32.mrf.mxu0
        %v1678 = vadd.f32 0.0, %v1677
        %v1679 = vpop.f32.mrf.mxu0
        %v1680 = vadd.f32 0.0, %v1679
        %1681 = vmatmul.bf16.gmra.mxu0 %v1602
        %v1682 = vpop.f32.mrf.mxu0
        %v1683 = vadd.f32 0.0, %v1682
        %v1684 = vpop.f32.mrf.mxu0
        %v1685 = vadd.f32 0.0, %v1684
        %1686 = vmatmul.bf16.gmra.mxu0 %v1605
        %v1687 = vpop.f32.mrf.mxu0
        %v1688 = vadd.f32 0.0, %v1687
        %v1689 = vpop.f32.mrf.mxu0
        %v1690 = vadd.f32 0.0, %v1689
        %1691 = vmatmul.bf16.gmra.mxu0 %v1608
        %v1692 = vpop.f32.mrf.mxu0
        %v1693 = vadd.f32 0.0, %v1692
        %v1694 = vpop.f32.mrf.mxu0
        %v1695 = vadd.f32 0.0, %v1694
        %1696 = vmatmul.bf16.gmra.mxu0 %v1611
        %v1697 = vpop.f32.mrf.mxu0
        %v1698 = vadd.f32 0.0, %v1697
        %v1699 = vpop.f32.mrf.mxu0
        %v1700 = vadd.f32 0.0, %v1699
        %1701 = vmatmul.bf16.gmra.mxu0 %v1614
        %v1702 = vpop.f32.mrf.mxu0
        %v1703 = vadd.f32 0.0, %v1702
        %v1704 = vpop.f32.mrf.mxu0
        %v1705 = vadd.f32 0.0, %v1704
        %1706 = vmatmul.bf16.gmra.mxu0 %v1617
        %v1707 = vpop.f32.mrf.mxu0
        %v1708 = vadd.f32 0.0, %v1707
        %v1709 = vpop.f32.mrf.mxu0
        %v1710 = vadd.f32 0.0, %v1709
        %1711 = vmatmul.bf16.gmra.mxu0 %v1620
        %v1712 = vpop.f32.mrf.mxu0
        %v1713 = vadd.f32 0.0, %v1712
        %v1714 = vpop.f32.mrf.mxu0
        %v1715 = vadd.f32 0.0, %v1714
        %1716 = vdwg.mxu0
        %1717 = vmatpush.bf16.msra.mxu0 0
        %1718 = vmatpush.bf16.msra.mxu0 0
        %1719 = vmatpush.bf16.msra.mxu0 0
        %1720 = vmatpush.bf16.msra.mxu0 %v1626
        %1721 = vmatpush.bf16.msra.mxu0 %v1563
        %1722 = vmatpush.bf16.msra.mxu0 %v1561
        %1723 = vmatpush.bf16.msra.mxu0 %v1559
        %1724 = vmatpush.bf16.msra.mxu0 %v1557
        %1725 = vmatmul.bf16.gmra.mxu0 %v1575
        %v1726 = vpop.f32.mrf.mxu0
        %v1727 = vadd.f32 0.0, %v1726
        %v1728 = vpop.f32.mrf.mxu0
        %v1729 = vadd.f32 0.0, %v1728
        %1730 = vmatmul.bf16.gmra.mxu0 %v1578
        %v1731 = vpop.f32.mrf.mxu0
        %v1732 = vadd.f32 0.0, %v1731
        %v1733 = vpop.f32.mrf.mxu0
        %v1734 = vadd.f32 0.0, %v1733
        %1735 = vmatmul.bf16.gmra.mxu0 %v1581
        %v1736 = vpop.f32.mrf.mxu0
        %v1737 = vadd.f32 0.0, %v1736
        %v1738 = vpop.f32.mrf.mxu0
        %v1739 = vadd.f32 0.0, %v1738
        %1740 = vmatmul.bf16.gmra.mxu0 %v1584
        %v1741 = vpop.f32.mrf.mxu0
        %v1742 = vadd.f32 0.0, %v1741
        %v1743 = vpop.f32.mrf.mxu0
        %v1744 = vadd.f32 0.0, %v1743
        %1745 = vmatmul.bf16.gmra.mxu0 %v1587
        %v1746 = vpop.f32.mrf.mxu0
        %v1747 = vadd.f32 0.0, %v1746
        %v1748 = vpop.f32.mrf.mxu0
        %v1749 = vadd.f32 0.0, %v1748
        %1750 = vmatmul.bf16.gmra.mxu0 %v1590
        %v1751 = vpop.f32.mrf.mxu0
        %v1752 = vadd.f32 0.0, %v1751
        %v1753 = vpop.f32.mrf.mxu0
        %v1754 = vadd.f32 0.0, %v1753
        %1755 = vmatmul.bf16.gmra.mxu0 %v1593
        %v1756 = vpop.f32.mrf.mxu0
        %v1757 = vadd.f32 0.0, %v1756
        %v1758 = vpop.f32.mrf.mxu0
        %v1759 = vadd.f32 0.0, %v1758
        %1760 = vmatmul.bf16.gmra.mxu0 %v1596
        %v1761 = vpop.f32.mrf.mxu0
        %v1762 = vadd.f32 0.0, %v1761
        %v1763 = vpop.f32.mrf.mxu0
        %v1764 = vadd.f32 0.0, %v1763
        %1765 = vmatmul.bf16.gmra.mxu0 %v1599
        %v1766 = vpop.f32.mrf.mxu0
        %v1767 = vadd.f32 0.0, %v1766
        %v1768 = vpop.f32.mrf.mxu0
        %v1769 = vadd.f32 0.0, %v1768
        %1770 = vmatmul.bf16.gmra.mxu0 %v1602
        %v1771 = vpop.f32.mrf.mxu0
        %v1772 = vadd.f32 0.0, %v1771
        %v1773 = vpop.f32.mrf.mxu0
        %v1774 = vadd.f32 0.0, %v1773
        %1775 = vmatmul.bf16.gmra.mxu0 %v1605
        %v1776 = vpop.f32.mrf.mxu0
        %v1777 = vadd.f32 0.0, %v1776
        %v1778 = vpop.f32.mrf.mxu0
        %v1779 = vadd.f32 0.0, %v1778
        %1780 = vmatmul.bf16.gmra.mxu0 %v1608
        %v1781 = vpop.f32.mrf.mxu0
        %v1782 = vadd.f32 0.0, %v1781
        %v1783 = vpop.f32.mrf.mxu0
        %v1784 = vadd.f32 0.0, %v1783
        %1785 = vmatmul.bf16.gmra.mxu0 %v1611
        %v1786 = vpop.f32.mrf.mxu0
        %v1787 = vadd.f32 0.0, %v1786
        %v1788 = vpop.f32.mrf.mxu0
        %v1789 = vadd.f32 0.0, %v1788
        %1790 = vmatmul.bf16.gmra.mxu0 %v1614
        %v1791 = vpop.f32.mrf.mxu0
        %v1792 = vadd.f32 0.0, %v1791
        %v1793 = vpop.f32.mrf.mxu0
        %v1794 = vadd.f32 0.0, %v1793
        %1795 = vmatmul.bf16.gmra.mxu0 %v1617
        %v1796 = vpop.f32.mrf.mxu0
        %v1797 = vadd.f32 0.0, %v1796
        %v1798 = vpop.f32.mrf.mxu0
        %v1799 = vadd.f32 0.0, %v1798
        %1800 = vmatmul.bf16.gmra.mxu0 %v1620
        %v1801 = vpop.f32.mrf.mxu0
        %v1802 = vadd.f32 0.0, %v1801
        %v1803 = vpop.f32.mrf.mxu0
        %v1804 = vadd.f32 0.0, %v1803
        %1805 = vdwg.mxu0
        %v1806 = vadd.f32 %v1140, %v1638
        %v1807 = vadd.f32 %v1229, %v1727
        %v1808 = vadd.f32 %v1142, %v1640
        %v1809 = vadd.f32 %v1231, %v1729
        %v1810 = vadd.f32 %v1145, %v1643
        %v1811 = vadd.f32 %v1234, %v1732
        %v1812 = vadd.f32 %v1147, %v1645
        %v1813 = vadd.f32 %v1236, %v1734
        %v1814 = vadd.f32 %v1150, %v1648
        %v1815 = vadd.f32 %v1239, %v1737
        %v1816 = vadd.f32 %v1152, %v1650
        %v1817 = vadd.f32 %v1241, %v1739
        %v1818 = vadd.f32 %v1155, %v1653
        %v1819 = vadd.f32 %v1244, %v1742
        %v1820 = vadd.f32 %v1157, %v1655
        %v1821 = vadd.f32 %v1246, %v1744
        %v1822 = vadd.f32 %v1160, %v1658
        %v1823 = vadd.f32 %v1249, %v1747
        %v1824 = vadd.f32 %v1162, %v1660
        %v1825 = vadd.f32 %v1251, %v1749
        %v1826 = vadd.f32 %v1165, %v1663
        %v1827 = vadd.f32 %v1254, %v1752
        %v1828 = vadd.f32 %v1167, %v1665
        %v1829 = vadd.f32 %v1256, %v1754
        %v1830 = vadd.f32 %v1170, %v1668
        %v1831 = vadd.f32 %v1259, %v1757
        %v1832 = vadd.f32 %v1172, %v1670
        %v1833 = vadd.f32 %v1261, %v1759
        %v1834 = vadd.f32 %v1175, %v1673
        %v1835 = vadd.f32 %v1264, %v1762
        %v1836 = vadd.f32 %v1177, %v1675
        %v1837 = vadd.f32 %v1266, %v1764
        %v1838 = vadd.f32 %v1180, %v1678
        %v1839 = vadd.f32 %v1269, %v1767
        %v1840 = vadd.f32 %v1182, %v1680
        %v1841 = vadd.f32 %v1271, %v1769
        %v1842 = vadd.f32 %v1185, %v1683
        %v1843 = vadd.f32 %v1274, %v1772
        %v1844 = vadd.f32 %v1187, %v1685
        %v1845 = vadd.f32 %v1276, %v1774
        %v1846 = vadd.f32 %v1190, %v1688
        %v1847 = vadd.f32 %v1279, %v1777
        %v1848 = vadd.f32 %v1192, %v1690
        %v1849 = vadd.f32 %v1281, %v1779
        %v1850 = vadd.f32 %v1195, %v1693
        %v1851 = vadd.f32 %v1284, %v1782
        %v1852 = vadd.f32 %v1197, %v1695
        %v1853 = vadd.f32 %v1286, %v1784
        %v1854 = vadd.f32 %v1200, %v1698
        %v1855 = vadd.f32 %v1289, %v1787
        %v1856 = vadd.f32 %v1202, %v1700
        %v1857 = vadd.f32 %v1291, %v1789
        %v1858 = vadd.f32 %v1205, %v1703
        %v1859 = vadd.f32 %v1294, %v1792
        %v1860 = vadd.f32 %v1207, %v1705
        %v1861 = vadd.f32 %v1296, %v1794
        %v1862 = vadd.f32 %v1210, %v1708
        %v1863 = vadd.f32 %v1299, %v1797
        %v1864 = vadd.f32 %v1212, %v1710
        %v1865 = vadd.f32 %v1301, %v1799
        %v1866 = vadd.f32 %v1215, %v1713
        %v1867 = vadd.f32 %v1304, %v1802
        %v1868 = vadd.f32 %v1217, %v1715
        %v1869 = vadd.f32 %v1306, %v1804
        %s1870 = scalar_lea.vmem %s168, 12
        %v1871 = vld [vmem:[%s1870] sm:$0xf]
        %v1872 = vld [vmem:[%s1870 + $0x4] sm:$0xf]
        %v1873 = vld [vmem:[%s1870 + $0xc] sm:$0xf]
        %v1874 = vld [vmem:[%s1870 + $0x10] sm:$0xf]
        %v1875 = vld [vmem:[%s1870 + $0x18] sm:$0xf]
        %v1876 = vld [vmem:[%s1870 + $0x1c] sm:$0xf]
        %v1877 = vld [vmem:[%s1870 + $0x24] sm:$0xf]
        %v1878 = vld [vmem:[%s1870 + $0x28] sm:$0xf]
        %v1879 = vld [vmem:[%s1870 + $0x30] sm:$0xf]
        %v1880 = vld [vmem:[%s1870 + $0x34] sm:$0xf]
        %v1881 = vld [vmem:[%s1870 + $0x3c] sm:$0xf]
        %v1882 = vld [vmem:[%s1870 + $0x40] sm:$0xf]
        %v1883 = vld [vmem:[%s1870 + $0x48] sm:$0xf]
        %v1884 = vld [vmem:[%s1870 + $0x4c] sm:$0xf]
        %v1885 = vld [vmem:[%s1870 + $0x54] sm:$0xf]
        %v1886 = vld [vmem:[%s1870 + $0x58] sm:$0xf]
        %v1887 = vld [vmem:[%s1870 + $0x60] sm:$0xf]
        %v1888 = vld [vmem:[%s1870 + $0x64] sm:$0xf]
        %v1889 = vld [vmem:[%s1870 + $0x6c] sm:$0xf]
        %v1890 = vld [vmem:[%s1870 + $0x70] sm:$0xf]
        %v1891 = vld [vmem:[%s1870 + $0x78] sm:$0xf]
        %v1892 = vld [vmem:[%s1870 + $0x7c] sm:$0xf]
        %v1893 = vld [vmem:[%s1870 + $0x84] sm:$0xf]
        %v1894 = vld [vmem:[%s1870 + $0x88] sm:$0xf]
        %v1895 = vld [vmem:[%s1870 + $0x90] sm:$0xf]
        %v1896 = vld [vmem:[%s1870 + $0x94] sm:$0xf]
        %v1897 = vld [vmem:[%s1870 + $0x9c] sm:$0xf]
        %v1898 = vld [vmem:[%s1870 + $0xa0] sm:$0xf]
        %v1899 = vld [vmem:[%s1870 + $0xa8] sm:$0xf]
        %v1900 = vld [vmem:[%s1870 + $0xac] sm:$0xf]
        %v1901 = vld [vmem:[%s1870 + $0xb4] sm:$0xf]
        %v1902 = vld [vmem:[%s1870 + $0xb8] sm:$0xf]
        %s1903 = scalar_lea.vmem %s1, 216
        %v1904 = vld [vmem:[%s1903] sm:$0xff]
        %v1905 = vld [vmem:[%s1903 + $0x8] sm:$0xff]
        %v1906 = vld [vmem:[%s1903 + $0x10] sm:$0xff]
        %v1907 = vld [vmem:[%s1903 + $0x18] sm:$0xff]
        %v1908 = vld [vmem:[%s1903 + $0x20] sm:$0xff]
        %v1909 = vld [vmem:[%s1903 + $0x28] sm:$0xff]
        %v1910 = vld [vmem:[%s1903 + $0x30] sm:$0xff]
        %v1911 = vld [vmem:[%s1903 + $0x38] sm:$0xff]
        %v1912 = vld [vmem:[%s1903 + $0x40] sm:$0xff]
        %v1945 = vunpack.c.l.b16 %v1871
        %v1946 = vunpack.c.l.b16 %v1872
        %v1947 = vunpack.c.l.b16 %v1873
        %v1948 = vunpack.c.l.b16 %v1874
        %v1949 = vunpack.c.l.b16 %v1875
        %v1950 = vunpack.c.l.b16 %v1876
        %v1951 = vunpack.c.l.b16 %v1877
        %v1952 = vunpack.c.l.b16 %v1878
        %v1953 = vunpack.c.l.b16 %v1879
        %v1954 = vunpack.c.l.b16 %v1880
        %v1955 = vunpack.c.l.b16 %v1881
        %v1956 = vunpack.c.l.b16 %v1882
        %v1957 = vunpack.c.l.b16 %v1883
        %v1958 = vunpack.c.l.b16 %v1884
        %v1959 = vunpack.c.l.b16 %v1885
        %v1960 = vunpack.c.l.b16 %v1886
        %v1961 = vunpack.c.l.b16 %v1887
        %v1962 = vunpack.c.l.b16 %v1888
        %v1963 = vunpack.c.l.b16 %v1889
        %v1964 = vunpack.c.l.b16 %v1890
        %v1965 = vunpack.c.l.b16 %v1891
        %v1966 = vunpack.c.l.b16 %v1892
        %v1967 = vunpack.c.l.b16 %v1893
        %v1968 = vunpack.c.l.b16 %v1894
        %v1969 = vunpack.c.l.b16 %v1895
        %v1970 = vunpack.c.l.b16 %v1896
        %v1971 = vunpack.c.l.b16 %v1897
        %v1972 = vunpack.c.l.b16 %v1898
        %v1973 = vunpack.c.l.b16 %v1899
        %v1974 = vunpack.c.l.b16 %v1900
        %v1975 = vunpack.c.l.b16 %v1901
        %v1976 = vunpack.c.l.b16 %v1902
        %v1977 = vpack.c.b16 %v1946, %v1945
        %v1978 = vpack.c.b16 %v1948, %v1947
        %v1979 = vpack.c.b16 %v1950, %v1949
        %v1980 = vpack.c.b16 %v1952, %v1951
        %v1981 = vpack.c.b16 %v1954, %v1953
        %v1982 = vpack.c.b16 %v1956, %v1955
        %v1983 = vpack.c.b16 %v1958, %v1957
        %v1984 = vpack.c.b16 %v1960, %v1959
        %v1985 = vpack.c.b16 %v1962, %v1961
        %v1986 = vpack.c.b16 %v1964, %v1963
        %v1987 = vpack.c.b16 %v1966, %v1965
        %v1988 = vpack.c.b16 %v1968, %v1967
        %v1989 = vpack.c.b16 %v1970, %v1969
        %v1990 = vpack.c.b16 %v1972, %v1971
        %v1991 = vpack.c.b16 %v1974, %v1973
        %v1992 = vpack.c.b16 %v1976, %v1975
        %v2002 = vunpack.c.l.b16 %v1904
        %v2003 = vunpack.c.h.b16 %v1904
        %v2004 = vunpack.c.l.b16 %v1905
        %v2005 = vunpack.c.h.b16 %v1905
        %v2006 = vunpack.c.l.b16 %v1906
        %v2007 = vunpack.c.h.b16 %v1906
        %v2008 = vunpack.c.l.b16 %v1907
        %v2009 = vunpack.c.h.b16 %v1907
        %v2010 = vunpack.c.l.b16 %v1908
        %v2011 = vunpack.c.h.b16 %v1908
        %v2012 = vunpack.c.l.b16 %v1909
        %v2013 = vunpack.c.h.b16 %v1909
        %v2014 = vunpack.c.l.b16 %v1910
        %v2015 = vunpack.c.h.b16 %v1910
        %v2016 = vunpack.c.l.b16 %v1911
        %v2017 = vunpack.c.h.b16 %v1911
        %v2018 = vunpack.c.l.b16 %v1912
        %v2019 = vunpack.c.h.b16 %v1912
        %v2020 = vpack.c.b16 %v2004, %v2002
        %v2021 = vpack.c.b16 %v2005, %v2003
        %v2022 = vpack.c.b16 %v2008, %v2006
        %v2023 = vpack.c.b16 %v2009, %v2007
        %v2024 = vpack.c.b16 %v2012, %v2010
        %v2025 = vpack.c.b16 %v2013, %v2011
        %v2026 = vpack.c.b16 %v2016, %v2014
        %v2027 = vpack.c.b16 %v2017, %v2015
        %v2028 = vpack.c.b16 %v2018, %v2018
        %v2029 = vpack.c.b16 %v2019, %v2019
        %v2039 = vsel %vm717, %v1977, 0
        %v2042 = vsel %vm717, %v1978, 0
        %v2045 = vsel %vm717, %v1979, 0
        %v2048 = vsel %vm717, %v1980, 0
        %v2051 = vsel %vm717, %v1981, 0
        %v2054 = vsel %vm717, %v1982, 0
        %v2057 = vsel %vm717, %v1983, 0
        %v2060 = vsel %vm717, %v1984, 0
        %v2063 = vsel %vm717, %v1985, 0
        %v2066 = vsel %vm717, %v1986, 0
        %v2069 = vsel %vm717, %v1987, 0
        %v2072 = vsel %vm717, %v1988, 0
        %v2075 = vsel %vm717, %v1989, 0
        %v2078 = vsel %vm717, %v1990, 0
        %v2081 = vsel %vm717, %v1991, 0
        %v2084 = vsel %vm717, %v1992, 0
        %v2087 = vsel %vm766, %v2028, 0
        %v2090 = vsel %vm766, %v2029, 0
        %2092 = vmatpush.bf16.msra.mxu0 0
        %2093 = vmatpush.bf16.msra.mxu0 0
        %2094 = vmatpush.bf16.msra.mxu0 0
        %2095 = vmatpush.bf16.msra.mxu0 %v2087
        %2096 = vmatpush.bf16.msra.mxu0 %v2026
        %2097 = vmatpush.bf16.msra.mxu0 %v2024
        %2098 = vmatpush.bf16.msra.mxu0 %v2022
        %2099 = vmatpush.bf16.msra.mxu0 %v2020
        %2100 = vmatmul.bf16.gmra.mxu0 %v2039
        %v2101 = vpop.f32.mrf.mxu0
        %v2102 = vadd.f32 0.0, %v2101
        %v2103 = vpop.f32.mrf.mxu0
        %v2104 = vadd.f32 0.0, %v2103
        %2105 = vmatmul.bf16.gmra.mxu0 %v2042
        %v2106 = vpop.f32.mrf.mxu0
        %v2107 = vadd.f32 0.0, %v2106
        %v2108 = vpop.f32.mrf.mxu0
        %v2109 = vadd.f32 0.0, %v2108
        %2110 = vmatmul.bf16.gmra.mxu0 %v2045
        %v2111 = vpop.f32.mrf.mxu0
        %v2112 = vadd.f32 0.0, %v2111
        %v2113 = vpop.f32.mrf.mxu0
        %v2114 = vadd.f32 0.0, %v2113
        %2115 = vmatmul.bf16.gmra.mxu0 %v2048
        %v2116 = vpop.f32.mrf.mxu0
        %v2117 = vadd.f32 0.0, %v2116
        %v2118 = vpop.f32.mrf.mxu0
        %v2119 = vadd.f32 0.0, %v2118
        %2120 = vmatmul.bf16.gmra.mxu0 %v2051
        %v2121 = vpop.f32.mrf.mxu0
        %v2122 = vadd.f32 0.0, %v2121
        %v2123 = vpop.f32.mrf.mxu0
        %v2124 = vadd.f32 0.0, %v2123
        %2125 = vmatmul.bf16.gmra.mxu0 %v2054
        %v2126 = vpop.f32.mrf.mxu0
        %v2127 = vadd.f32 0.0, %v2126
        %v2128 = vpop.f32.mrf.mxu0
        %v2129 = vadd.f32 0.0, %v2128
        %2130 = vmatmul.bf16.gmra.mxu0 %v2057
        %v2131 = vpop.f32.mrf.mxu0
        %v2132 = vadd.f32 0.0, %v2131
        %v2133 = vpop.f32.mrf.mxu0
        %v2134 = vadd.f32 0.0, %v2133
        %2135 = vmatmul.bf16.gmra.mxu0 %v2060
        %v2136 = vpop.f32.mrf.mxu0
        %v2137 = vadd.f32 0.0, %v2136
        %v2138 = vpop.f32.mrf.mxu0
        %v2139 = vadd.f32 0.0, %v2138
        %2140 = vmatmul.bf16.gmra.mxu0 %v2063
        %v2141 = vpop.f32.mrf.mxu0
        %v2142 = vadd.f32 0.0, %v2141
        %v2143 = vpop.f32.mrf.mxu0
        %v2144 = vadd.f32 0.0, %v2143
        %2145 = vmatmul.bf16.gmra.mxu0 %v2066
        %v2146 = vpop.f32.mrf.mxu0
        %v2147 = vadd.f32 0.0, %v2146
        %v2148 = vpop.f32.mrf.mxu0
        %v2149 = vadd.f32 0.0, %v2148
        %2150 = vmatmul.bf16.gmra.mxu0 %v2069
        %v2151 = vpop.f32.mrf.mxu0
        %v2152 = vadd.f32 0.0, %v2151
        %v2153 = vpop.f32.mrf.mxu0
        %v2154 = vadd.f32 0.0, %v2153
        %2155 = vmatmul.bf16.gmra.mxu0 %v2072
        %v2156 = vpop.f32.mrf.mxu0
        %v2157 = vadd.f32 0.0, %v2156
        %v2158 = vpop.f32.mrf.mxu0
        %v2159 = vadd.f32 0.0, %v2158
        %2160 = vmatmul.bf16.gmra.mxu0 %v2075
        %v2161 = vpop.f32.mrf.mxu0
        %v2162 = vadd.f32 0.0, %v2161
        %v2163 = vpop.f32.mrf.mxu0
        %v2164 = vadd.f32 0.0, %v2163
        %2165 = vmatmul.bf16.gmra.mxu0 %v2078
        %v2166 = vpop.f32.mrf.mxu0
        %v2167 = vadd.f32 0.0, %v2166
        %v2168 = vpop.f32.mrf.mxu0
        %v2169 = vadd.f32 0.0, %v2168
        %2170 = vmatmul.bf16.gmra.mxu0 %v2081
        %v2171 = vpop.f32.mrf.mxu0
        %v2172 = vadd.f32 0.0, %v2171
        %v2173 = vpop.f32.mrf.mxu0
        %v2174 = vadd.f32 0.0, %v2173
        %2175 = vmatmul.bf16.gmra.mxu0 %v2084
        %v2176 = vpop.f32.mrf.mxu0
        %v2177 = vadd.f32 0.0, %v2176
        %v2178 = vpop.f32.mrf.mxu0
        %v2179 = vadd.f32 0.0, %v2178
        %2180 = vdwg.mxu0
        %2181 = vmatpush.bf16.msra.mxu0 0
        %2182 = vmatpush.bf16.msra.mxu0 0
        %2183 = vmatpush.bf16.msra.mxu0 0
        %2184 = vmatpush.bf16.msra.mxu0 %v2090
        %2185 = vmatpush.bf16.msra.mxu0 %v2027
        %2186 = vmatpush.bf16.msra.mxu0 %v2025
        %2187 = vmatpush.bf16.msra.mxu0 %v2023
        %2188 = vmatpush.bf16.msra.mxu0 %v2021
        %2189 = vmatmul.bf16.gmra.mxu0 %v2039
        %v2190 = vpop.f32.mrf.mxu0
        %v2191 = vadd.f32 0.0, %v2190
        %v2192 = vpop.f32.mrf.mxu0
        %v2193 = vadd.f32 0.0, %v2192
        %2194 = vmatmul.bf16.gmra.mxu0 %v2042
        %v2195 = vpop.f32.mrf.mxu0
        %v2196 = vadd.f32 0.0, %v2195
        %v2197 = vpop.f32.mrf.mxu0
        %v2198 = vadd.f32 0.0, %v2197
        %2199 = vmatmul.bf16.gmra.mxu0 %v2045
        %v2200 = vpop.f32.mrf.mxu0
        %v2201 = vadd.f32 0.0, %v2200
        %v2202 = vpop.f32.mrf.mxu0
        %v2203 = vadd.f32 0.0, %v2202
        %2204 = vmatmul.bf16.gmra.mxu0 %v2048
        %v2205 = vpop.f32.mrf.mxu0
        %v2206 = vadd.f32 0.0, %v2205
        %v2207 = vpop.f32.mrf.mxu0
        %v2208 = vadd.f32 0.0, %v2207
        %2209 = vmatmul.bf16.gmra.mxu0 %v2051
        %v2210 = vpop.f32.mrf.mxu0
        %v2211 = vadd.f32 0.0, %v2210
        %v2212 = vpop.f32.mrf.mxu0
        %v2213 = vadd.f32 0.0, %v2212
        %2214 = vmatmul.bf16.gmra.mxu0 %v2054
        %v2215 = vpop.f32.mrf.mxu0
        %v2216 = vadd.f32 0.0, %v2215
        %v2217 = vpop.f32.mrf.mxu0
        %v2218 = vadd.f32 0.0, %v2217
        %2219 = vmatmul.bf16.gmra.mxu0 %v2057
        %v2220 = vpop.f32.mrf.mxu0
        %v2221 = vadd.f32 0.0, %v2220
        %v2222 = vpop.f32.mrf.mxu0
        %v2223 = vadd.f32 0.0, %v2222
        %2224 = vmatmul.bf16.gmra.mxu0 %v2060
        %v2225 = vpop.f32.mrf.mxu0
        %v2226 = vadd.f32 0.0, %v2225
        %v2227 = vpop.f32.mrf.mxu0
        %v2228 = vadd.f32 0.0, %v2227
        %2229 = vmatmul.bf16.gmra.mxu0 %v2063
        %v2230 = vpop.f32.mrf.mxu0
        %v2231 = vadd.f32 0.0, %v2230
        %v2232 = vpop.f32.mrf.mxu0
        %v2233 = vadd.f32 0.0, %v2232
        %2234 = vmatmul.bf16.gmra.mxu0 %v2066
        %v2235 = vpop.f32.mrf.mxu0
        %v2236 = vadd.f32 0.0, %v2235
        %v2237 = vpop.f32.mrf.mxu0
        %v2238 = vadd.f32 0.0, %v2237
        %2239 = vmatmul.bf16.gmra.mxu0 %v2069
        %v2240 = vpop.f32.mrf.mxu0
        %v2241 = vadd.f32 0.0, %v2240
        %v2242 = vpop.f32.mrf.mxu0
        %v2243 = vadd.f32 0.0, %v2242
        %2244 = vmatmul.bf16.gmra.mxu0 %v2072
        %v2245 = vpop.f32.mrf.mxu0
        %v2246 = vadd.f32 0.0, %v2245
        %v2247 = vpop.f32.mrf.mxu0
        %v2248 = vadd.f32 0.0, %v2247
        %2249 = vmatmul.bf16.gmra.mxu0 %v2075
        %v2250 = vpop.f32.mrf.mxu0
        %v2251 = vadd.f32 0.0, %v2250
        %v2252 = vpop.f32.mrf.mxu0
        %v2253 = vadd.f32 0.0, %v2252
        %2254 = vmatmul.bf16.gmra.mxu0 %v2078
        %v2255 = vpop.f32.mrf.mxu0
        %v2256 = vadd.f32 0.0, %v2255
        %v2257 = vpop.f32.mrf.mxu0
        %v2258 = vadd.f32 0.0, %v2257
        %2259 = vmatmul.bf16.gmra.mxu0 %v2081
        %v2260 = vpop.f32.mrf.mxu0
        %v2261 = vadd.f32 0.0, %v2260
        %v2262 = vpop.f32.mrf.mxu0
        %v2263 = vadd.f32 0.0, %v2262
        %2264 = vmatmul.bf16.gmra.mxu0 %v2084
        %v2265 = vpop.f32.mrf.mxu0
        %v2266 = vadd.f32 0.0, %v2265
        %v2267 = vpop.f32.mrf.mxu0
        %v2268 = vadd.f32 0.0, %v2267
        %2269 = vdwg.mxu0
        %v2270 = vadd.f32 %v1806, %v2102
        %v2271 = vadd.f32 %v1807, %v2191
        %v2272 = vadd.f32 %v1808, %v2104
        %v2273 = vadd.f32 %v1809, %v2193
        %v2274 = vadd.f32 %v1810, %v2107
        %v2275 = vadd.f32 %v1811, %v2196
        %v2276 = vadd.f32 %v1812, %v2109
        %v2277 = vadd.f32 %v1813, %v2198
        %v2278 = vadd.f32 %v1814, %v2112
        %v2279 = vadd.f32 %v1815, %v2201
        %v2280 = vadd.f32 %v1816, %v2114
        %v2281 = vadd.f32 %v1817, %v2203
        %v2282 = vadd.f32 %v1818, %v2117
        %v2283 = vadd.f32 %v1819, %v2206
        %v2284 = vadd.f32 %v1820, %v2119
        %v2285 = vadd.f32 %v1821, %v2208
        %v2286 = vadd.f32 %v1822, %v2122
        %v2287 = vadd.f32 %v1823, %v2211
        %v2288 = vadd.f32 %v1824, %v2124
        %v2289 = vadd.f32 %v1825, %v2213
        %v2290 = vadd.f32 %v1826, %v2127
        %v2291 = vadd.f32 %v1827, %v2216
        %v2292 = vadd.f32 %v1828, %v2129
        %v2293 = vadd.f32 %v1829, %v2218
        %v2294 = vadd.f32 %v1830, %v2132
        %v2295 = vadd.f32 %v1831, %v2221
        %v2296 = vadd.f32 %v1832, %v2134
        %v2297 = vadd.f32 %v1833, %v2223
        %v2298 = vadd.f32 %v1834, %v2137
        %v2299 = vadd.f32 %v1835, %v2226
        %v2300 = vadd.f32 %v1836, %v2139
        %v2301 = vadd.f32 %v1837, %v2228
        %v2302 = vadd.f32 %v1838, %v2142
        %v2303 = vadd.f32 %v1839, %v2231
        %v2304 = vadd.f32 %v1840, %v2144
        %v2305 = vadd.f32 %v1841, %v2233
        %v2306 = vadd.f32 %v1842, %v2147
        %v2307 = vadd.f32 %v1843, %v2236
        %v2308 = vadd.f32 %v1844, %v2149
        %v2309 = vadd.f32 %v1845, %v2238
        %v2310 = vadd.f32 %v1846, %v2152
        %v2311 = vadd.f32 %v1847, %v2241
        %v2312 = vadd.f32 %v1848, %v2154
        %v2313 = vadd.f32 %v1849, %v2243
        %v2314 = vadd.f32 %v1850, %v2157
        %v2315 = vadd.f32 %v1851, %v2246
        %v2316 = vadd.f32 %v1852, %v2159
        %v2317 = vadd.f32 %v1853, %v2248
        %v2318 = vadd.f32 %v1854, %v2162
        %v2319 = vadd.f32 %v1855, %v2251
        %v2320 = vadd.f32 %v1856, %v2164
        %v2321 = vadd.f32 %v1857, %v2253
        %v2322 = vadd.f32 %v1858, %v2167
        %v2323 = vadd.f32 %v1859, %v2256
        %v2324 = vadd.f32 %v1860, %v2169
        %v2325 = vadd.f32 %v1861, %v2258
        %v2326 = vadd.f32 %v1862, %v2172
        %v2327 = vadd.f32 %v1863, %v2261
        %v2328 = vadd.f32 %v1864, %v2174
        %v2329 = vadd.f32 %v1865, %v2263
        %v2330 = vadd.f32 %v1866, %v2177
        %v2331 = vadd.f32 %v1867, %v2266
        %v2332 = vadd.f32 %v1868, %v2179
        %v2333 = vadd.f32 %v1869, %v2268
        %v2334 = vld [vmem:[%s1870] sm:$0xf]
        %v2335 = vld [vmem:[%s1870 + $0x4] sm:$0xf]
        %v2336 = vld [vmem:[%s1870 + $0x8] sm:$0x1]
        %v2337 = vld [vmem:[%s1870 + $0xc] sm:$0xf]
        %v2338 = vld [vmem:[%s1870 + $0x10] sm:$0xf]
        %v2339 = vld [vmem:[%s1870 + $0x14] sm:$0x1]
        %v2340 = vld [vmem:[%s1870 + $0x18] sm:$0xf]
        %v2341 = vld [vmem:[%s1870 + $0x1c] sm:$0xf]
        %v2342 = vld [vmem:[%s1870 + $0x20] sm:$0x1]
        %v2343 = vld [vmem:[%s1870 + $0x24] sm:$0xf]
        %v2344 = vld [vmem:[%s1870 + $0x28] sm:$0xf]
        %v2345 = vld [vmem:[%s1870 + $0x2c] sm:$0x1]
        %v2346 = vld [vmem:[%s1870 + $0x30] sm:$0xf]
        %v2347 = vld [vmem:[%s1870 + $0x34] sm:$0xf]
        %v2348 = vld [vmem:[%s1870 + $0x38] sm:$0x1]
        %v2349 = vld [vmem:[%s1870 + $0x3c] sm:$0xf]
        %v2350 = vld [vmem:[%s1870 + $0x40] sm:$0xf]
        %v2351 = vld [vmem:[%s1870 + $0x44] sm:$0x1]
        %v2352 = vld [vmem:[%s1870 + $0x48] sm:$0xf]
        %v2353 = vld [vmem:[%s1870 + $0x4c] sm:$0xf]
        %v2354 = vld [vmem:[%s1870 + $0x50] sm:$0x1]
        %v2355 = vld [vmem:[%s1870 + $0x54] sm:$0xf]
        %v2356 = vld [vmem:[%s1870 + $0x58] sm:$0xf]
        %v2357 = vld [vmem:[%s1870 + $0x5c] sm:$0x1]
        %v2358 = vld [vmem:[%s1870 + $0x60] sm:$0xf]
        %v2359 = vld [vmem:[%s1870 + $0x64] sm:$0xf]
        %v2360 = vld [vmem:[%s1870 + $0x68] sm:$0x1]
        %v2361 = vld [vmem:[%s1870 + $0x6c] sm:$0xf]
        %v2362 = vld [vmem:[%s1870 + $0x70] sm:$0xf]
        %v2363 = vld [vmem:[%s1870 + $0x74] sm:$0x1]
        %v2364 = vld [vmem:[%s1870 + $0x78] sm:$0xf]
        %v2365 = vld [vmem:[%s1870 + $0x7c] sm:$0xf]
        %v2366 = vld [vmem:[%s1870 + $0x80] sm:$0x1]
        %v2367 = vld [vmem:[%s1870 + $0x84] sm:$0xf]
        %v2368 = vld [vmem:[%s1870 + $0x88] sm:$0xf]
        %v2369 = vld [vmem:[%s1870 + $0x8c] sm:$0x1]
        %v2370 = vld [vmem:[%s1870 + $0x90] sm:$0xf]
        %v2371 = vld [vmem:[%s1870 + $0x94] sm:$0xf]
        %v2372 = vld [vmem:[%s1870 + $0x98] sm:$0x1]
        %v2373 = vld [vmem:[%s1870 + $0x9c] sm:$0xf]
        %v2374 = vld [vmem:[%s1870 + $0xa0] sm:$0xf]
        %v2375 = vld [vmem:[%s1870 + $0xa4] sm:$0x1]
        %v2376 = vld [vmem:[%s1870 + $0xa8] sm:$0xf]
        %v2377 = vld [vmem:[%s1870 + $0xac] sm:$0xf]
        %v2378 = vld [vmem:[%s1870 + $0xb0] sm:$0x1]
        %v2379 = vld [vmem:[%s1870 + $0xb4] sm:$0xf]
        %v2380 = vld [vmem:[%s1870 + $0xb8] sm:$0xf]
        %v2381 = vld [vmem:[%s1870 + $0xbc] sm:$0x1]
        %v2383 = vshrl.u32 %v2334, 16
        %v2385 = vrot.slane %v2383, 4
        %v2386 = vshll.u32 %v2334, 16
        %v2388 = vrot.slane %v2386, 5
        %v2389 = vor.u32 %v2385, %v2388
        %v2390 = vrot.slane %v2389, 4
        %v2392 = vshll.u32 %v2335, 16
        %v2394 = vrot.slane %v2392, 5
        %v2395 = vsel %vm229, %v2390, %v2394
        %v2396 = vshrl.u32 %v2335, 16
        %v2398 = vrot.slane %v2396, 4
        %v2399 = vor.u32 %v2398, %v2394
        %v2400 = vrot.slane %v2399, 4
        %v2402 = vshll.u32 %v2336, 16
        %v2404 = vrot.slane %v2402, 5
        %v2405 = vsel %vm229, %v2400, %v2404
        %v2407 = vshrl.u32 %v2337, 16
        %v2409 = vrot.slane %v2407, 4
        %v2410 = vshll.u32 %v2337, 16
        %v2412 = vrot.slane %v2410, 5
        %v2413 = vor.u32 %v2409, %v2412
        %v2414 = vrot.slane %v2413, 4
        %v2416 = vshll.u32 %v2338, 16
        %v2418 = vrot.slane %v2416, 5
        %v2419 = vsel %vm229, %v2414, %v2418
        %v2420 = vshrl.u32 %v2338, 16
        %v2422 = vrot.slane %v2420, 4
        %v2423 = vor.u32 %v2422, %v2418
        %v2424 = vrot.slane %v2423, 4
        %v2426 = vshll.u32 %v2339, 16
        %v2428 = vrot.slane %v2426, 5
        %v2429 = vsel %vm229, %v2424, %v2428
        %v2431 = vshrl.u32 %v2340, 16
        %v2433 = vrot.slane %v2431, 4
        %v2434 = vshll.u32 %v2340, 16
        %v2436 = vrot.slane %v2434, 5
        %v2437 = vor.u32 %v2433, %v2436
        %v2438 = vrot.slane %v2437, 4
        %v2440 = vshll.u32 %v2341, 16
        %v2442 = vrot.slane %v2440, 5
        %v2443 = vsel %vm229, %v2438, %v2442
        %v2444 = vshrl.u32 %v2341, 16
        %v2446 = vrot.slane %v2444, 4
        %v2447 = vor.u32 %v2446, %v2442
        %v2448 = vrot.slane %v2447, 4
        %v2450 = vshll.u32 %v2342, 16
        %v2452 = vrot.slane %v2450, 5
        %v2453 = vsel %vm229, %v2448, %v2452
        %v2455 = vshrl.u32 %v2343, 16
        %v2457 = vrot.slane %v2455, 4
        %v2458 = vshll.u32 %v2343, 16
        %v2460 = vrot.slane %v2458, 5
        %v2461 = vor.u32 %v2457, %v2460
        %v2462 = vrot.slane %v2461, 4
        %v2464 = vshll.u32 %v2344, 16
        %v2466 = vrot.slane %v2464, 5
        %v2467 = vsel %vm229, %v2462, %v2466
        %v2468 = vshrl.u32 %v2344, 16
        %v2470 = vrot.slane %v2468, 4
        %v2471 = vor.u32 %v2470, %v2466
        %v2472 = vrot.slane %v2471, 4
        %v2474 = vshll.u32 %v2345, 16
        %v2476 = vrot.slane %v2474, 5
        %v2477 = vsel %vm229, %v2472, %v2476
        %v2479 = vshrl.u32 %v2346, 16
        %v2481 = vrot.slane %v2479, 4
        %v2482 = vshll.u32 %v2346, 16
        %v2484 = vrot.slane %v2482, 5
        %v2485 = vor.u32 %v2481, %v2484
        %v2486 = vrot.slane %v2485, 4
        %v2488 = vshll.u32 %v2347, 16
        %v2490 = vrot.slane %v2488, 5
        %v2491 = vsel %vm229, %v2486, %v2490
        %v2492 = vshrl.u32 %v2347, 16
        %v2494 = vrot.slane %v2492, 4
        %v2495 = vor.u32 %v2494, %v2490
        %v2496 = vrot.slane %v2495, 4
        %v2498 = vshll.u32 %v2348, 16
        %v2500 = vrot.slane %v2498, 5
        %v2501 = vsel %vm229, %v2496, %v2500
        %v2503 = vshrl.u32 %v2349, 16
        %v2505 = vrot.slane %v2503, 4
        %v2506 = vshll.u32 %v2349, 16
        %v2508 = vrot.slane %v2506, 5
        %v2509 = vor.u32 %v2505, %v2508
        %v2510 = vrot.slane %v2509, 4
        %v2512 = vshll.u32 %v2350, 16
        %v2514 = vrot.slane %v2512, 5
        %v2515 = vsel %vm229, %v2510, %v2514
        %v2516 = vshrl.u32 %v2350, 16
        %v2518 = vrot.slane %v2516, 4
        %v2519 = vor.u32 %v2518, %v2514
        %v2520 = vrot.slane %v2519, 4
        %v2522 = vshll.u32 %v2351, 16
        %v2524 = vrot.slane %v2522, 5
        %v2525 = vsel %vm229, %v2520, %v2524
        %v2527 = vshrl.u32 %v2352, 16
        %v2529 = vrot.slane %v2527, 4
        %v2530 = vshll.u32 %v2352, 16
        %v2532 = vrot.slane %v2530, 5
        %v2533 = vor.u32 %v2529, %v2532
        %v2534 = vrot.slane %v2533, 4
        %v2536 = vshll.u32 %v2353, 16
        %v2538 = vrot.slane %v2536, 5
        %v2539 = vsel %vm229, %v2534, %v2538
        %v2540 = vshrl.u32 %v2353, 16
        %v2542 = vrot.slane %v2540, 4
        %v2543 = vor.u32 %v2542, %v2538
        %v2544 = vrot.slane %v2543, 4
        %v2546 = vshll.u32 %v2354, 16
        %v2548 = vrot.slane %v2546, 5
        %v2549 = vsel %vm229, %v2544, %v2548
        %v2551 = vshrl.u32 %v2355, 16
        %v2553 = vrot.slane %v2551, 4
        %v2554 = vshll.u32 %v2355, 16
        %v2556 = vrot.slane %v2554, 5
        %v2557 = vor.u32 %v2553, %v2556
        %v2558 = vrot.slane %v2557, 4
        %v2560 = vshll.u32 %v2356, 16
        %v2562 = vrot.slane %v2560, 5
        %v2563 = vsel %vm229, %v2558, %v2562
        %v2564 = vshrl.u32 %v2356, 16
        %v2566 = vrot.slane %v2564, 4
        %v2567 = vor.u32 %v2566, %v2562
        %v2568 = vrot.slane %v2567, 4
        %v2570 = vshll.u32 %v2357, 16
        %v2572 = vrot.slane %v2570, 5
        %v2573 = vsel %vm229, %v2568, %v2572
        %v2575 = vshrl.u32 %v2358, 16
        %v2577 = vrot.slane %v2575, 4
        %v2578 = vshll.u32 %v2358, 16
        %v2580 = vrot.slane %v2578, 5
        %v2581 = vor.u32 %v2577, %v2580
        %v2582 = vrot.slane %v2581, 4
        %v2584 = vshll.u32 %v2359, 16
        %v2586 = vrot.slane %v2584, 5
        %v2587 = vsel %vm229, %v2582, %v2586
        %v2588 = vshrl.u32 %v2359, 16
        %v2590 = vrot.slane %v2588, 4
        %v2591 = vor.u32 %v2590, %v2586
        %v2592 = vrot.slane %v2591, 4
        %v2594 = vshll.u32 %v2360, 16
        %v2596 = vrot.slane %v2594, 5
        %v2597 = vsel %vm229, %v2592, %v2596
        %v2599 = vshrl.u32 %v2361, 16
        %v2601 = vrot.slane %v2599, 4
        %v2602 = vshll.u32 %v2361, 16
        %v2604 = vrot.slane %v2602, 5
        %v2605 = vor.u32 %v2601, %v2604
        %v2606 = vrot.slane %v2605, 4
        %v2608 = vshll.u32 %v2362, 16
        %v2610 = vrot.slane %v2608, 5
        %v2611 = vsel %vm229, %v2606, %v2610
        %v2612 = vshrl.u32 %v2362, 16
        %v2614 = vrot.slane %v2612, 4
        %v2615 = vor.u32 %v2614, %v2610
        %v2616 = vrot.slane %v2615, 4
        %v2618 = vshll.u32 %v2363, 16
        %v2620 = vrot.slane %v2618, 5
        %v2621 = vsel %vm229, %v2616, %v2620
        %v2623 = vshrl.u32 %v2364, 16
        %v2625 = vrot.slane %v2623, 4
        %v2626 = vshll.u32 %v2364, 16
        %v2628 = vrot.slane %v2626, 5
        %v2629 = vor.u32 %v2625, %v2628
        %v2630 = vrot.slane %v2629, 4
        %v2632 = vshll.u32 %v2365, 16
        %v2634 = vrot.slane %v2632, 5
        %v2635 = vsel %vm229, %v2630, %v2634
        %v2636 = vshrl.u32 %v2365, 16
        %v2638 = vrot.slane %v2636, 4
        %v2639 = vor.u32 %v2638, %v2634
        %v2640 = vrot.slane %v2639, 4
        %v2642 = vshll.u32 %v2366, 16
        %v2644 = vrot.slane %v2642, 5
        %v2645 = vsel %vm229, %v2640, %v2644
        %v2647 = vshrl.u32 %v2367, 16
        %v2649 = vrot.slane %v2647, 4
        %v2650 = vshll.u32 %v2367, 16
        %v2652 = vrot.slane %v2650, 5
        %v2653 = vor.u32 %v2649, %v2652
        %v2654 = vrot.slane %v2653, 4
        %v2656 = vshll.u32 %v2368, 16
        %v2658 = vrot.slane %v2656, 5
        %v2659 = vsel %vm229, %v2654, %v2658
        %v2660 = vshrl.u32 %v2368, 16
        %v2662 = vrot.slane %v2660, 4
        %v2663 = vor.u32 %v2662, %v2658
        %v2664 = vrot.slane %v2663, 4
        %v2666 = vshll.u32 %v2369, 16
        %v2668 = vrot.slane %v2666, 5
        %v2669 = vsel %vm229, %v2664, %v2668
        %v2671 = vshrl.u32 %v2370, 16
        %v2673 = vrot.slane %v2671, 4
        %v2674 = vshll.u32 %v2370, 16
        %v2676 = vrot.slane %v2674, 5
        %v2677 = vor.u32 %v2673, %v2676
        %v2678 = vrot.slane %v2677, 4
        %v2680 = vshll.u32 %v2371, 16
        %v2682 = vrot.slane %v2680, 5
        %v2683 = vsel %vm229, %v2678, %v2682
        %v2684 = vshrl.u32 %v2371, 16
        %v2686 = vrot.slane %v2684, 4
        %v2687 = vor.u32 %v2686, %v2682
        %v2688 = vrot.slane %v2687, 4
        %v2690 = vshll.u32 %v2372, 16
        %v2692 = vrot.slane %v2690, 5
        %v2693 = vsel %vm229, %v2688, %v2692
        %v2695 = vshrl.u32 %v2373, 16
        %v2697 = vrot.slane %v2695, 4
        %v2698 = vshll.u32 %v2373, 16
        %v2700 = vrot.slane %v2698, 5
        %v2701 = vor.u32 %v2697, %v2700
        %v2702 = vrot.slane %v2701, 4
        %v2704 = vshll.u32 %v2374, 16
        %v2706 = vrot.slane %v2704, 5
        %v2707 = vsel %vm229, %v2702, %v2706
        %v2708 = vshrl.u32 %v2374, 16
        %v2710 = vrot.slane %v2708, 4
        %v2711 = vor.u32 %v2710, %v2706
        %v2712 = vrot.slane %v2711, 4
        %v2714 = vshll.u32 %v2375, 16
        %v2716 = vrot.slane %v2714, 5
        %v2717 = vsel %vm229, %v2712, %v2716
        %v2719 = vshrl.u32 %v2376, 16
        %v2721 = vrot.slane %v2719, 4
        %v2722 = vshll.u32 %v2376, 16
        %v2724 = vrot.slane %v2722, 5
        %v2725 = vor.u32 %v2721, %v2724
        %v2726 = vrot.slane %v2725, 4
        %v2728 = vshll.u32 %v2377, 16
        %v2730 = vrot.slane %v2728, 5
        %v2731 = vsel %vm229, %v2726, %v2730
        %v2732 = vshrl.u32 %v2377, 16
        %v2734 = vrot.slane %v2732, 4
        %v2735 = vor.u32 %v2734, %v2730
        %v2736 = vrot.slane %v2735, 4
        %v2738 = vshll.u32 %v2378, 16
        %v2740 = vrot.slane %v2738, 5
        %v2741 = vsel %vm229, %v2736, %v2740
        %v2743 = vshrl.u32 %v2379, 16
        %v2745 = vrot.slane %v2743, 4
        %v2746 = vshll.u32 %v2379, 16
        %v2748 = vrot.slane %v2746, 5
        %v2749 = vor.u32 %v2745, %v2748
        %v2750 = vrot.slane %v2749, 4
        %v2752 = vshll.u32 %v2380, 16
        %v2754 = vrot.slane %v2752, 5
        %v2755 = vsel %vm229, %v2750, %v2754
        %v2756 = vshrl.u32 %v2380, 16
        %v2758 = vrot.slane %v2756, 4
        %v2759 = vor.u32 %v2758, %v2754
        %v2760 = vrot.slane %v2759, 4
        %v2762 = vshll.u32 %v2381, 16
        %v2764 = vrot.slane %v2762, 5
        %v2765 = vsel %vm229, %v2760, %v2764
        %s2766 = scalar_lea.vmem %s1, 288
        %v2767 = vld [vmem:[%s2766] sm:$0xff]
        %v2768 = vld [vmem:[%s2766 + $0x8] sm:$0xff]
        %v2769 = vld [vmem:[%s2766 + $0x10] sm:$0xff]
        %v2770 = vld [vmem:[%s2766 + $0x18] sm:$0xff]
        %v2771 = vld [vmem:[%s2766 + $0x20] sm:$0xff]
        %v2772 = vld [vmem:[%s2766 + $0x28] sm:$0xff]
        %v2773 = vld [vmem:[%s2766 + $0x30] sm:$0xff]
        %v2774 = vld [vmem:[%s2766 + $0x38] sm:$0xff]
        %v2775 = vld [vmem:[%s2766 + $0x40] sm:$0xff]
        %v2776 = vunpack.c.l.b16 %v2395
        %v2777 = vunpack.c.l.b16 %v2405
        %v2778 = vunpack.c.l.b16 %v2419
        %v2779 = vunpack.c.l.b16 %v2429
        %v2780 = vunpack.c.l.b16 %v2443
        %v2781 = vunpack.c.l.b16 %v2453
        %v2782 = vunpack.c.l.b16 %v2467
        %v2783 = vunpack.c.l.b16 %v2477
        %v2784 = vunpack.c.l.b16 %v2491
        %v2785 = vunpack.c.l.b16 %v2501
        %v2786 = vunpack.c.l.b16 %v2515
        %v2787 = vunpack.c.l.b16 %v2525
        %v2788 = vunpack.c.l.b16 %v2539
        %v2789 = vunpack.c.l.b16 %v2549
        %v2790 = vunpack.c.l.b16 %v2563
        %v2791 = vunpack.c.l.b16 %v2573
        %v2792 = vunpack.c.l.b16 %v2587
        %v2793 = vunpack.c.l.b16 %v2597
        %v2794 = vunpack.c.l.b16 %v2611
        %v2795 = vunpack.c.l.b16 %v2621
        %v2796 = vunpack.c.l.b16 %v2635
        %v2797 = vunpack.c.l.b16 %v2645
        %v2798 = vunpack.c.l.b16 %v2659
        %v2799 = vunpack.c.l.b16 %v2669
        %v2800 = vunpack.c.l.b16 %v2683
        %v2801 = vunpack.c.l.b16 %v2693
        %v2802 = vunpack.c.l.b16 %v2707
        %v2803 = vunpack.c.l.b16 %v2717
        %v2804 = vunpack.c.l.b16 %v2731
        %v2805 = vunpack.c.l.b16 %v2741
        %v2806 = vunpack.c.l.b16 %v2755
        %v2807 = vunpack.c.l.b16 %v2765
        %v2808 = vpack.c.b16 %v2777, %v2776
        %v2809 = vpack.c.b16 %v2779, %v2778
        %v2810 = vpack.c.b16 %v2781, %v2780
        %v2811 = vpack.c.b16 %v2783, %v2782
        %v2812 = vpack.c.b16 %v2785, %v2784
        %v2813 = vpack.c.b16 %v2787, %v2786
        %v2814 = vpack.c.b16 %v2789, %v2788
        %v2815 = vpack.c.b16 %v2791, %v2790
        %v2816 = vpack.c.b16 %v2793, %v2792
        %v2817 = vpack.c.b16 %v2795, %v2794
        %v2818 = vpack.c.b16 %v2797, %v2796
        %v2819 = vpack.c.b16 %v2799, %v2798
        %v2820 = vpack.c.b16 %v2801, %v2800
        %v2821 = vpack.c.b16 %v2803, %v2802
        %v2822 = vpack.c.b16 %v2805, %v2804
        %v2823 = vpack.c.b16 %v2807, %v2806
        %v2833 = vunpack.c.l.b16 %v2767
        %v2834 = vunpack.c.h.b16 %v2767
        %v2835 = vunpack.c.l.b16 %v2768
        %v2836 = vunpack.c.h.b16 %v2768
        %v2837 = vunpack.c.l.b16 %v2769
        %v2838 = vunpack.c.h.b16 %v2769
        %v2839 = vunpack.c.l.b16 %v2770
        %v2840 = vunpack.c.h.b16 %v2770
        %v2841 = vunpack.c.l.b16 %v2771
        %v2842 = vunpack.c.h.b16 %v2771
        %v2843 = vunpack.c.l.b16 %v2772
        %v2844 = vunpack.c.h.b16 %v2772
        %v2845 = vunpack.c.l.b16 %v2773
        %v2846 = vunpack.c.h.b16 %v2773
        %v2847 = vunpack.c.l.b16 %v2774
        %v2848 = vunpack.c.h.b16 %v2774
        %v2849 = vunpack.c.l.b16 %v2775
        %v2850 = vunpack.c.h.b16 %v2775
        %v2851 = vpack.c.b16 %v2835, %v2833
        %v2852 = vpack.c.b16 %v2836, %v2834
        %v2853 = vpack.c.b16 %v2839, %v2837
        %v2854 = vpack.c.b16 %v2840, %v2838
        %v2855 = vpack.c.b16 %v2843, %v2841
        %v2856 = vpack.c.b16 %v2844, %v2842
        %v2857 = vpack.c.b16 %v2847, %v2845
        %v2858 = vpack.c.b16 %v2848, %v2846
        %v2859 = vpack.c.b16 %v2849, %v2849
        %v2860 = vpack.c.b16 %v2850, %v2850
        %v2870 = vsel %vm717, %v2808, 0
        %v2873 = vsel %vm717, %v2809, 0
        %v2876 = vsel %vm717, %v2810, 0
        %v2879 = vsel %vm717, %v2811, 0
        %v2882 = vsel %vm717, %v2812, 0
        %v2885 = vsel %vm717, %v2813, 0
        %v2888 = vsel %vm717, %v2814, 0
        %v2891 = vsel %vm717, %v2815, 0
        %v2894 = vsel %vm717, %v2816, 0
        %v2897 = vsel %vm717, %v2817, 0
        %v2900 = vsel %vm717, %v2818, 0
        %v2903 = vsel %vm717, %v2819, 0
        %v2906 = vsel %vm717, %v2820, 0
        %v2909 = vsel %vm717, %v2821, 0
        %v2912 = vsel %vm717, %v2822, 0
        %v2915 = vsel %vm717, %v2823, 0
        %v2918 = vsel %vm766, %v2859, 0
        %v2921 = vsel %vm766, %v2860, 0
        %2923 = vmatpush.bf16.msra.mxu0 0
        %2924 = vmatpush.bf16.msra.mxu0 0
        %2925 = vmatpush.bf16.msra.mxu0 0
        %2926 = vmatpush.bf16.msra.mxu0 %v2918
        %2927 = vmatpush.bf16.msra.mxu0 %v2857
        %2928 = vmatpush.bf16.msra.mxu0 %v2855
        %2929 = vmatpush.bf16.msra.mxu0 %v2853
        %2930 = vmatpush.bf16.msra.mxu0 %v2851
        %2931 = vmatmul.bf16.gmra.mxu0 %v2870
        %v2932 = vpop.f32.mrf.mxu0
        %v2933 = vadd.f32 0.0, %v2932
        %v2934 = vpop.f32.mrf.mxu0
        %v2935 = vadd.f32 0.0, %v2934
        %2936 = vmatmul.bf16.gmra.mxu0 %v2873
        %v2937 = vpop.f32.mrf.mxu0
        %v2938 = vadd.f32 0.0, %v2937
        %v2939 = vpop.f32.mrf.mxu0
        %v2940 = vadd.f32 0.0, %v2939
        %2941 = vmatmul.bf16.gmra.mxu0 %v2876
        %v2942 = vpop.f32.mrf.mxu0
        %v2943 = vadd.f32 0.0, %v2942
        %v2944 = vpop.f32.mrf.mxu0
        %v2945 = vadd.f32 0.0, %v2944
        %2946 = vmatmul.bf16.gmra.mxu0 %v2879
        %v2947 = vpop.f32.mrf.mxu0
        %v2948 = vadd.f32 0.0, %v2947
        %v2949 = vpop.f32.mrf.mxu0
        %v2950 = vadd.f32 0.0, %v2949
        %2951 = vmatmul.bf16.gmra.mxu0 %v2882
        %v2952 = vpop.f32.mrf.mxu0
        %v2953 = vadd.f32 0.0, %v2952
        %v2954 = vpop.f32.mrf.mxu0
        %v2955 = vadd.f32 0.0, %v2954
        %2956 = vmatmul.bf16.gmra.mxu0 %v2885
        %v2957 = vpop.f32.mrf.mxu0
        %v2958 = vadd.f32 0.0, %v2957
        %v2959 = vpop.f32.mrf.mxu0
        %v2960 = vadd.f32 0.0, %v2959
        %2961 = vmatmul.bf16.gmra.mxu0 %v2888
        %v2962 = vpop.f32.mrf.mxu0
        %v2963 = vadd.f32 0.0, %v2962
        %v2964 = vpop.f32.mrf.mxu0
        %v2965 = vadd.f32 0.0, %v2964
        %2966 = vmatmul.bf16.gmra.mxu0 %v2891
        %v2967 = vpop.f32.mrf.mxu0
        %v2968 = vadd.f32 0.0, %v2967
        %v2969 = vpop.f32.mrf.mxu0
        %v2970 = vadd.f32 0.0, %v2969
        %2971 = vmatmul.bf16.gmra.mxu0 %v2894
        %v2972 = vpop.f32.mrf.mxu0
        %v2973 = vadd.f32 0.0, %v2972
        %v2974 = vpop.f32.mrf.mxu0
        %v2975 = vadd.f32 0.0, %v2974
        %2976 = vmatmul.bf16.gmra.mxu0 %v2897
        %v2977 = vpop.f32.mrf.mxu0
        %v2978 = vadd.f32 0.0, %v2977
        %v2979 = vpop.f32.mrf.mxu0
        %v2980 = vadd.f32 0.0, %v2979
        %2981 = vmatmul.bf16.gmra.mxu0 %v2900
        %v2982 = vpop.f32.mrf.mxu0
        %v2983 = vadd.f32 0.0, %v2982
        %v2984 = vpop.f32.mrf.mxu0
        %v2985 = vadd.f32 0.0, %v2984
        %2986 = vmatmul.bf16.gmra.mxu0 %v2903
        %v2987 = vpop.f32.mrf.mxu0
        %v2988 = vadd.f32 0.0, %v2987
        %v2989 = vpop.f32.mrf.mxu0
        %v2990 = vadd.f32 0.0, %v2989
        %2991 = vmatmul.bf16.gmra.mxu0 %v2906
        %v2992 = vpop.f32.mrf.mxu0
        %v2993 = vadd.f32 0.0, %v2992
        %v2994 = vpop.f32.mrf.mxu0
        %v2995 = vadd.f32 0.0, %v2994
        %2996 = vmatmul.bf16.gmra.mxu0 %v2909
        %v2997 = vpop.f32.mrf.mxu0
        %v2998 = vadd.f32 0.0, %v2997
        %v2999 = vpop.f32.mrf.mxu0
        %v3000 = vadd.f32 0.0, %v2999
        %3001 = vmatmul.bf16.gmra.mxu0 %v2912
        %v3002 = vpop.f32.mrf.mxu0
        %v3003 = vadd.f32 0.0, %v3002
        %v3004 = vpop.f32.mrf.mxu0
        %v3005 = vadd.f32 0.0, %v3004
        %3006 = vmatmul.bf16.gmra.mxu0 %v2915
        %v3007 = vpop.f32.mrf.mxu0
        %v3008 = vadd.f32 0.0, %v3007
        %v3009 = vpop.f32.mrf.mxu0
        %v3010 = vadd.f32 0.0, %v3009
        %3011 = vdwg.mxu0
        %3012 = vmatpush.bf16.msra.mxu0 0
        %3013 = vmatpush.bf16.msra.mxu0 0
        %3014 = vmatpush.bf16.msra.mxu0 0
        %3015 = vmatpush.bf16.msra.mxu0 %v2921
        %3016 = vmatpush.bf16.msra.mxu0 %v2858
        %3017 = vmatpush.bf16.msra.mxu0 %v2856
        %3018 = vmatpush.bf16.msra.mxu0 %v2854
        %3019 = vmatpush.bf16.msra.mxu0 %v2852
        %3020 = vmatmul.bf16.gmra.mxu0 %v2870
        %v3021 = vpop.f32.mrf.mxu0
        %v3022 = vadd.f32 0.0, %v3021
        %v3023 = vpop.f32.mrf.mxu0
        %v3024 = vadd.f32 0.0, %v3023
        %3025 = vmatmul.bf16.gmra.mxu0 %v2873
        %v3026 = vpop.f32.mrf.mxu0
        %v3027 = vadd.f32 0.0, %v3026
        %v3028 = vpop.f32.mrf.mxu0
        %v3029 = vadd.f32 0.0, %v3028
        %3030 = vmatmul.bf16.gmra.mxu0 %v2876
        %v3031 = vpop.f32.mrf.mxu0
        %v3032 = vadd.f32 0.0, %v3031
        %v3033 = vpop.f32.mrf.mxu0
        %v3034 = vadd.f32 0.0, %v3033
        %3035 = vmatmul.bf16.gmra.mxu0 %v2879
        %v3036 = vpop.f32.mrf.mxu0
        %v3037 = vadd.f32 0.0, %v3036
        %v3038 = vpop.f32.mrf.mxu0
        %v3039 = vadd.f32 0.0, %v3038
        %3040 = vmatmul.bf16.gmra.mxu0 %v2882
        %v3041 = vpop.f32.mrf.mxu0
        %v3042 = vadd.f32 0.0, %v3041
        %v3043 = vpop.f32.mrf.mxu0
        %v3044 = vadd.f32 0.0, %v3043
        %3045 = vmatmul.bf16.gmra.mxu0 %v2885
        %v3046 = vpop.f32.mrf.mxu0
        %v3047 = vadd.f32 0.0, %v3046
        %v3048 = vpop.f32.mrf.mxu0
        %v3049 = vadd.f32 0.0, %v3048
        %3050 = vmatmul.bf16.gmra.mxu0 %v2888
        %v3051 = vpop.f32.mrf.mxu0
        %v3052 = vadd.f32 0.0, %v3051
        %v3053 = vpop.f32.mrf.mxu0
        %v3054 = vadd.f32 0.0, %v3053
        %3055 = vmatmul.bf16.gmra.mxu0 %v2891
        %v3056 = vpop.f32.mrf.mxu0
        %v3057 = vadd.f32 0.0, %v3056
        %v3058 = vpop.f32.mrf.mxu0
        %v3059 = vadd.f32 0.0, %v3058
        %3060 = vmatmul.bf16.gmra.mxu0 %v2894
        %v3061 = vpop.f32.mrf.mxu0
        %v3062 = vadd.f32 0.0, %v3061
        %v3063 = vpop.f32.mrf.mxu0
        %v3064 = vadd.f32 0.0, %v3063
        %3065 = vmatmul.bf16.gmra.mxu0 %v2897
        %v3066 = vpop.f32.mrf.mxu0
        %v3067 = vadd.f32 0.0, %v3066
        %v3068 = vpop.f32.mrf.mxu0
        %v3069 = vadd.f32 0.0, %v3068
        %3070 = vmatmul.bf16.gmra.mxu0 %v2900
        %v3071 = vpop.f32.mrf.mxu0
        %v3072 = vadd.f32 0.0, %v3071
        %v3073 = vpop.f32.mrf.mxu0
        %v3074 = vadd.f32 0.0, %v3073
        %3075 = vmatmul.bf16.gmra.mxu0 %v2903
        %v3076 = vpop.f32.mrf.mxu0
        %v3077 = vadd.f32 0.0, %v3076
        %v3078 = vpop.f32.mrf.mxu0
        %v3079 = vadd.f32 0.0, %v3078
        %3080 = vmatmul.bf16.gmra.mxu0 %v2906
        %v3081 = vpop.f32.mrf.mxu0
        %v3082 = vadd.f32 0.0, %v3081
        %v3083 = vpop.f32.mrf.mxu0
        %v3084 = vadd.f32 0.0, %v3083
        %3085 = vmatmul.bf16.gmra.mxu0 %v2909
        %v3086 = vpop.f32.mrf.mxu0
        %v3087 = vadd.f32 0.0, %v3086
        %v3088 = vpop.f32.mrf.mxu0
        %v3089 = vadd.f32 0.0, %v3088
        %3090 = vmatmul.bf16.gmra.mxu0 %v2912
        %v3091 = vpop.f32.mrf.mxu0
        %v3092 = vadd.f32 0.0, %v3091
        %v3093 = vpop.f32.mrf.mxu0
        %v3094 = vadd.f32 0.0, %v3093
        %3095 = vmatmul.bf16.gmra.mxu0 %v2915
        %v3096 = vpop.f32.mrf.mxu0
        %v3097 = vadd.f32 0.0, %v3096
        %v3098 = vpop.f32.mrf.mxu0
        %v3099 = vadd.f32 0.0, %v3098
        %3100 = vdwg.mxu0
        %v3101 = vadd.f32 %v2270, %v2933
        %v3102 = vadd.f32 %v2271, %v3022
        %v3103 = vadd.f32 %v2272, %v2935
        %v3104 = vadd.f32 %v2273, %v3024
        %v3105 = vadd.f32 %v2274, %v2938
        %v3106 = vadd.f32 %v2275, %v3027
        %v3107 = vadd.f32 %v2276, %v2940
        %v3108 = vadd.f32 %v2277, %v3029
        %v3109 = vadd.f32 %v2278, %v2943
        %v3110 = vadd.f32 %v2279, %v3032
        %v3111 = vadd.f32 %v2280, %v2945
        %v3112 = vadd.f32 %v2281, %v3034
        %v3113 = vadd.f32 %v2282, %v2948
        %v3114 = vadd.f32 %v2283, %v3037
        %v3115 = vadd.f32 %v2284, %v2950
        %v3116 = vadd.f32 %v2285, %v3039
        %v3117 = vadd.f32 %v2286, %v2953
        %v3118 = vadd.f32 %v2287, %v3042
        %v3119 = vadd.f32 %v2288, %v2955
        %v3120 = vadd.f32 %v2289, %v3044
        %v3121 = vadd.f32 %v2290, %v2958
        %v3122 = vadd.f32 %v2291, %v3047
        %v3123 = vadd.f32 %v2292, %v2960
        %v3124 = vadd.f32 %v2293, %v3049
        %v3125 = vadd.f32 %v2294, %v2963
        %v3126 = vadd.f32 %v2295, %v3052
        %v3127 = vadd.f32 %v2296, %v2965
        %v3128 = vadd.f32 %v2297, %v3054
        %v3129 = vadd.f32 %v2298, %v2968
        %v3130 = vadd.f32 %v2299, %v3057
        %v3131 = vadd.f32 %v2300, %v2970
        %v3132 = vadd.f32 %v2301, %v3059
        %v3133 = vadd.f32 %v2302, %v2973
        %v3134 = vadd.f32 %v2303, %v3062
        %v3135 = vadd.f32 %v2304, %v2975
        %v3136 = vadd.f32 %v2305, %v3064
        %v3137 = vadd.f32 %v2306, %v2978
        %v3138 = vadd.f32 %v2307, %v3067
        %v3139 = vadd.f32 %v2308, %v2980
        %v3140 = vadd.f32 %v2309, %v3069
        %v3141 = vadd.f32 %v2310, %v2983
        %v3142 = vadd.f32 %v2311, %v3072
        %v3143 = vadd.f32 %v2312, %v2985
        %v3144 = vadd.f32 %v2313, %v3074
        %v3145 = vadd.f32 %v2314, %v2988
        %v3146 = vadd.f32 %v2315, %v3077
        %v3147 = vadd.f32 %v2316, %v2990
        %v3148 = vadd.f32 %v2317, %v3079
        %v3149 = vadd.f32 %v2318, %v2993
        %v3150 = vadd.f32 %v2319, %v3082
        %v3151 = vadd.f32 %v2320, %v2995
        %v3152 = vadd.f32 %v2321, %v3084
        %v3153 = vadd.f32 %v2322, %v2998
        %v3154 = vadd.f32 %v2323, %v3087
        %v3155 = vadd.f32 %v2324, %v3000
        %v3156 = vadd.f32 %v2325, %v3089
        %v3157 = vadd.f32 %v2326, %v3003
        %v3158 = vadd.f32 %v2327, %v3092
        %v3159 = vadd.f32 %v2328, %v3005
        %v3160 = vadd.f32 %v2329, %v3094
        %v3161 = vadd.f32 %v2330, %v3008
        %v3162 = vadd.f32 %v2331, %v3097
        %v3163 = vadd.f32 %v2332, %v3010
        %v3164 = vadd.f32 %v2333, %v3099
        %v3165 = vld [vmem:[%s1870] sm:$0xe]
        %v3166 = vld [vmem:[%s1870 + $0xc] sm:$0xe]
        %v3167 = vld [vmem:[%s1870 + $0x18] sm:$0xe]
        %v3168 = vld [vmem:[%s1870 + $0x24] sm:$0xe]
        %v3169 = vld [vmem:[%s1870 + $0x30] sm:$0xe]
        %v3170 = vld [vmem:[%s1870 + $0x3c] sm:$0xe]
        %v3171 = vld [vmem:[%s1870 + $0x48] sm:$0xe]
        %v3172 = vld [vmem:[%s1870 + $0x54] sm:$0xe]
        %v3173 = vld [vmem:[%s1870 + $0x60] sm:$0xe]
        %v3174 = vld [vmem:[%s1870 + $0x6c] sm:$0xe]
        %v3175 = vld [vmem:[%s1870 + $0x78] sm:$0xe]
        %v3176 = vld [vmem:[%s1870 + $0x84] sm:$0xe]
        %v3177 = vld [vmem:[%s1870 + $0x90] sm:$0xe]
        %v3178 = vld [vmem:[%s1870 + $0x9c] sm:$0xe]
        %v3179 = vld [vmem:[%s1870 + $0xa8] sm:$0xe]
        %v3180 = vld [vmem:[%s1870 + $0xb4] sm:$0xe]
        %v3229 = vrot.slane %v3165, 5
        %v3230 = vrot.slane %v3229, 4
        %v3231 = vrot.slane %v2335, 5
        %v3232 = vsel %vm1358, %v3230, %v3231
        %v3233 = vrot.slane %v3231, 4
        %v3234 = vrot.slane %v2336, 5
        %v3235 = vsel %vm1358, %v3233, %v3234
        %v3236 = vrot.slane %v3166, 5
        %v3237 = vrot.slane %v3236, 4
        %v3238 = vrot.slane %v2338, 5
        %v3239 = vsel %vm1358, %v3237, %v3238
        %v3240 = vrot.slane %v3238, 4
        %v3241 = vrot.slane %v2339, 5
        %v3242 = vsel %vm1358, %v3240, %v3241
        %v3243 = vrot.slane %v3167, 5
        %v3244 = vrot.slane %v3243, 4
        %v3245 = vrot.slane %v2341, 5
        %v3246 = vsel %vm1358, %v3244, %v3245
        %v3247 = vrot.slane %v3245, 4
        %v3248 = vrot.slane %v2342, 5
        %v3249 = vsel %vm1358, %v3247, %v3248
        %v3250 = vrot.slane %v3168, 5
        %v3251 = vrot.slane %v3250, 4
        %v3252 = vrot.slane %v2344, 5
        %v3253 = vsel %vm1358, %v3251, %v3252
        %v3254 = vrot.slane %v3252, 4
        %v3255 = vrot.slane %v2345, 5
        %v3256 = vsel %vm1358, %v3254, %v3255
        %v3257 = vrot.slane %v3169, 5
        %v3258 = vrot.slane %v3257, 4
        %v3259 = vrot.slane %v2347, 5
        %v3260 = vsel %vm1358, %v3258, %v3259
        %v3261 = vrot.slane %v3259, 4
        %v3262 = vrot.slane %v2348, 5
        %v3263 = vsel %vm1358, %v3261, %v3262
        %v3264 = vrot.slane %v3170, 5
        %v3265 = vrot.slane %v3264, 4
        %v3266 = vrot.slane %v2350, 5
        %v3267 = vsel %vm1358, %v3265, %v3266
        %v3268 = vrot.slane %v3266, 4
        %v3269 = vrot.slane %v2351, 5
        %v3270 = vsel %vm1358, %v3268, %v3269
        %v3271 = vrot.slane %v3171, 5
        %v3272 = vrot.slane %v3271, 4
        %v3273 = vrot.slane %v2353, 5
        %v3274 = vsel %vm1358, %v3272, %v3273
        %v3275 = vrot.slane %v3273, 4
        %v3276 = vrot.slane %v2354, 5
        %v3277 = vsel %vm1358, %v3275, %v3276
        %v3278 = vrot.slane %v3172, 5
        %v3279 = vrot.slane %v3278, 4
        %v3280 = vrot.slane %v2356, 5
        %v3281 = vsel %vm1358, %v3279, %v3280
        %v3282 = vrot.slane %v3280, 4
        %v3283 = vrot.slane %v2357, 5
        %v3284 = vsel %vm1358, %v3282, %v3283
        %v3285 = vrot.slane %v3173, 5
        %v3286 = vrot.slane %v3285, 4
        %v3287 = vrot.slane %v2359, 5
        %v3288 = vsel %vm1358, %v3286, %v3287
        %v3289 = vrot.slane %v3287, 4
        %v3290 = vrot.slane %v2360, 5
        %v3291 = vsel %vm1358, %v3289, %v3290
        %v3292 = vrot.slane %v3174, 5
        %v3293 = vrot.slane %v3292, 4
        %v3294 = vrot.slane %v2362, 5
        %v3295 = vsel %vm1358, %v3293, %v3294
        %v3296 = vrot.slane %v3294, 4
        %v3297 = vrot.slane %v2363, 5
        %v3298 = vsel %vm1358, %v3296, %v3297
        %v3299 = vrot.slane %v3175, 5
        %v3300 = vrot.slane %v3299, 4
        %v3301 = vrot.slane %v2365, 5
        %v3302 = vsel %vm1358, %v3300, %v3301
        %v3303 = vrot.slane %v3301, 4
        %v3304 = vrot.slane %v2366, 5
        %v3305 = vsel %vm1358, %v3303, %v3304
        %v3306 = vrot.slane %v3176, 5
        %v3307 = vrot.slane %v3306, 4
        %v3308 = vrot.slane %v2368, 5
        %v3309 = vsel %vm1358, %v3307, %v3308
        %v3310 = vrot.slane %v3308, 4
        %v3311 = vrot.slane %v2369, 5
        %v3312 = vsel %vm1358, %v3310, %v3311
        %v3313 = vrot.slane %v3177, 5
        %v3314 = vrot.slane %v3313, 4
        %v3315 = vrot.slane %v2371, 5
        %v3316 = vsel %vm1358, %v3314, %v3315
        %v3317 = vrot.slane %v3315, 4
        %v3318 = vrot.slane %v2372, 5
        %v3319 = vsel %vm1358, %v3317, %v3318
        %v3320 = vrot.slane %v3178, 5
        %v3321 = vrot.slane %v3320, 4
        %v3322 = vrot.slane %v2374, 5
        %v3323 = vsel %vm1358, %v3321, %v3322
        %v3324 = vrot.slane %v3322, 4
        %v3325 = vrot.slane %v2375, 5
        %v3326 = vsel %vm1358, %v3324, %v3325
        %v3327 = vrot.slane %v3179, 5
        %v3328 = vrot.slane %v3327, 4
        %v3329 = vrot.slane %v2377, 5
        %v3330 = vsel %vm1358, %v3328, %v3329
        %v3331 = vrot.slane %v3329, 4
        %v3332 = vrot.slane %v2378, 5
        %v3333 = vsel %vm1358, %v3331, %v3332
        %v3334 = vrot.slane %v3180, 5
        %v3335 = vrot.slane %v3334, 4
        %v3336 = vrot.slane %v2380, 5
        %v3337 = vsel %vm1358, %v3335, %v3336
        %v3338 = vrot.slane %v3336, 4
        %v3339 = vrot.slane %v2381, 5
        %v3340 = vsel %vm1358, %v3338, %v3339
        %s3341 = scalar_lea.vmem %s1, 360
        %v3342 = vld [vmem:[%s3341] sm:$0xff]
        %v3343 = vld [vmem:[%s3341 + $0x8] sm:$0xff]
        %v3344 = vld [vmem:[%s3341 + $0x10] sm:$0xff]
        %v3345 = vld [vmem:[%s3341 + $0x18] sm:$0xff]
        %v3346 = vld [vmem:[%s3341 + $0x20] sm:$0xff]
        %v3347 = vld [vmem:[%s3341 + $0x28] sm:$0xff]
        %v3348 = vld [vmem:[%s3341 + $0x30] sm:$0xff]
        %v3349 = vld [vmem:[%s3341 + $0x38] sm:$0xff]
        %v3350 = vld [vmem:[%s3341 + $0x40] sm:$0xff]
        %v3351 = vunpack.c.l.b16 %v3232
        %v3352 = vunpack.c.l.b16 %v3235
        %v3353 = vunpack.c.l.b16 %v3239
        %v3354 = vunpack.c.l.b16 %v3242
        %v3355 = vunpack.c.l.b16 %v3246
        %v3356 = vunpack.c.l.b16 %v3249
        %v3357 = vunpack.c.l.b16 %v3253
        %v3358 = vunpack.c.l.b16 %v3256
        %v3359 = vunpack.c.l.b16 %v3260
        %v3360 = vunpack.c.l.b16 %v3263
        %v3361 = vunpack.c.l.b16 %v3267
        %v3362 = vunpack.c.l.b16 %v3270
        %v3363 = vunpack.c.l.b16 %v3274
        %v3364 = vunpack.c.l.b16 %v3277
        %v3365 = vunpack.c.l.b16 %v3281
        %v3366 = vunpack.c.l.b16 %v3284
        %v3367 = vunpack.c.l.b16 %v3288
        %v3368 = vunpack.c.l.b16 %v3291
        %v3369 = vunpack.c.l.b16 %v3295
        %v3370 = vunpack.c.l.b16 %v3298
        %v3371 = vunpack.c.l.b16 %v3302
        %v3372 = vunpack.c.l.b16 %v3305
        %v3373 = vunpack.c.l.b16 %v3309
        %v3374 = vunpack.c.l.b16 %v3312
        %v3375 = vunpack.c.l.b16 %v3316
        %v3376 = vunpack.c.l.b16 %v3319
        %v3377 = vunpack.c.l.b16 %v3323
        %v3378 = vunpack.c.l.b16 %v3326
        %v3379 = vunpack.c.l.b16 %v3330
        %v3380 = vunpack.c.l.b16 %v3333
        %v3381 = vunpack.c.l.b16 %v3337
        %v3382 = vunpack.c.l.b16 %v3340
        %v3383 = vpack.c.b16 %v3352, %v3351
        %v3384 = vpack.c.b16 %v3354, %v3353
        %v3385 = vpack.c.b16 %v3356, %v3355
        %v3386 = vpack.c.b16 %v3358, %v3357
        %v3387 = vpack.c.b16 %v3360, %v3359
        %v3388 = vpack.c.b16 %v3362, %v3361
        %v3389 = vpack.c.b16 %v3364, %v3363
        %v3390 = vpack.c.b16 %v3366, %v3365
        %v3391 = vpack.c.b16 %v3368, %v3367
        %v3392 = vpack.c.b16 %v3370, %v3369
        %v3393 = vpack.c.b16 %v3372, %v3371
        %v3394 = vpack.c.b16 %v3374, %v3373
        %v3395 = vpack.c.b16 %v3376, %v3375
        %v3396 = vpack.c.b16 %v3378, %v3377
        %v3397 = vpack.c.b16 %v3380, %v3379
        %v3398 = vpack.c.b16 %v3382, %v3381
        %v3408 = vunpack.c.l.b16 %v3342
        %v3409 = vunpack.c.h.b16 %v3342
        %v3410 = vunpack.c.l.b16 %v3343
        %v3411 = vunpack.c.h.b16 %v3343
        %v3412 = vunpack.c.l.b16 %v3344
        %v3413 = vunpack.c.h.b16 %v3344
        %v3414 = vunpack.c.l.b16 %v3345
        %v3415 = vunpack.c.h.b16 %v3345
        %v3416 = vunpack.c.l.b16 %v3346
        %v3417 = vunpack.c.h.b16 %v3346
        %v3418 = vunpack.c.l.b16 %v3347
        %v3419 = vunpack.c.h.b16 %v3347
        %v3420 = vunpack.c.l.b16 %v3348
        %v3421 = vunpack.c.h.b16 %v3348
        %v3422 = vunpack.c.l.b16 %v3349
        %v3423 = vunpack.c.h.b16 %v3349
        %v3424 = vunpack.c.l.b16 %v3350
        %v3425 = vunpack.c.h.b16 %v3350
        %v3426 = vpack.c.b16 %v3410, %v3408
        %v3427 = vpack.c.b16 %v3411, %v3409
        %v3428 = vpack.c.b16 %v3414, %v3412
        %v3429 = vpack.c.b16 %v3415, %v3413
        %v3430 = vpack.c.b16 %v3418, %v3416
        %v3431 = vpack.c.b16 %v3419, %v3417
        %v3432 = vpack.c.b16 %v3422, %v3420
        %v3433 = vpack.c.b16 %v3423, %v3421
        %v3434 = vpack.c.b16 %v3424, %v3424
        %v3435 = vpack.c.b16 %v3425, %v3425
        %v3445 = vsel %vm717, %v3383, 0
        %v3448 = vsel %vm717, %v3384, 0
        %v3451 = vsel %vm717, %v3385, 0
        %v3454 = vsel %vm717, %v3386, 0
        %v3457 = vsel %vm717, %v3387, 0
        %v3460 = vsel %vm717, %v3388, 0
        %v3463 = vsel %vm717, %v3389, 0
        %v3466 = vsel %vm717, %v3390, 0
        %v3469 = vsel %vm717, %v3391, 0
        %v3472 = vsel %vm717, %v3392, 0
        %v3475 = vsel %vm717, %v3393, 0
        %v3478 = vsel %vm717, %v3394, 0
        %v3481 = vsel %vm717, %v3395, 0
        %v3484 = vsel %vm717, %v3396, 0
        %v3487 = vsel %vm717, %v3397, 0
        %v3490 = vsel %vm717, %v3398, 0
        %v3493 = vsel %vm766, %v3434, 0
        %v3496 = vsel %vm766, %v3435, 0
        %3498 = vmatpush.bf16.msra.mxu0 0
        %3499 = vmatpush.bf16.msra.mxu0 0
        %3500 = vmatpush.bf16.msra.mxu0 0
        %3501 = vmatpush.bf16.msra.mxu0 %v3493
        %3502 = vmatpush.bf16.msra.mxu0 %v3432
        %3503 = vmatpush.bf16.msra.mxu0 %v3430
        %3504 = vmatpush.bf16.msra.mxu0 %v3428
        %3505 = vmatpush.bf16.msra.mxu0 %v3426
        %3506 = vmatmul.bf16.gmra.mxu0 %v3445
        %v3507 = vpop.f32.mrf.mxu0
        %v3508 = vadd.f32 0.0, %v3507
        %v3509 = vpop.f32.mrf.mxu0
        %v3510 = vadd.f32 0.0, %v3509
        %3511 = vmatmul.bf16.gmra.mxu0 %v3448
        %v3512 = vpop.f32.mrf.mxu0
        %v3513 = vadd.f32 0.0, %v3512
        %v3514 = vpop.f32.mrf.mxu0
        %v3515 = vadd.f32 0.0, %v3514
        %3516 = vmatmul.bf16.gmra.mxu0 %v3451
        %v3517 = vpop.f32.mrf.mxu0
        %v3518 = vadd.f32 0.0, %v3517
        %v3519 = vpop.f32.mrf.mxu0
        %v3520 = vadd.f32 0.0, %v3519
        %3521 = vmatmul.bf16.gmra.mxu0 %v3454
        %v3522 = vpop.f32.mrf.mxu0
        %v3523 = vadd.f32 0.0, %v3522
        %v3524 = vpop.f32.mrf.mxu0
        %v3525 = vadd.f32 0.0, %v3524
        %3526 = vmatmul.bf16.gmra.mxu0 %v3457
        %v3527 = vpop.f32.mrf.mxu0
        %v3528 = vadd.f32 0.0, %v3527
        %v3529 = vpop.f32.mrf.mxu0
        %v3530 = vadd.f32 0.0, %v3529
        %3531 = vmatmul.bf16.gmra.mxu0 %v3460
        %v3532 = vpop.f32.mrf.mxu0
        %v3533 = vadd.f32 0.0, %v3532
        %v3534 = vpop.f32.mrf.mxu0
        %v3535 = vadd.f32 0.0, %v3534
        %3536 = vmatmul.bf16.gmra.mxu0 %v3463
        %v3537 = vpop.f32.mrf.mxu0
        %v3538 = vadd.f32 0.0, %v3537
        %v3539 = vpop.f32.mrf.mxu0
        %v3540 = vadd.f32 0.0, %v3539
        %3541 = vmatmul.bf16.gmra.mxu0 %v3466
        %v3542 = vpop.f32.mrf.mxu0
        %v3543 = vadd.f32 0.0, %v3542
        %v3544 = vpop.f32.mrf.mxu0
        %v3545 = vadd.f32 0.0, %v3544
        %3546 = vmatmul.bf16.gmra.mxu0 %v3469
        %v3547 = vpop.f32.mrf.mxu0
        %v3548 = vadd.f32 0.0, %v3547
        %v3549 = vpop.f32.mrf.mxu0
        %v3550 = vadd.f32 0.0, %v3549
        %3551 = vmatmul.bf16.gmra.mxu0 %v3472
        %v3552 = vpop.f32.mrf.mxu0
        %v3553 = vadd.f32 0.0, %v3552
        %v3554 = vpop.f32.mrf.mxu0
        %v3555 = vadd.f32 0.0, %v3554
        %3556 = vmatmul.bf16.gmra.mxu0 %v3475
        %v3557 = vpop.f32.mrf.mxu0
        %v3558 = vadd.f32 0.0, %v3557
        %v3559 = vpop.f32.mrf.mxu0
        %v3560 = vadd.f32 0.0, %v3559
        %3561 = vmatmul.bf16.gmra.mxu0 %v3478
        %v3562 = vpop.f32.mrf.mxu0
        %v3563 = vadd.f32 0.0, %v3562
        %v3564 = vpop.f32.mrf.mxu0
        %v3565 = vadd.f32 0.0, %v3564
        %3566 = vmatmul.bf16.gmra.mxu0 %v3481
        %v3567 = vpop.f32.mrf.mxu0
        %v3568 = vadd.f32 0.0, %v3567
        %v3569 = vpop.f32.mrf.mxu0
        %v3570 = vadd.f32 0.0, %v3569
        %3571 = vmatmul.bf16.gmra.mxu0 %v3484
        %v3572 = vpop.f32.mrf.mxu0
        %v3573 = vadd.f32 0.0, %v3572
        %v3574 = vpop.f32.mrf.mxu0
        %v3575 = vadd.f32 0.0, %v3574
        %3576 = vmatmul.bf16.gmra.mxu0 %v3487
        %v3577 = vpop.f32.mrf.mxu0
        %v3578 = vadd.f32 0.0, %v3577
        %v3579 = vpop.f32.mrf.mxu0
        %v3580 = vadd.f32 0.0, %v3579
        %3581 = vmatmul.bf16.gmra.mxu0 %v3490
        %v3582 = vpop.f32.mrf.mxu0
        %v3583 = vadd.f32 0.0, %v3582
        %v3584 = vpop.f32.mrf.mxu0
        %v3585 = vadd.f32 0.0, %v3584
        %3586 = vdwg.mxu0
        %3587 = vmatpush.bf16.msra.mxu0 0
        %3588 = vmatpush.bf16.msra.mxu0 0
        %3589 = vmatpush.bf16.msra.mxu0 0
        %3590 = vmatpush.bf16.msra.mxu0 %v3496
        %3591 = vmatpush.bf16.msra.mxu0 %v3433
        %3592 = vmatpush.bf16.msra.mxu0 %v3431
        %3593 = vmatpush.bf16.msra.mxu0 %v3429
        %3594 = vmatpush.bf16.msra.mxu0 %v3427
        %3595 = vmatmul.bf16.gmra.mxu0 %v3445
        %v3596 = vpop.f32.mrf.mxu0
        %v3597 = vadd.f32 0.0, %v3596
        %v3598 = vpop.f32.mrf.mxu0
        %v3599 = vadd.f32 0.0, %v3598
        %3600 = vmatmul.bf16.gmra.mxu0 %v3448
        %v3601 = vpop.f32.mrf.mxu0
        %v3602 = vadd.f32 0.0, %v3601
        %v3603 = vpop.f32.mrf.mxu0
        %v3604 = vadd.f32 0.0, %v3603
        %3605 = vmatmul.bf16.gmra.mxu0 %v3451
        %v3606 = vpop.f32.mrf.mxu0
        %v3607 = vadd.f32 0.0, %v3606
        %v3608 = vpop.f32.mrf.mxu0
        %v3609 = vadd.f32 0.0, %v3608
        %3610 = vmatmul.bf16.gmra.mxu0 %v3454
        %v3611 = vpop.f32.mrf.mxu0
        %v3612 = vadd.f32 0.0, %v3611
        %v3613 = vpop.f32.mrf.mxu0
        %v3614 = vadd.f32 0.0, %v3613
        %3615 = vmatmul.bf16.gmra.mxu0 %v3457
        %v3616 = vpop.f32.mrf.mxu0
        %v3617 = vadd.f32 0.0, %v3616
        %v3618 = vpop.f32.mrf.mxu0
        %v3619 = vadd.f32 0.0, %v3618
        %3620 = vmatmul.bf16.gmra.mxu0 %v3460
        %v3621 = vpop.f32.mrf.mxu0
        %v3622 = vadd.f32 0.0, %v3621
        %v3623 = vpop.f32.mrf.mxu0
        %v3624 = vadd.f32 0.0, %v3623
        %3625 = vmatmul.bf16.gmra.mxu0 %v3463
        %v3626 = vpop.f32.mrf.mxu0
        %v3627 = vadd.f32 0.0, %v3626
        %v3628 = vpop.f32.mrf.mxu0
        %v3629 = vadd.f32 0.0, %v3628
        %3630 = vmatmul.bf16.gmra.mxu0 %v3466
        %v3631 = vpop.f32.mrf.mxu0
        %v3632 = vadd.f32 0.0, %v3631
        %v3633 = vpop.f32.mrf.mxu0
        %v3634 = vadd.f32 0.0, %v3633
        %3635 = vmatmul.bf16.gmra.mxu0 %v3469
        %v3636 = vpop.f32.mrf.mxu0
        %v3637 = vadd.f32 0.0, %v3636
        %v3638 = vpop.f32.mrf.mxu0
        %v3639 = vadd.f32 0.0, %v3638
        %3640 = vmatmul.bf16.gmra.mxu0 %v3472
        %v3641 = vpop.f32.mrf.mxu0
        %v3642 = vadd.f32 0.0, %v3641
        %v3643 = vpop.f32.mrf.mxu0
        %v3644 = vadd.f32 0.0, %v3643
        %3645 = vmatmul.bf16.gmra.mxu0 %v3475
        %v3646 = vpop.f32.mrf.mxu0
        %v3647 = vadd.f32 0.0, %v3646
        %v3648 = vpop.f32.mrf.mxu0
        %v3649 = vadd.f32 0.0, %v3648
        %3650 = vmatmul.bf16.gmra.mxu0 %v3478
        %v3651 = vpop.f32.mrf.mxu0
        %v3652 = vadd.f32 0.0, %v3651
        %v3653 = vpop.f32.mrf.mxu0
        %v3654 = vadd.f32 0.0, %v3653
        %3655 = vmatmul.bf16.gmra.mxu0 %v3481
        %v3656 = vpop.f32.mrf.mxu0
        %v3657 = vadd.f32 0.0, %v3656
        %v3658 = vpop.f32.mrf.mxu0
        %v3659 = vadd.f32 0.0, %v3658
        %3660 = vmatmul.bf16.gmra.mxu0 %v3484
        %v3661 = vpop.f32.mrf.mxu0
        %v3662 = vadd.f32 0.0, %v3661
        %v3663 = vpop.f32.mrf.mxu0
        %v3664 = vadd.f32 0.0, %v3663
        %3665 = vmatmul.bf16.gmra.mxu0 %v3487
        %v3666 = vpop.f32.mrf.mxu0
        %v3667 = vadd.f32 0.0, %v3666
        %v3668 = vpop.f32.mrf.mxu0
        %v3669 = vadd.f32 0.0, %v3668
        %3670 = vmatmul.bf16.gmra.mxu0 %v3490
        %v3671 = vpop.f32.mrf.mxu0
        %v3672 = vadd.f32 0.0, %v3671
        %v3673 = vpop.f32.mrf.mxu0
        %v3674 = vadd.f32 0.0, %v3673
        %3675 = vdwg.mxu0
        %v3676 = vadd.f32 %v3101, %v3508
        %v3677 = vadd.f32 %v3102, %v3597
        %v3678 = vadd.f32 %v3103, %v3510
        %v3679 = vadd.f32 %v3104, %v3599
        %v3680 = vadd.f32 %v3105, %v3513
        %v3681 = vadd.f32 %v3106, %v3602
        %v3682 = vadd.f32 %v3107, %v3515
        %v3683 = vadd.f32 %v3108, %v3604
        %v3684 = vadd.f32 %v3109, %v3518
        %v3685 = vadd.f32 %v3110, %v3607
        %v3686 = vadd.f32 %v3111, %v3520
        %v3687 = vadd.f32 %v3112, %v3609
        %v3688 = vadd.f32 %v3113, %v3523
        %v3689 = vadd.f32 %v3114, %v3612
        %v3690 = vadd.f32 %v3115, %v3525
        %v3691 = vadd.f32 %v3116, %v3614
        %v3692 = vadd.f32 %v3117, %v3528
        %v3693 = vadd.f32 %v3118, %v3617
        %v3694 = vadd.f32 %v3119, %v3530
        %v3695 = vadd.f32 %v3120, %v3619
        %v3696 = vadd.f32 %v3121, %v3533
        %v3697 = vadd.f32 %v3122, %v3622
        %v3698 = vadd.f32 %v3123, %v3535
        %v3699 = vadd.f32 %v3124, %v3624
        %v3700 = vadd.f32 %v3125, %v3538
        %v3701 = vadd.f32 %v3126, %v3627
        %v3702 = vadd.f32 %v3127, %v3540
        %v3703 = vadd.f32 %v3128, %v3629
        %v3704 = vadd.f32 %v3129, %v3543
        %v3705 = vadd.f32 %v3130, %v3632
        %v3706 = vadd.f32 %v3131, %v3545
        %v3707 = vadd.f32 %v3132, %v3634
        %v3708 = vadd.f32 %v3133, %v3548
        %v3709 = vadd.f32 %v3134, %v3637
        %v3710 = vadd.f32 %v3135, %v3550
        %v3711 = vadd.f32 %v3136, %v3639
        %v3712 = vadd.f32 %v3137, %v3553
        %v3713 = vadd.f32 %v3138, %v3642
        %v3714 = vadd.f32 %v3139, %v3555
        %v3715 = vadd.f32 %v3140, %v3644
        %v3716 = vadd.f32 %v3141, %v3558
        %v3717 = vadd.f32 %v3142, %v3647
        %v3718 = vadd.f32 %v3143, %v3560
        %v3719 = vadd.f32 %v3144, %v3649
        %v3720 = vadd.f32 %v3145, %v3563
        %v3721 = vadd.f32 %v3146, %v3652
        %v3722 = vadd.f32 %v3147, %v3565
        %v3723 = vadd.f32 %v3148, %v3654
        %v3724 = vadd.f32 %v3149, %v3568
        %v3725 = vadd.f32 %v3150, %v3657
        %v3726 = vadd.f32 %v3151, %v3570
        %v3727 = vadd.f32 %v3152, %v3659
        %v3728 = vadd.f32 %v3153, %v3573
        %v3729 = vadd.f32 %v3154, %v3662
        %v3730 = vadd.f32 %v3155, %v3575
        %v3731 = vadd.f32 %v3156, %v3664
        %v3732 = vadd.f32 %v3157, %v3578
        %v3733 = vadd.f32 %v3158, %v3667
        %v3734 = vadd.f32 %v3159, %v3580
        %v3735 = vadd.f32 %v3160, %v3669
        %v3736 = vadd.f32 %v3161, %v3583
        %v3737 = vadd.f32 %v3162, %v3672
        %v3738 = vadd.f32 %v3163, %v3585
        %v3739 = vadd.f32 %v3164, %v3674
        %s3740 = scalar_lea.vmem %s168, 24
        %v3741 = vld [vmem:[%s3740] sm:$0xf]
        %v3742 = vld [vmem:[%s3740 + $0x4] sm:$0xf]
        %v3743 = vld [vmem:[%s3740 + $0xc] sm:$0xf]
        %v3744 = vld [vmem:[%s3740 + $0x10] sm:$0xf]
        %v3745 = vld [vmem:[%s3740 + $0x18] sm:$0xf]
        %v3746 = vld [vmem:[%s3740 + $0x1c] sm:$0xf]
        %v3747 = vld [vmem:[%s3740 + $0x24] sm:$0xf]
        %v3748 = vld [vmem:[%s3740 + $0x28] sm:$0xf]
        %v3749 = vld [vmem:[%s3740 + $0x30] sm:$0xf]
        %v3750 = vld [vmem:[%s3740 + $0x34] sm:$0xf]
        %v3751 = vld [vmem:[%s3740 + $0x3c] sm:$0xf]
        %v3752 = vld [vmem:[%s3740 + $0x40] sm:$0xf]
        %v3753 = vld [vmem:[%s3740 + $0x48] sm:$0xf]
        %v3754 = vld [vmem:[%s3740 + $0x4c] sm:$0xf]
        %v3755 = vld [vmem:[%s3740 + $0x54] sm:$0xf]
        %v3756 = vld [vmem:[%s3740 + $0x58] sm:$0xf]
        %v3757 = vld [vmem:[%s3740 + $0x60] sm:$0xf]
        %v3758 = vld [vmem:[%s3740 + $0x64] sm:$0xf]
        %v3759 = vld [vmem:[%s3740 + $0x6c] sm:$0xf]
        %v3760 = vld [vmem:[%s3740 + $0x70] sm:$0xf]
        %v3761 = vld [vmem:[%s3740 + $0x78] sm:$0xf]
        %v3762 = vld [vmem:[%s3740 + $0x7c] sm:$0xf]
        %v3763 = vld [vmem:[%s3740 + $0x84] sm:$0xf]
        %v3764 = vld [vmem:[%s3740 + $0x88] sm:$0xf]
        %v3765 = vld [vmem:[%s3740 + $0x90] sm:$0xf]
        %v3766 = vld [vmem:[%s3740 + $0x94] sm:$0xf]
        %v3767 = vld [vmem:[%s3740 + $0x9c] sm:$0xf]
        %v3768 = vld [vmem:[%s3740 + $0xa0] sm:$0xf]
        %v3769 = vld [vmem:[%s3740 + $0xa8] sm:$0xf]
        %v3770 = vld [vmem:[%s3740 + $0xac] sm:$0xf]
        %v3771 = vld [vmem:[%s3740 + $0xb4] sm:$0xf]
        %v3772 = vld [vmem:[%s3740 + $0xb8] sm:$0xf]
        %s3773 = scalar_lea.vmem %s1, 432
        %v3774 = vld [vmem:[%s3773] sm:$0xff]
        %v3775 = vld [vmem:[%s3773 + $0x8] sm:$0xff]
        %v3776 = vld [vmem:[%s3773 + $0x10] sm:$0xff]
        %v3777 = vld [vmem:[%s3773 + $0x18] sm:$0xff]
        %v3778 = vld [vmem:[%s3773 + $0x20] sm:$0xff]
        %v3779 = vld [vmem:[%s3773 + $0x28] sm:$0xff]
        %v3780 = vld [vmem:[%s3773 + $0x30] sm:$0xff]
        %v3781 = vld [vmem:[%s3773 + $0x38] sm:$0xff]
        %v3782 = vld [vmem:[%s3773 + $0x40] sm:$0xff]
        %v3815 = vunpack.c.l.b16 %v3741
        %v3816 = vunpack.c.l.b16 %v3742
        %v3817 = vunpack.c.l.b16 %v3743
        %v3818 = vunpack.c.l.b16 %v3744
        %v3819 = vunpack.c.l.b16 %v3745
        %v3820 = vunpack.c.l.b16 %v3746
        %v3821 = vunpack.c.l.b16 %v3747
        %v3822 = vunpack.c.l.b16 %v3748
        %v3823 = vunpack.c.l.b16 %v3749
        %v3824 = vunpack.c.l.b16 %v3750
        %v3825 = vunpack.c.l.b16 %v3751
        %v3826 = vunpack.c.l.b16 %v3752
        %v3827 = vunpack.c.l.b16 %v3753
        %v3828 = vunpack.c.l.b16 %v3754
        %v3829 = vunpack.c.l.b16 %v3755
        %v3830 = vunpack.c.l.b16 %v3756
        %v3831 = vunpack.c.l.b16 %v3757
        %v3832 = vunpack.c.l.b16 %v3758
        %v3833 = vunpack.c.l.b16 %v3759
        %v3834 = vunpack.c.l.b16 %v3760
        %v3835 = vunpack.c.l.b16 %v3761
        %v3836 = vunpack.c.l.b16 %v3762
        %v3837 = vunpack.c.l.b16 %v3763
        %v3838 = vunpack.c.l.b16 %v3764
        %v3839 = vunpack.c.l.b16 %v3765
        %v3840 = vunpack.c.l.b16 %v3766
        %v3841 = vunpack.c.l.b16 %v3767
        %v3842 = vunpack.c.l.b16 %v3768
        %v3843 = vunpack.c.l.b16 %v3769
        %v3844 = vunpack.c.l.b16 %v3770
        %v3845 = vunpack.c.l.b16 %v3771
        %v3846 = vunpack.c.l.b16 %v3772
        %v3847 = vpack.c.b16 %v3816, %v3815
        %v3848 = vpack.c.b16 %v3818, %v3817
        %v3849 = vpack.c.b16 %v3820, %v3819
        %v3850 = vpack.c.b16 %v3822, %v3821
        %v3851 = vpack.c.b16 %v3824, %v3823
        %v3852 = vpack.c.b16 %v3826, %v3825
        %v3853 = vpack.c.b16 %v3828, %v3827
        %v3854 = vpack.c.b16 %v3830, %v3829
        %v3855 = vpack.c.b16 %v3832, %v3831
        %v3856 = vpack.c.b16 %v3834, %v3833
        %v3857 = vpack.c.b16 %v3836, %v3835
        %v3858 = vpack.c.b16 %v3838, %v3837
        %v3859 = vpack.c.b16 %v3840, %v3839
        %v3860 = vpack.c.b16 %v3842, %v3841
        %v3861 = vpack.c.b16 %v3844, %v3843
        %v3862 = vpack.c.b16 %v3846, %v3845
        %v3872 = vunpack.c.l.b16 %v3774
        %v3873 = vunpack.c.h.b16 %v3774
        %v3874 = vunpack.c.l.b16 %v3775
        %v3875 = vunpack.c.h.b16 %v3775
        %v3876 = vunpack.c.l.b16 %v3776
        %v3877 = vunpack.c.h.b16 %v3776
        %v3878 = vunpack.c.l.b16 %v3777
        %v3879 = vunpack.c.h.b16 %v3777
        %v3880 = vunpack.c.l.b16 %v3778
        %v3881 = vunpack.c.h.b16 %v3778
        %v3882 = vunpack.c.l.b16 %v3779
        %v3883 = vunpack.c.h.b16 %v3779
        %v3884 = vunpack.c.l.b16 %v3780
        %v3885 = vunpack.c.h.b16 %v3780
        %v3886 = vunpack.c.l.b16 %v3781
        %v3887 = vunpack.c.h.b16 %v3781
        %v3888 = vunpack.c.l.b16 %v3782
        %v3889 = vunpack.c.h.b16 %v3782
        %v3890 = vpack.c.b16 %v3874, %v3872
        %v3891 = vpack.c.b16 %v3875, %v3873
        %v3892 = vpack.c.b16 %v3878, %v3876
        %v3893 = vpack.c.b16 %v3879, %v3877
        %v3894 = vpack.c.b16 %v3882, %v3880
        %v3895 = vpack.c.b16 %v3883, %v3881
        %v3896 = vpack.c.b16 %v3886, %v3884
        %v3897 = vpack.c.b16 %v3887, %v3885
        %v3898 = vpack.c.b16 %v3888, %v3888
        %v3899 = vpack.c.b16 %v3889, %v3889
        %v3909 = vsel %vm717, %v3847, 0
        %v3912 = vsel %vm717, %v3848, 0
        %v3915 = vsel %vm717, %v3849, 0
        %v3918 = vsel %vm717, %v3850, 0
        %v3921 = vsel %vm717, %v3851, 0
        %v3924 = vsel %vm717, %v3852, 0
        %v3927 = vsel %vm717, %v3853, 0
        %v3930 = vsel %vm717, %v3854, 0
        %v3933 = vsel %vm717, %v3855, 0
        %v3936 = vsel %vm717, %v3856, 0
        %v3939 = vsel %vm717, %v3857, 0
        %v3942 = vsel %vm717, %v3858, 0
        %v3945 = vsel %vm717, %v3859, 0
        %v3948 = vsel %vm717, %v3860, 0
        %v3951 = vsel %vm717, %v3861, 0
        %v3954 = vsel %vm717, %v3862, 0
        %v3957 = vsel %vm766, %v3898, 0
        %v3960 = vsel %vm766, %v3899, 0
        %3962 = vmatpush.bf16.msra.mxu0 0
        %3963 = vmatpush.bf16.msra.mxu0 0
        %3964 = vmatpush.bf16.msra.mxu0 0
        %3965 = vmatpush.bf16.msra.mxu0 %v3957
        %3966 = vmatpush.bf16.msra.mxu0 %v3896
        %3967 = vmatpush.bf16.msra.mxu0 %v3894
        %3968 = vmatpush.bf16.msra.mxu0 %v3892
        %3969 = vmatpush.bf16.msra.mxu0 %v3890
        %3970 = vmatmul.bf16.gmra.mxu0 %v3909
        %v3971 = vpop.f32.mrf.mxu0
        %v3972 = vadd.f32 0.0, %v3971
        %v3973 = vpop.f32.mrf.mxu0
        %v3974 = vadd.f32 0.0, %v3973
        %3975 = vmatmul.bf16.gmra.mxu0 %v3912
        %v3976 = vpop.f32.mrf.mxu0
        %v3977 = vadd.f32 0.0, %v3976
        %v3978 = vpop.f32.mrf.mxu0
        %v3979 = vadd.f32 0.0, %v3978
        %3980 = vmatmul.bf16.gmra.mxu0 %v3915
        %v3981 = vpop.f32.mrf.mxu0
        %v3982 = vadd.f32 0.0, %v3981
        %v3983 = vpop.f32.mrf.mxu0
        %v3984 = vadd.f32 0.0, %v3983
        %3985 = vmatmul.bf16.gmra.mxu0 %v3918
        %v3986 = vpop.f32.mrf.mxu0
        %v3987 = vadd.f32 0.0, %v3986
        %v3988 = vpop.f32.mrf.mxu0
        %v3989 = vadd.f32 0.0, %v3988
        %3990 = vmatmul.bf16.gmra.mxu0 %v3921
        %v3991 = vpop.f32.mrf.mxu0
        %v3992 = vadd.f32 0.0, %v3991
        %v3993 = vpop.f32.mrf.mxu0
        %v3994 = vadd.f32 0.0, %v3993
        %3995 = vmatmul.bf16.gmra.mxu0 %v3924
        %v3996 = vpop.f32.mrf.mxu0
        %v3997 = vadd.f32 0.0, %v3996
        %v3998 = vpop.f32.mrf.mxu0
        %v3999 = vadd.f32 0.0, %v3998
        %4000 = vmatmul.bf16.gmra.mxu0 %v3927
        %v4001 = vpop.f32.mrf.mxu0
        %v4002 = vadd.f32 0.0, %v4001
        %v4003 = vpop.f32.mrf.mxu0
        %v4004 = vadd.f32 0.0, %v4003
        %4005 = vmatmul.bf16.gmra.mxu0 %v3930
        %v4006 = vpop.f32.mrf.mxu0
        %v4007 = vadd.f32 0.0, %v4006
        %v4008 = vpop.f32.mrf.mxu0
        %v4009 = vadd.f32 0.0, %v4008
        %4010 = vmatmul.bf16.gmra.mxu0 %v3933
        %v4011 = vpop.f32.mrf.mxu0
        %v4012 = vadd.f32 0.0, %v4011
        %v4013 = vpop.f32.mrf.mxu0
        %v4014 = vadd.f32 0.0, %v4013
        %4015 = vmatmul.bf16.gmra.mxu0 %v3936
        %v4016 = vpop.f32.mrf.mxu0
        %v4017 = vadd.f32 0.0, %v4016
        %v4018 = vpop.f32.mrf.mxu0
        %v4019 = vadd.f32 0.0, %v4018
        %4020 = vmatmul.bf16.gmra.mxu0 %v3939
        %v4021 = vpop.f32.mrf.mxu0
        %v4022 = vadd.f32 0.0, %v4021
        %v4023 = vpop.f32.mrf.mxu0
        %v4024 = vadd.f32 0.0, %v4023
        %4025 = vmatmul.bf16.gmra.mxu0 %v3942
        %v4026 = vpop.f32.mrf.mxu0
        %v4027 = vadd.f32 0.0, %v4026
        %v4028 = vpop.f32.mrf.mxu0
        %v4029 = vadd.f32 0.0, %v4028
        %4030 = vmatmul.bf16.gmra.mxu0 %v3945
        %v4031 = vpop.f32.mrf.mxu0
        %v4032 = vadd.f32 0.0, %v4031
        %v4033 = vpop.f32.mrf.mxu0
        %v4034 = vadd.f32 0.0, %v4033
        %4035 = vmatmul.bf16.gmra.mxu0 %v3948
        %v4036 = vpop.f32.mrf.mxu0
        %v4037 = vadd.f32 0.0, %v4036
        %v4038 = vpop.f32.mrf.mxu0
        %v4039 = vadd.f32 0.0, %v4038
        %4040 = vmatmul.bf16.gmra.mxu0 %v3951
        %v4041 = vpop.f32.mrf.mxu0
        %v4042 = vadd.f32 0.0, %v4041
        %v4043 = vpop.f32.mrf.mxu0
        %v4044 = vadd.f32 0.0, %v4043
        %4045 = vmatmul.bf16.gmra.mxu0 %v3954
        %v4046 = vpop.f32.mrf.mxu0
        %v4047 = vadd.f32 0.0, %v4046
        %v4048 = vpop.f32.mrf.mxu0
        %v4049 = vadd.f32 0.0, %v4048
        %4050 = vdwg.mxu0
        %4051 = vmatpush.bf16.msra.mxu0 0
        %4052 = vmatpush.bf16.msra.mxu0 0
        %4053 = vmatpush.bf16.msra.mxu0 0
        %4054 = vmatpush.bf16.msra.mxu0 %v3960
        %4055 = vmatpush.bf16.msra.mxu0 %v3897
        %4056 = vmatpush.bf16.msra.mxu0 %v3895
        %4057 = vmatpush.bf16.msra.mxu0 %v3893
        %4058 = vmatpush.bf16.msra.mxu0 %v3891
        %4059 = vmatmul.bf16.gmra.mxu0 %v3909
        %v4060 = vpop.f32.mrf.mxu0
        %v4061 = vadd.f32 0.0, %v4060
        %v4062 = vpop.f32.mrf.mxu0
        %v4063 = vadd.f32 0.0, %v4062
        %4064 = vmatmul.bf16.gmra.mxu0 %v3912
        %v4065 = vpop.f32.mrf.mxu0
        %v4066 = vadd.f32 0.0, %v4065
        %v4067 = vpop.f32.mrf.mxu0
        %v4068 = vadd.f32 0.0, %v4067
        %4069 = vmatmul.bf16.gmra.mxu0 %v3915
        %v4070 = vpop.f32.mrf.mxu0
        %v4071 = vadd.f32 0.0, %v4070
        %v4072 = vpop.f32.mrf.mxu0
        %v4073 = vadd.f32 0.0, %v4072
        %4074 = vmatmul.bf16.gmra.mxu0 %v3918
        %v4075 = vpop.f32.mrf.mxu0
        %v4076 = vadd.f32 0.0, %v4075
        %v4077 = vpop.f32.mrf.mxu0
        %v4078 = vadd.f32 0.0, %v4077
        %4079 = vmatmul.bf16.gmra.mxu0 %v3921
        %v4080 = vpop.f32.mrf.mxu0
        %v4081 = vadd.f32 0.0, %v4080
        %v4082 = vpop.f32.mrf.mxu0
        %v4083 = vadd.f32 0.0, %v4082
        %4084 = vmatmul.bf16.gmra.mxu0 %v3924
        %v4085 = vpop.f32.mrf.mxu0
        %v4086 = vadd.f32 0.0, %v4085
        %v4087 = vpop.f32.mrf.mxu0
        %v4088 = vadd.f32 0.0, %v4087
        %4089 = vmatmul.bf16.gmra.mxu0 %v3927
        %v4090 = vpop.f32.mrf.mxu0
        %v4091 = vadd.f32 0.0, %v4090
        %v4092 = vpop.f32.mrf.mxu0
        %v4093 = vadd.f32 0.0, %v4092
        %4094 = vmatmul.bf16.gmra.mxu0 %v3930
        %v4095 = vpop.f32.mrf.mxu0
        %v4096 = vadd.f32 0.0, %v4095
        %v4097 = vpop.f32.mrf.mxu0
        %v4098 = vadd.f32 0.0, %v4097
        %4099 = vmatmul.bf16.gmra.mxu0 %v3933
        %v4100 = vpop.f32.mrf.mxu0
        %v4101 = vadd.f32 0.0, %v4100
        %v4102 = vpop.f32.mrf.mxu0
        %v4103 = vadd.f32 0.0, %v4102
        %4104 = vmatmul.bf16.gmra.mxu0 %v3936
        %v4105 = vpop.f32.mrf.mxu0
        %v4106 = vadd.f32 0.0, %v4105
        %v4107 = vpop.f32.mrf.mxu0
        %v4108 = vadd.f32 0.0, %v4107
        %4109 = vmatmul.bf16.gmra.mxu0 %v3939
        %v4110 = vpop.f32.mrf.mxu0
        %v4111 = vadd.f32 0.0, %v4110
        %v4112 = vpop.f32.mrf.mxu0
        %v4113 = vadd.f32 0.0, %v4112
        %4114 = vmatmul.bf16.gmra.mxu0 %v3942
        %v4115 = vpop.f32.mrf.mxu0
        %v4116 = vadd.f32 0.0, %v4115
        %v4117 = vpop.f32.mrf.mxu0
        %v4118 = vadd.f32 0.0, %v4117
        %4119 = vmatmul.bf16.gmra.mxu0 %v3945
        %v4120 = vpop.f32.mrf.mxu0
        %v4121 = vadd.f32 0.0, %v4120
        %v4122 = vpop.f32.mrf.mxu0
        %v4123 = vadd.f32 0.0, %v4122
        %4124 = vmatmul.bf16.gmra.mxu0 %v3948
        %v4125 = vpop.f32.mrf.mxu0
        %v4126 = vadd.f32 0.0, %v4125
        %v4127 = vpop.f32.mrf.mxu0
        %v4128 = vadd.f32 0.0, %v4127
        %4129 = vmatmul.bf16.gmra.mxu0 %v3951
        %v4130 = vpop.f32.mrf.mxu0
        %v4131 = vadd.f32 0.0, %v4130
        %v4132 = vpop.f32.mrf.mxu0
        %v4133 = vadd.f32 0.0, %v4132
        %4134 = vmatmul.bf16.gmra.mxu0 %v3954
        %v4135 = vpop.f32.mrf.mxu0
        %v4136 = vadd.f32 0.0, %v4135
        %v4137 = vpop.f32.mrf.mxu0
        %v4138 = vadd.f32 0.0, %v4137
        %4139 = vdwg.mxu0
        %v4140 = vadd.f32 %v3676, %v3972
        %v4141 = vadd.f32 %v3677, %v4061
        %v4142 = vadd.f32 %v3678, %v3974
        %v4143 = vadd.f32 %v3679, %v4063
        %v4144 = vadd.f32 %v3680, %v3977
        %v4145 = vadd.f32 %v3681, %v4066
        %v4146 = vadd.f32 %v3682, %v3979
        %v4147 = vadd.f32 %v3683, %v4068
        %v4148 = vadd.f32 %v3684, %v3982
        %v4149 = vadd.f32 %v3685, %v4071
        %v4150 = vadd.f32 %v3686, %v3984
        %v4151 = vadd.f32 %v3687, %v4073
        %v4152 = vadd.f32 %v3688, %v3987
        %v4153 = vadd.f32 %v3689, %v4076
        %v4154 = vadd.f32 %v3690, %v3989
        %v4155 = vadd.f32 %v3691, %v4078
        %v4156 = vadd.f32 %v3692, %v3992
        %v4157 = vadd.f32 %v3693, %v4081
        %v4158 = vadd.f32 %v3694, %v3994
        %v4159 = vadd.f32 %v3695, %v4083
        %v4160 = vadd.f32 %v3696, %v3997
        %v4161 = vadd.f32 %v3697, %v4086
        %v4162 = vadd.f32 %v3698, %v3999
        %v4163 = vadd.f32 %v3699, %v4088
        %v4164 = vadd.f32 %v3700, %v4002
        %v4165 = vadd.f32 %v3701, %v4091
        %v4166 = vadd.f32 %v3702, %v4004
        %v4167 = vadd.f32 %v3703, %v4093
        %v4168 = vadd.f32 %v3704, %v4007
        %v4169 = vadd.f32 %v3705, %v4096
        %v4170 = vadd.f32 %v3706, %v4009
        %v4171 = vadd.f32 %v3707, %v4098
        %v4172 = vadd.f32 %v3708, %v4012
        %v4173 = vadd.f32 %v3709, %v4101
        %v4174 = vadd.f32 %v3710, %v4014
        %v4175 = vadd.f32 %v3711, %v4103
        %v4176 = vadd.f32 %v3712, %v4017
        %v4177 = vadd.f32 %v3713, %v4106
        %v4178 = vadd.f32 %v3714, %v4019
        %v4179 = vadd.f32 %v3715, %v4108
        %v4180 = vadd.f32 %v3716, %v4022
        %v4181 = vadd.f32 %v3717, %v4111
        %v4182 = vadd.f32 %v3718, %v4024
        %v4183 = vadd.f32 %v3719, %v4113
        %v4184 = vadd.f32 %v3720, %v4027
        %v4185 = vadd.f32 %v3721, %v4116
        %v4186 = vadd.f32 %v3722, %v4029
        %v4187 = vadd.f32 %v3723, %v4118
        %v4188 = vadd.f32 %v3724, %v4032
        %v4189 = vadd.f32 %v3725, %v4121
        %v4190 = vadd.f32 %v3726, %v4034
        %v4191 = vadd.f32 %v3727, %v4123
        %v4192 = vadd.f32 %v3728, %v4037
        %v4193 = vadd.f32 %v3729, %v4126
        %v4194 = vadd.f32 %v3730, %v4039
        %v4195 = vadd.f32 %v3731, %v4128
        %v4196 = vadd.f32 %v3732, %v4042
        %v4197 = vadd.f32 %v3733, %v4131
        %v4198 = vadd.f32 %v3734, %v4044
        %v4199 = vadd.f32 %v3735, %v4133
        %v4200 = vadd.f32 %v3736, %v4047
        %v4201 = vadd.f32 %v3737, %v4136
        %v4202 = vadd.f32 %v3738, %v4049
        %v4203 = vadd.f32 %v3739, %v4138
        %v4204 = vld [vmem:[%s3740] sm:$0xf]
        %v4205 = vld [vmem:[%s3740 + $0x4] sm:$0xf]
        %v4206 = vld [vmem:[%s3740 + $0x8] sm:$0x1]
        %v4207 = vld [vmem:[%s3740 + $0xc] sm:$0xf]
        %v4208 = vld [vmem:[%s3740 + $0x10] sm:$0xf]
        %v4209 = vld [vmem:[%s3740 + $0x14] sm:$0x1]
        %v4210 = vld [vmem:[%s3740 + $0x18] sm:$0xf]
        %v4211 = vld [vmem:[%s3740 + $0x1c] sm:$0xf]
        %v4212 = vld [vmem:[%s3740 + $0x20] sm:$0x1]
        %v4213 = vld [vmem:[%s3740 + $0x24] sm:$0xf]
        %v4214 = vld [vmem:[%s3740 + $0x28] sm:$0xf]
        %v4215 = vld [vmem:[%s3740 + $0x2c] sm:$0x1]
        %v4216 = vld [vmem:[%s3740 + $0x30] sm:$0xf]
        %v4217 = vld [vmem:[%s3740 + $0x34] sm:$0xf]
        %v4218 = vld [vmem:[%s3740 + $0x38] sm:$0x1]
        %v4219 = vld [vmem:[%s3740 + $0x3c] sm:$0xf]
        %v4220 = vld [vmem:[%s3740 + $0x40] sm:$0xf]
        %v4221 = vld [vmem:[%s3740 + $0x44] sm:$0x1]
        %v4222 = vld [vmem:[%s3740 + $0x48] sm:$0xf]
        %v4223 = vld [vmem:[%s3740 + $0x4c] sm:$0xf]
        %v4224 = vld [vmem:[%s3740 + $0x50] sm:$0x1]
        %v4225 = vld [vmem:[%s3740 + $0x54] sm:$0xf]
        %v4226 = vld [vmem:[%s3740 + $0x58] sm:$0xf]
        %v4227 = vld [vmem:[%s3740 + $0x5c] sm:$0x1]
        %v4228 = vld [vmem:[%s3740 + $0x60] sm:$0xf]
        %v4229 = vld [vmem:[%s3740 + $0x64] sm:$0xf]
        %v4230 = vld [vmem:[%s3740 + $0x68] sm:$0x1]
        %v4231 = vld [vmem:[%s3740 + $0x6c] sm:$0xf]
        %v4232 = vld [vmem:[%s3740 + $0x70] sm:$0xf]
        %v4233 = vld [vmem:[%s3740 + $0x74] sm:$0x1]
        %v4234 = vld [vmem:[%s3740 + $0x78] sm:$0xf]
        %v4235 = vld [vmem:[%s3740 + $0x7c] sm:$0xf]
        %v4236 = vld [vmem:[%s3740 + $0x80] sm:$0x1]
        %v4237 = vld [vmem:[%s3740 + $0x84] sm:$0xf]
        %v4238 = vld [vmem:[%s3740 + $0x88] sm:$0xf]
        %v4239 = vld [vmem:[%s3740 + $0x8c] sm:$0x1]
        %v4240 = vld [vmem:[%s3740 + $0x90] sm:$0xf]
        %v4241 = vld [vmem:[%s3740 + $0x94] sm:$0xf]
        %v4242 = vld [vmem:[%s3740 + $0x98] sm:$0x1]
        %v4243 = vld [vmem:[%s3740 + $0x9c] sm:$0xf]
        %v4244 = vld [vmem:[%s3740 + $0xa0] sm:$0xf]
        %v4245 = vld [vmem:[%s3740 + $0xa4] sm:$0x1]
        %v4246 = vld [vmem:[%s3740 + $0xa8] sm:$0xf]
        %v4247 = vld [vmem:[%s3740 + $0xac] sm:$0xf]
        %v4248 = vld [vmem:[%s3740 + $0xb0] sm:$0x1]
        %v4249 = vld [vmem:[%s3740 + $0xb4] sm:$0xf]
        %v4250 = vld [vmem:[%s3740 + $0xb8] sm:$0xf]
        %v4251 = vld [vmem:[%s3740 + $0xbc] sm:$0x1]
        %v4253 = vshrl.u32 %v4204, 16
        %v4255 = vrot.slane %v4253, 4
        %v4256 = vshll.u32 %v4204, 16
        %v4258 = vrot.slane %v4256, 5
        %v4259 = vor.u32 %v4255, %v4258
        %v4260 = vrot.slane %v4259, 4
        %v4262 = vshll.u32 %v4205, 16
        %v4264 = vrot.slane %v4262, 5
        %v4265 = vsel %vm229, %v4260, %v4264
        %v4266 = vshrl.u32 %v4205, 16
        %v4268 = vrot.slane %v4266, 4
        %v4269 = vor.u32 %v4268, %v4264
        %v4270 = vrot.slane %v4269, 4
        %v4272 = vshll.u32 %v4206, 16
        %v4274 = vrot.slane %v4272, 5
        %v4275 = vsel %vm229, %v4270, %v4274
        %v4277 = vshrl.u32 %v4207, 16
        %v4279 = vrot.slane %v4277, 4
        %v4280 = vshll.u32 %v4207, 16
        %v4282 = vrot.slane %v4280, 5
        %v4283 = vor.u32 %v4279, %v4282
        %v4284 = vrot.slane %v4283, 4
        %v4286 = vshll.u32 %v4208, 16
        %v4288 = vrot.slane %v4286, 5
        %v4289 = vsel %vm229, %v4284, %v4288
        %v4290 = vshrl.u32 %v4208, 16
        %v4292 = vrot.slane %v4290, 4
        %v4293 = vor.u32 %v4292, %v4288
        %v4294 = vrot.slane %v4293, 4
        %v4296 = vshll.u32 %v4209, 16
        %v4298 = vrot.slane %v4296, 5
        %v4299 = vsel %vm229, %v4294, %v4298
        %v4301 = vshrl.u32 %v4210, 16
        %v4303 = vrot.slane %v4301, 4
        %v4304 = vshll.u32 %v4210, 16
        %v4306 = vrot.slane %v4304, 5
        %v4307 = vor.u32 %v4303, %v4306
        %v4308 = vrot.slane %v4307, 4
        %v4310 = vshll.u32 %v4211, 16
        %v4312 = vrot.slane %v4310, 5
        %v4313 = vsel %vm229, %v4308, %v4312
        %v4314 = vshrl.u32 %v4211, 16
        %v4316 = vrot.slane %v4314, 4
        %v4317 = vor.u32 %v4316, %v4312
        %v4318 = vrot.slane %v4317, 4
        %v4320 = vshll.u32 %v4212, 16
        %v4322 = vrot.slane %v4320, 5
        %v4323 = vsel %vm229, %v4318, %v4322
        %v4325 = vshrl.u32 %v4213, 16
        %v4327 = vrot.slane %v4325, 4
        %v4328 = vshll.u32 %v4213, 16
        %v4330 = vrot.slane %v4328, 5
        %v4331 = vor.u32 %v4327, %v4330
        %v4332 = vrot.slane %v4331, 4
        %v4334 = vshll.u32 %v4214, 16
        %v4336 = vrot.slane %v4334, 5
        %v4337 = vsel %vm229, %v4332, %v4336
        %v4338 = vshrl.u32 %v4214, 16
        %v4340 = vrot.slane %v4338, 4
        %v4341 = vor.u32 %v4340, %v4336
        %v4342 = vrot.slane %v4341, 4
        %v4344 = vshll.u32 %v4215, 16
        %v4346 = vrot.slane %v4344, 5
        %v4347 = vsel %vm229, %v4342, %v4346
        %v4349 = vshrl.u32 %v4216, 16
        %v4351 = vrot.slane %v4349, 4
        %v4352 = vshll.u32 %v4216, 16
        %v4354 = vrot.slane %v4352, 5
        %v4355 = vor.u32 %v4351, %v4354
        %v4356 = vrot.slane %v4355, 4
        %v4358 = vshll.u32 %v4217, 16
        %v4360 = vrot.slane %v4358, 5
        %v4361 = vsel %vm229, %v4356, %v4360
        %v4362 = vshrl.u32 %v4217, 16
        %v4364 = vrot.slane %v4362, 4
        %v4365 = vor.u32 %v4364, %v4360
        %v4366 = vrot.slane %v4365, 4
        %v4368 = vshll.u32 %v4218, 16
        %v4370 = vrot.slane %v4368, 5
        %v4371 = vsel %vm229, %v4366, %v4370
        %v4373 = vshrl.u32 %v4219, 16
        %v4375 = vrot.slane %v4373, 4
        %v4376 = vshll.u32 %v4219, 16
        %v4378 = vrot.slane %v4376, 5
        %v4379 = vor.u32 %v4375, %v4378
        %v4380 = vrot.slane %v4379, 4
        %v4382 = vshll.u32 %v4220, 16
        %v4384 = vrot.slane %v4382, 5
        %v4385 = vsel %vm229, %v4380, %v4384
        %v4386 = vshrl.u32 %v4220, 16
        %v4388 = vrot.slane %v4386, 4
        %v4389 = vor.u32 %v4388, %v4384
        %v4390 = vrot.slane %v4389, 4
        %v4392 = vshll.u32 %v4221, 16
        %v4394 = vrot.slane %v4392, 5
        %v4395 = vsel %vm229, %v4390, %v4394
        %v4397 = vshrl.u32 %v4222, 16
        %v4399 = vrot.slane %v4397, 4
        %v4400 = vshll.u32 %v4222, 16
        %v4402 = vrot.slane %v4400, 5
        %v4403 = vor.u32 %v4399, %v4402
        %v4404 = vrot.slane %v4403, 4
        %v4406 = vshll.u32 %v4223, 16
        %v4408 = vrot.slane %v4406, 5
        %v4409 = vsel %vm229, %v4404, %v4408
        %v4410 = vshrl.u32 %v4223, 16
        %v4412 = vrot.slane %v4410, 4
        %v4413 = vor.u32 %v4412, %v4408
        %v4414 = vrot.slane %v4413, 4
        %v4416 = vshll.u32 %v4224, 16
        %v4418 = vrot.slane %v4416, 5
        %v4419 = vsel %vm229, %v4414, %v4418
        %v4421 = vshrl.u32 %v4225, 16
        %v4423 = vrot.slane %v4421, 4
        %v4424 = vshll.u32 %v4225, 16
        %v4426 = vrot.slane %v4424, 5
        %v4427 = vor.u32 %v4423, %v4426
        %v4428 = vrot.slane %v4427, 4
        %v4430 = vshll.u32 %v4226, 16
        %v4432 = vrot.slane %v4430, 5
        %v4433 = vsel %vm229, %v4428, %v4432
        %v4434 = vshrl.u32 %v4226, 16
        %v4436 = vrot.slane %v4434, 4
        %v4437 = vor.u32 %v4436, %v4432
        %v4438 = vrot.slane %v4437, 4
        %v4440 = vshll.u32 %v4227, 16
        %v4442 = vrot.slane %v4440, 5
        %v4443 = vsel %vm229, %v4438, %v4442
        %v4445 = vshrl.u32 %v4228, 16
        %v4447 = vrot.slane %v4445, 4
        %v4448 = vshll.u32 %v4228, 16
        %v4450 = vrot.slane %v4448, 5
        %v4451 = vor.u32 %v4447, %v4450
        %v4452 = vrot.slane %v4451, 4
        %v4454 = vshll.u32 %v4229, 16
        %v4456 = vrot.slane %v4454, 5
        %v4457 = vsel %vm229, %v4452, %v4456
        %v4458 = vshrl.u32 %v4229, 16
        %v4460 = vrot.slane %v4458, 4
        %v4461 = vor.u32 %v4460, %v4456
        %v4462 = vrot.slane %v4461, 4
        %v4464 = vshll.u32 %v4230, 16
        %v4466 = vrot.slane %v4464, 5
        %v4467 = vsel %vm229, %v4462, %v4466
        %v4469 = vshrl.u32 %v4231, 16
        %v4471 = vrot.slane %v4469, 4
        %v4472 = vshll.u32 %v4231, 16
        %v4474 = vrot.slane %v4472, 5
        %v4475 = vor.u32 %v4471, %v4474
        %v4476 = vrot.slane %v4475, 4
        %v4478 = vshll.u32 %v4232, 16
        %v4480 = vrot.slane %v4478, 5
        %v4481 = vsel %vm229, %v4476, %v4480
        %v4482 = vshrl.u32 %v4232, 16
        %v4484 = vrot.slane %v4482, 4
        %v4485 = vor.u32 %v4484, %v4480
        %v4486 = vrot.slane %v4485, 4
        %v4488 = vshll.u32 %v4233, 16
        %v4490 = vrot.slane %v4488, 5
        %v4491 = vsel %vm229, %v4486, %v4490
        %v4493 = vshrl.u32 %v4234, 16
        %v4495 = vrot.slane %v4493, 4
        %v4496 = vshll.u32 %v4234, 16
        %v4498 = vrot.slane %v4496, 5
        %v4499 = vor.u32 %v4495, %v4498
        %v4500 = vrot.slane %v4499, 4
        %v4502 = vshll.u32 %v4235, 16
        %v4504 = vrot.slane %v4502, 5
        %v4505 = vsel %vm229, %v4500, %v4504
        %v4506 = vshrl.u32 %v4235, 16
        %v4508 = vrot.slane %v4506, 4
        %v4509 = vor.u32 %v4508, %v4504
        %v4510 = vrot.slane %v4509, 4
        %v4512 = vshll.u32 %v4236, 16
        %v4514 = vrot.slane %v4512, 5
        %v4515 = vsel %vm229, %v4510, %v4514
        %v4517 = vshrl.u32 %v4237, 16
        %v4519 = vrot.slane %v4517, 4
        %v4520 = vshll.u32 %v4237, 16
        %v4522 = vrot.slane %v4520, 5
        %v4523 = vor.u32 %v4519, %v4522
        %v4524 = vrot.slane %v4523, 4
        %v4526 = vshll.u32 %v4238, 16
        %v4528 = vrot.slane %v4526, 5
        %v4529 = vsel %vm229, %v4524, %v4528
        %v4530 = vshrl.u32 %v4238, 16
        %v4532 = vrot.slane %v4530, 4
        %v4533 = vor.u32 %v4532, %v4528
        %v4534 = vrot.slane %v4533, 4
        %v4536 = vshll.u32 %v4239, 16
        %v4538 = vrot.slane %v4536, 5
        %v4539 = vsel %vm229, %v4534, %v4538
        %v4541 = vshrl.u32 %v4240, 16
        %v4543 = vrot.slane %v4541, 4
        %v4544 = vshll.u32 %v4240, 16
        %v4546 = vrot.slane %v4544, 5
        %v4547 = vor.u32 %v4543, %v4546
        %v4548 = vrot.slane %v4547, 4
        %v4550 = vshll.u32 %v4241, 16
        %v4552 = vrot.slane %v4550, 5
        %v4553 = vsel %vm229, %v4548, %v4552
        %v4554 = vshrl.u32 %v4241, 16
        %v4556 = vrot.slane %v4554, 4
        %v4557 = vor.u32 %v4556, %v4552
        %v4558 = vrot.slane %v4557, 4
        %v4560 = vshll.u32 %v4242, 16
        %v4562 = vrot.slane %v4560, 5
        %v4563 = vsel %vm229, %v4558, %v4562
        %v4565 = vshrl.u32 %v4243, 16
        %v4567 = vrot.slane %v4565, 4
        %v4568 = vshll.u32 %v4243, 16
        %v4570 = vrot.slane %v4568, 5
        %v4571 = vor.u32 %v4567, %v4570
        %v4572 = vrot.slane %v4571, 4
        %v4574 = vshll.u32 %v4244, 16
        %v4576 = vrot.slane %v4574, 5
        %v4577 = vsel %vm229, %v4572, %v4576
        %v4578 = vshrl.u32 %v4244, 16
        %v4580 = vrot.slane %v4578, 4
        %v4581 = vor.u32 %v4580, %v4576
        %v4582 = vrot.slane %v4581, 4
        %v4584 = vshll.u32 %v4245, 16
        %v4586 = vrot.slane %v4584, 5
        %v4587 = vsel %vm229, %v4582, %v4586
        %v4589 = vshrl.u32 %v4246, 16
        %v4591 = vrot.slane %v4589, 4
        %v4592 = vshll.u32 %v4246, 16
        %v4594 = vrot.slane %v4592, 5
        %v4595 = vor.u32 %v4591, %v4594
        %v4596 = vrot.slane %v4595, 4
        %v4598 = vshll.u32 %v4247, 16
        %v4600 = vrot.slane %v4598, 5
        %v4601 = vsel %vm229, %v4596, %v4600
        %v4602 = vshrl.u32 %v4247, 16
        %v4604 = vrot.slane %v4602, 4
        %v4605 = vor.u32 %v4604, %v4600
        %v4606 = vrot.slane %v4605, 4
        %v4608 = vshll.u32 %v4248, 16
        %v4610 = vrot.slane %v4608, 5
        %v4611 = vsel %vm229, %v4606, %v4610
        %v4613 = vshrl.u32 %v4249, 16
        %v4615 = vrot.slane %v4613, 4
        %v4616 = vshll.u32 %v4249, 16
        %v4618 = vrot.slane %v4616, 5
        %v4619 = vor.u32 %v4615, %v4618
        %v4620 = vrot.slane %v4619, 4
        %v4622 = vshll.u32 %v4250, 16
        %v4624 = vrot.slane %v4622, 5
        %v4625 = vsel %vm229, %v4620, %v4624
        %v4626 = vshrl.u32 %v4250, 16
        %v4628 = vrot.slane %v4626, 4
        %v4629 = vor.u32 %v4628, %v4624
        %v4630 = vrot.slane %v4629, 4
        %v4632 = vshll.u32 %v4251, 16
        %v4634 = vrot.slane %v4632, 5
        %v4635 = vsel %vm229, %v4630, %v4634
        %s4636 = scalar_lea.vmem %s1, 504
        %v4637 = vld [vmem:[%s4636] sm:$0xff]
        %v4638 = vld [vmem:[%s4636 + $0x8] sm:$0xff]
        %v4639 = vld [vmem:[%s4636 + $0x10] sm:$0xff]
        %v4640 = vld [vmem:[%s4636 + $0x18] sm:$0xff]
        %v4641 = vld [vmem:[%s4636 + $0x20] sm:$0xff]
        %v4642 = vld [vmem:[%s4636 + $0x28] sm:$0xff]
        %v4643 = vld [vmem:[%s4636 + $0x30] sm:$0xff]
        %v4644 = vld [vmem:[%s4636 + $0x38] sm:$0xff]
        %v4645 = vld [vmem:[%s4636 + $0x40] sm:$0xff]
        %v4646 = vunpack.c.l.b16 %v4265
        %v4647 = vunpack.c.l.b16 %v4275
        %v4648 = vunpack.c.l.b16 %v4289
        %v4649 = vunpack.c.l.b16 %v4299
        %v4650 = vunpack.c.l.b16 %v4313
        %v4651 = vunpack.c.l.b16 %v4323
        %v4652 = vunpack.c.l.b16 %v4337
        %v4653 = vunpack.c.l.b16 %v4347
        %v4654 = vunpack.c.l.b16 %v4361
        %v4655 = vunpack.c.l.b16 %v4371
        %v4656 = vunpack.c.l.b16 %v4385
        %v4657 = vunpack.c.l.b16 %v4395
        %v4658 = vunpack.c.l.b16 %v4409
        %v4659 = vunpack.c.l.b16 %v4419
        %v4660 = vunpack.c.l.b16 %v4433
        %v4661 = vunpack.c.l.b16 %v4443
        %v4662 = vunpack.c.l.b16 %v4457
        %v4663 = vunpack.c.l.b16 %v4467
        %v4664 = vunpack.c.l.b16 %v4481
        %v4665 = vunpack.c.l.b16 %v4491
        %v4666 = vunpack.c.l.b16 %v4505
        %v4667 = vunpack.c.l.b16 %v4515
        %v4668 = vunpack.c.l.b16 %v4529
        %v4669 = vunpack.c.l.b16 %v4539
        %v4670 = vunpack.c.l.b16 %v4553
        %v4671 = vunpack.c.l.b16 %v4563
        %v4672 = vunpack.c.l.b16 %v4577
        %v4673 = vunpack.c.l.b16 %v4587
        %v4674 = vunpack.c.l.b16 %v4601
        %v4675 = vunpack.c.l.b16 %v4611
        %v4676 = vunpack.c.l.b16 %v4625
        %v4677 = vunpack.c.l.b16 %v4635
        %v4678 = vpack.c.b16 %v4647, %v4646
        %v4679 = vpack.c.b16 %v4649, %v4648
        %v4680 = vpack.c.b16 %v4651, %v4650
        %v4681 = vpack.c.b16 %v4653, %v4652
        %v4682 = vpack.c.b16 %v4655, %v4654
        %v4683 = vpack.c.b16 %v4657, %v4656
        %v4684 = vpack.c.b16 %v4659, %v4658
        %v4685 = vpack.c.b16 %v4661, %v4660
        %v4686 = vpack.c.b16 %v4663, %v4662
        %v4687 = vpack.c.b16 %v4665, %v4664
        %v4688 = vpack.c.b16 %v4667, %v4666
        %v4689 = vpack.c.b16 %v4669, %v4668
        %v4690 = vpack.c.b16 %v4671, %v4670
        %v4691 = vpack.c.b16 %v4673, %v4672
        %v4692 = vpack.c.b16 %v4675, %v4674
        %v4693 = vpack.c.b16 %v4677, %v4676
        %v4703 = vunpack.c.l.b16 %v4637
        %v4704 = vunpack.c.h.b16 %v4637
        %v4705 = vunpack.c.l.b16 %v4638
        %v4706 = vunpack.c.h.b16 %v4638
        %v4707 = vunpack.c.l.b16 %v4639
        %v4708 = vunpack.c.h.b16 %v4639
        %v4709 = vunpack.c.l.b16 %v4640
        %v4710 = vunpack.c.h.b16 %v4640
        %v4711 = vunpack.c.l.b16 %v4641
        %v4712 = vunpack.c.h.b16 %v4641
        %v4713 = vunpack.c.l.b16 %v4642
        %v4714 = vunpack.c.h.b16 %v4642
        %v4715 = vunpack.c.l.b16 %v4643
        %v4716 = vunpack.c.h.b16 %v4643
        %v4717 = vunpack.c.l.b16 %v4644
        %v4718 = vunpack.c.h.b16 %v4644
        %v4719 = vunpack.c.l.b16 %v4645
        %v4720 = vunpack.c.h.b16 %v4645
        %v4721 = vpack.c.b16 %v4705, %v4703
        %v4722 = vpack.c.b16 %v4706, %v4704
        %v4723 = vpack.c.b16 %v4709, %v4707
        %v4724 = vpack.c.b16 %v4710, %v4708
        %v4725 = vpack.c.b16 %v4713, %v4711
        %v4726 = vpack.c.b16 %v4714, %v4712
        %v4727 = vpack.c.b16 %v4717, %v4715
        %v4728 = vpack.c.b16 %v4718, %v4716
        %v4729 = vpack.c.b16 %v4719, %v4719
        %v4730 = vpack.c.b16 %v4720, %v4720
        %v4740 = vsel %vm717, %v4678, 0
        %v4743 = vsel %vm717, %v4679, 0
        %v4746 = vsel %vm717, %v4680, 0
        %v4749 = vsel %vm717, %v4681, 0
        %v4752 = vsel %vm717, %v4682, 0
        %v4755 = vsel %vm717, %v4683, 0
        %v4758 = vsel %vm717, %v4684, 0
        %v4761 = vsel %vm717, %v4685, 0
        %v4764 = vsel %vm717, %v4686, 0
        %v4767 = vsel %vm717, %v4687, 0
        %v4770 = vsel %vm717, %v4688, 0
        %v4773 = vsel %vm717, %v4689, 0
        %v4776 = vsel %vm717, %v4690, 0
        %v4779 = vsel %vm717, %v4691, 0
        %v4782 = vsel %vm717, %v4692, 0
        %v4785 = vsel %vm717, %v4693, 0
        %v4788 = vsel %vm766, %v4729, 0
        %v4791 = vsel %vm766, %v4730, 0
        %4793 = vmatpush.bf16.msra.mxu0 0
        %4794 = vmatpush.bf16.msra.mxu0 0
        %4795 = vmatpush.bf16.msra.mxu0 0
        %4796 = vmatpush.bf16.msra.mxu0 %v4788
        %4797 = vmatpush.bf16.msra.mxu0 %v4727
        %4798 = vmatpush.bf16.msra.mxu0 %v4725
        %4799 = vmatpush.bf16.msra.mxu0 %v4723
        %4800 = vmatpush.bf16.msra.mxu0 %v4721
        %4801 = vmatmul.bf16.gmra.mxu0 %v4740
        %v4802 = vpop.f32.mrf.mxu0
        %v4803 = vadd.f32 0.0, %v4802
        %v4804 = vpop.f32.mrf.mxu0
        %v4805 = vadd.f32 0.0, %v4804
        %4806 = vmatmul.bf16.gmra.mxu0 %v4743
        %v4807 = vpop.f32.mrf.mxu0
        %v4808 = vadd.f32 0.0, %v4807
        %v4809 = vpop.f32.mrf.mxu0
        %v4810 = vadd.f32 0.0, %v4809
        %4811 = vmatmul.bf16.gmra.mxu0 %v4746
        %v4812 = vpop.f32.mrf.mxu0
        %v4813 = vadd.f32 0.0, %v4812
        %v4814 = vpop.f32.mrf.mxu0
        %v4815 = vadd.f32 0.0, %v4814
        %4816 = vmatmul.bf16.gmra.mxu0 %v4749
        %v4817 = vpop.f32.mrf.mxu0
        %v4818 = vadd.f32 0.0, %v4817
        %v4819 = vpop.f32.mrf.mxu0
        %v4820 = vadd.f32 0.0, %v4819
        %4821 = vmatmul.bf16.gmra.mxu0 %v4752
        %v4822 = vpop.f32.mrf.mxu0
        %v4823 = vadd.f32 0.0, %v4822
        %v4824 = vpop.f32.mrf.mxu0
        %v4825 = vadd.f32 0.0, %v4824
        %4826 = vmatmul.bf16.gmra.mxu0 %v4755
        %v4827 = vpop.f32.mrf.mxu0
        %v4828 = vadd.f32 0.0, %v4827
        %v4829 = vpop.f32.mrf.mxu0
        %v4830 = vadd.f32 0.0, %v4829
        %4831 = vmatmul.bf16.gmra.mxu0 %v4758
        %v4832 = vpop.f32.mrf.mxu0
        %v4833 = vadd.f32 0.0, %v4832
        %v4834 = vpop.f32.mrf.mxu0
        %v4835 = vadd.f32 0.0, %v4834
        %4836 = vmatmul.bf16.gmra.mxu0 %v4761
        %v4837 = vpop.f32.mrf.mxu0
        %v4838 = vadd.f32 0.0, %v4837
        %v4839 = vpop.f32.mrf.mxu0
        %v4840 = vadd.f32 0.0, %v4839
        %4841 = vmatmul.bf16.gmra.mxu0 %v4764
        %v4842 = vpop.f32.mrf.mxu0
        %v4843 = vadd.f32 0.0, %v4842
        %v4844 = vpop.f32.mrf.mxu0
        %v4845 = vadd.f32 0.0, %v4844
        %4846 = vmatmul.bf16.gmra.mxu0 %v4767
        %v4847 = vpop.f32.mrf.mxu0
        %v4848 = vadd.f32 0.0, %v4847
        %v4849 = vpop.f32.mrf.mxu0
        %v4850 = vadd.f32 0.0, %v4849
        %4851 = vmatmul.bf16.gmra.mxu0 %v4770
        %v4852 = vpop.f32.mrf.mxu0
        %v4853 = vadd.f32 0.0, %v4852
        %v4854 = vpop.f32.mrf.mxu0
        %v4855 = vadd.f32 0.0, %v4854
        %4856 = vmatmul.bf16.gmra.mxu0 %v4773
        %v4857 = vpop.f32.mrf.mxu0
        %v4858 = vadd.f32 0.0, %v4857
        %v4859 = vpop.f32.mrf.mxu0
        %v4860 = vadd.f32 0.0, %v4859
        %4861 = vmatmul.bf16.gmra.mxu0 %v4776
        %v4862 = vpop.f32.mrf.mxu0
        %v4863 = vadd.f32 0.0, %v4862
        %v4864 = vpop.f32.mrf.mxu0
        %v4865 = vadd.f32 0.0, %v4864
        %4866 = vmatmul.bf16.gmra.mxu0 %v4779
        %v4867 = vpop.f32.mrf.mxu0
        %v4868 = vadd.f32 0.0, %v4867
        %v4869 = vpop.f32.mrf.mxu0
        %v4870 = vadd.f32 0.0, %v4869
        %4871 = vmatmul.bf16.gmra.mxu0 %v4782
        %v4872 = vpop.f32.mrf.mxu0
        %v4873 = vadd.f32 0.0, %v4872
        %v4874 = vpop.f32.mrf.mxu0
        %v4875 = vadd.f32 0.0, %v4874
        %4876 = vmatmul.bf16.gmra.mxu0 %v4785
        %v4877 = vpop.f32.mrf.mxu0
        %v4878 = vadd.f32 0.0, %v4877
        %v4879 = vpop.f32.mrf.mxu0
        %v4880 = vadd.f32 0.0, %v4879
        %4881 = vdwg.mxu0
        %4882 = vmatpush.bf16.msra.mxu0 0
        %4883 = vmatpush.bf16.msra.mxu0 0
        %4884 = vmatpush.bf16.msra.mxu0 0
        %4885 = vmatpush.bf16.msra.mxu0 %v4791
        %4886 = vmatpush.bf16.msra.mxu0 %v4728
        %4887 = vmatpush.bf16.msra.mxu0 %v4726
        %4888 = vmatpush.bf16.msra.mxu0 %v4724
        %4889 = vmatpush.bf16.msra.mxu0 %v4722
        %4890 = vmatmul.bf16.gmra.mxu0 %v4740
        %v4891 = vpop.f32.mrf.mxu0
        %v4892 = vadd.f32 0.0, %v4891
        %v4893 = vpop.f32.mrf.mxu0
        %v4894 = vadd.f32 0.0, %v4893
        %4895 = vmatmul.bf16.gmra.mxu0 %v4743
        %v4896 = vpop.f32.mrf.mxu0
        %v4897 = vadd.f32 0.0, %v4896
        %v4898 = vpop.f32.mrf.mxu0
        %v4899 = vadd.f32 0.0, %v4898
        %4900 = vmatmul.bf16.gmra.mxu0 %v4746
        %v4901 = vpop.f32.mrf.mxu0
        %v4902 = vadd.f32 0.0, %v4901
        %v4903 = vpop.f32.mrf.mxu0
        %v4904 = vadd.f32 0.0, %v4903
        %4905 = vmatmul.bf16.gmra.mxu0 %v4749
        %v4906 = vpop.f32.mrf.mxu0
        %v4907 = vadd.f32 0.0, %v4906
        %v4908 = vpop.f32.mrf.mxu0
        %v4909 = vadd.f32 0.0, %v4908
        %4910 = vmatmul.bf16.gmra.mxu0 %v4752
        %v4911 = vpop.f32.mrf.mxu0
        %v4912 = vadd.f32 0.0, %v4911
        %v4913 = vpop.f32.mrf.mxu0
        %v4914 = vadd.f32 0.0, %v4913
        %4915 = vmatmul.bf16.gmra.mxu0 %v4755
        %v4916 = vpop.f32.mrf.mxu0
        %v4917 = vadd.f32 0.0, %v4916
        %v4918 = vpop.f32.mrf.mxu0
        %v4919 = vadd.f32 0.0, %v4918
        %4920 = vmatmul.bf16.gmra.mxu0 %v4758
        %v4921 = vpop.f32.mrf.mxu0
        %v4922 = vadd.f32 0.0, %v4921
        %v4923 = vpop.f32.mrf.mxu0
        %v4924 = vadd.f32 0.0, %v4923
        %4925 = vmatmul.bf16.gmra.mxu0 %v4761
        %v4926 = vpop.f32.mrf.mxu0
        %v4927 = vadd.f32 0.0, %v4926
        %v4928 = vpop.f32.mrf.mxu0
        %v4929 = vadd.f32 0.0, %v4928
        %4930 = vmatmul.bf16.gmra.mxu0 %v4764
        %v4931 = vpop.f32.mrf.mxu0
        %v4932 = vadd.f32 0.0, %v4931
        %v4933 = vpop.f32.mrf.mxu0
        %v4934 = vadd.f32 0.0, %v4933
        %4935 = vmatmul.bf16.gmra.mxu0 %v4767
        %v4936 = vpop.f32.mrf.mxu0
        %v4937 = vadd.f32 0.0, %v4936
        %v4938 = vpop.f32.mrf.mxu0
        %v4939 = vadd.f32 0.0, %v4938
        %4940 = vmatmul.bf16.gmra.mxu0 %v4770
        %v4941 = vpop.f32.mrf.mxu0
        %v4942 = vadd.f32 0.0, %v4941
        %v4943 = vpop.f32.mrf.mxu0
        %v4944 = vadd.f32 0.0, %v4943
        %4945 = vmatmul.bf16.gmra.mxu0 %v4773
        %v4946 = vpop.f32.mrf.mxu0
        %v4947 = vadd.f32 0.0, %v4946
        %v4948 = vpop.f32.mrf.mxu0
        %v4949 = vadd.f32 0.0, %v4948
        %4950 = vmatmul.bf16.gmra.mxu0 %v4776
        %v4951 = vpop.f32.mrf.mxu0
        %v4952 = vadd.f32 0.0, %v4951
        %v4953 = vpop.f32.mrf.mxu0
        %v4954 = vadd.f32 0.0, %v4953
        %4955 = vmatmul.bf16.gmra.mxu0 %v4779
        %v4956 = vpop.f32.mrf.mxu0
        %v4957 = vadd.f32 0.0, %v4956
        %v4958 = vpop.f32.mrf.mxu0
        %v4959 = vadd.f32 0.0, %v4958
        %4960 = vmatmul.bf16.gmra.mxu0 %v4782
        %v4961 = vpop.f32.mrf.mxu0
        %v4962 = vadd.f32 0.0, %v4961
        %v4963 = vpop.f32.mrf.mxu0
        %v4964 = vadd.f32 0.0, %v4963
        %4965 = vmatmul.bf16.gmra.mxu0 %v4785
        %v4966 = vpop.f32.mrf.mxu0
        %v4967 = vadd.f32 0.0, %v4966
        %v4968 = vpop.f32.mrf.mxu0
        %v4969 = vadd.f32 0.0, %v4968
        %4970 = vdwg.mxu0
        %v4971 = vadd.f32 %v4140, %v4803
        %v4972 = vadd.f32 %v4141, %v4892
        %v4973 = vadd.f32 %v4142, %v4805
        %v4974 = vadd.f32 %v4143, %v4894
        %v4975 = vadd.f32 %v4144, %v4808
        %v4976 = vadd.f32 %v4145, %v4897
        %v4977 = vadd.f32 %v4146, %v4810
        %v4978 = vadd.f32 %v4147, %v4899
        %v4979 = vadd.f32 %v4148, %v4813
        %v4980 = vadd.f32 %v4149, %v4902
        %v4981 = vadd.f32 %v4150, %v4815
        %v4982 = vadd.f32 %v4151, %v4904
        %v4983 = vadd.f32 %v4152, %v4818
        %v4984 = vadd.f32 %v4153, %v4907
        %v4985 = vadd.f32 %v4154, %v4820
        %v4986 = vadd.f32 %v4155, %v4909
        %v4987 = vadd.f32 %v4156, %v4823
        %v4988 = vadd.f32 %v4157, %v4912
        %v4989 = vadd.f32 %v4158, %v4825
        %v4990 = vadd.f32 %v4159, %v4914
        %v4991 = vadd.f32 %v4160, %v4828
        %v4992 = vadd.f32 %v4161, %v4917
        %v4993 = vadd.f32 %v4162, %v4830
        %v4994 = vadd.f32 %v4163, %v4919
        %v4995 = vadd.f32 %v4164, %v4833
        %v4996 = vadd.f32 %v4165, %v4922
        %v4997 = vadd.f32 %v4166, %v4835
        %v4998 = vadd.f32 %v4167, %v4924
        %v4999 = vadd.f32 %v4168, %v4838
        %v5000 = vadd.f32 %v4169, %v4927
        %v5001 = vadd.f32 %v4170, %v4840
        %v5002 = vadd.f32 %v4171, %v4929
        %v5003 = vadd.f32 %v4172, %v4843
        %v5004 = vadd.f32 %v4173, %v4932
        %v5005 = vadd.f32 %v4174, %v4845
        %v5006 = vadd.f32 %v4175, %v4934
        %v5007 = vadd.f32 %v4176, %v4848
        %v5008 = vadd.f32 %v4177, %v4937
        %v5009 = vadd.f32 %v4178, %v4850
        %v5010 = vadd.f32 %v4179, %v4939
        %v5011 = vadd.f32 %v4180, %v4853
        %v5012 = vadd.f32 %v4181, %v4942
        %v5013 = vadd.f32 %v4182, %v4855
        %v5014 = vadd.f32 %v4183, %v4944
        %v5015 = vadd.f32 %v4184, %v4858
        %v5016 = vadd.f32 %v4185, %v4947
        %v5017 = vadd.f32 %v4186, %v4860
        %v5018 = vadd.f32 %v4187, %v4949
        %v5019 = vadd.f32 %v4188, %v4863
        %v5020 = vadd.f32 %v4189, %v4952
        %v5021 = vadd.f32 %v4190, %v4865
        %v5022 = vadd.f32 %v4191, %v4954
        %v5023 = vadd.f32 %v4192, %v4868
        %v5024 = vadd.f32 %v4193, %v4957
        %v5025 = vadd.f32 %v4194, %v4870
        %v5026 = vadd.f32 %v4195, %v4959
        %v5027 = vadd.f32 %v4196, %v4873
        %v5028 = vadd.f32 %v4197, %v4962
        %v5029 = vadd.f32 %v4198, %v4875
        %v5030 = vadd.f32 %v4199, %v4964
        %v5031 = vadd.f32 %v4200, %v4878
        %v5032 = vadd.f32 %v4201, %v4967
        %v5033 = vadd.f32 %v4202, %v4880
        %v5034 = vadd.f32 %v4203, %v4969
        %v5035 = vld [vmem:[%s3740] sm:$0xe]
        %v5036 = vld [vmem:[%s3740 + $0xc] sm:$0xe]
        %v5037 = vld [vmem:[%s3740 + $0x18] sm:$0xe]
        %v5038 = vld [vmem:[%s3740 + $0x24] sm:$0xe]
        %v5039 = vld [vmem:[%s3740 + $0x30] sm:$0xe]
        %v5040 = vld [vmem:[%s3740 + $0x3c] sm:$0xe]
        %v5041 = vld [vmem:[%s3740 + $0x48] sm:$0xe]
        %v5042 = vld [vmem:[%s3740 + $0x54] sm:$0xe]
        %v5043 = vld [vmem:[%s3740 + $0x60] sm:$0xe]
        %v5044 = vld [vmem:[%s3740 + $0x6c] sm:$0xe]
        %v5045 = vld [vmem:[%s3740 + $0x78] sm:$0xe]
        %v5046 = vld [vmem:[%s3740 + $0x84] sm:$0xe]
        %v5047 = vld [vmem:[%s3740 + $0x90] sm:$0xe]
        %v5048 = vld [vmem:[%s3740 + $0x9c] sm:$0xe]
        %v5049 = vld [vmem:[%s3740 + $0xa8] sm:$0xe]
        %v5050 = vld [vmem:[%s3740 + $0xb4] sm:$0xe]
        %v5099 = vrot.slane %v5035, 5
        %v5100 = vrot.slane %v5099, 4
        %v5101 = vrot.slane %v4205, 5
        %v5102 = vsel %vm1358, %v5100, %v5101
        %v5103 = vrot.slane %v5101, 4
        %v5104 = vrot.slane %v4206, 5
        %v5105 = vsel %vm1358, %v5103, %v5104
        %v5106 = vrot.slane %v5036, 5
        %v5107 = vrot.slane %v5106, 4
        %v5108 = vrot.slane %v4208, 5
        %v5109 = vsel %vm1358, %v5107, %v5108
        %v5110 = vrot.slane %v5108, 4
        %v5111 = vrot.slane %v4209, 5
        %v5112 = vsel %vm1358, %v5110, %v5111
        %v5113 = vrot.slane %v5037, 5
        %v5114 = vrot.slane %v5113, 4
        %v5115 = vrot.slane %v4211, 5
        %v5116 = vsel %vm1358, %v5114, %v5115
        %v5117 = vrot.slane %v5115, 4
        %v5118 = vrot.slane %v4212, 5
        %v5119 = vsel %vm1358, %v5117, %v5118
        %v5120 = vrot.slane %v5038, 5
        %v5121 = vrot.slane %v5120, 4
        %v5122 = vrot.slane %v4214, 5
        %v5123 = vsel %vm1358, %v5121, %v5122
        %v5124 = vrot.slane %v5122, 4
        %v5125 = vrot.slane %v4215, 5
        %v5126 = vsel %vm1358, %v5124, %v5125
        %v5127 = vrot.slane %v5039, 5
        %v5128 = vrot.slane %v5127, 4
        %v5129 = vrot.slane %v4217, 5
        %v5130 = vsel %vm1358, %v5128, %v5129
        %v5131 = vrot.slane %v5129, 4
        %v5132 = vrot.slane %v4218, 5
        %v5133 = vsel %vm1358, %v5131, %v5132
        %v5134 = vrot.slane %v5040, 5
        %v5135 = vrot.slane %v5134, 4
        %v5136 = vrot.slane %v4220, 5
        %v5137 = vsel %vm1358, %v5135, %v5136
        %v5138 = vrot.slane %v5136, 4
        %v5139 = vrot.slane %v4221, 5
        %v5140 = vsel %vm1358, %v5138, %v5139
        %v5141 = vrot.slane %v5041, 5
        %v5142 = vrot.slane %v5141, 4
        %v5143 = vrot.slane %v4223, 5
        %v5144 = vsel %vm1358, %v5142, %v5143
        %v5145 = vrot.slane %v5143, 4
        %v5146 = vrot.slane %v4224, 5
        %v5147 = vsel %vm1358, %v5145, %v5146
        %v5148 = vrot.slane %v5042, 5
        %v5149 = vrot.slane %v5148, 4
        %v5150 = vrot.slane %v4226, 5
        %v5151 = vsel %vm1358, %v5149, %v5150
        %v5152 = vrot.slane %v5150, 4
        %v5153 = vrot.slane %v4227, 5
        %v5154 = vsel %vm1358, %v5152, %v5153
        %v5155 = vrot.slane %v5043, 5
        %v5156 = vrot.slane %v5155, 4
        %v5157 = vrot.slane %v4229, 5
        %v5158 = vsel %vm1358, %v5156, %v5157
        %v5159 = vrot.slane %v5157, 4
        %v5160 = vrot.slane %v4230, 5
        %v5161 = vsel %vm1358, %v5159, %v5160
        %v5162 = vrot.slane %v5044, 5
        %v5163 = vrot.slane %v5162, 4
        %v5164 = vrot.slane %v4232, 5
        %v5165 = vsel %vm1358, %v5163, %v5164
        %v5166 = vrot.slane %v5164, 4
        %v5167 = vrot.slane %v4233, 5
        %v5168 = vsel %vm1358, %v5166, %v5167
        %v5169 = vrot.slane %v5045, 5
        %v5170 = vrot.slane %v5169, 4
        %v5171 = vrot.slane %v4235, 5
        %v5172 = vsel %vm1358, %v5170, %v5171
        %v5173 = vrot.slane %v5171, 4
        %v5174 = vrot.slane %v4236, 5
        %v5175 = vsel %vm1358, %v5173, %v5174
        %v5176 = vrot.slane %v5046, 5
        %v5177 = vrot.slane %v5176, 4
        %v5178 = vrot.slane %v4238, 5
        %v5179 = vsel %vm1358, %v5177, %v5178
        %v5180 = vrot.slane %v5178, 4
        %v5181 = vrot.slane %v4239, 5
        %v5182 = vsel %vm1358, %v5180, %v5181
        %v5183 = vrot.slane %v5047, 5
        %v5184 = vrot.slane %v5183, 4
        %v5185 = vrot.slane %v4241, 5
        %v5186 = vsel %vm1358, %v5184, %v5185
        %v5187 = vrot.slane %v5185, 4
        %v5188 = vrot.slane %v4242, 5
        %v5189 = vsel %vm1358, %v5187, %v5188
        %v5190 = vrot.slane %v5048, 5
        %v5191 = vrot.slane %v5190, 4
        %v5192 = vrot.slane %v4244, 5
        %v5193 = vsel %vm1358, %v5191, %v5192
        %v5194 = vrot.slane %v5192, 4
        %v5195 = vrot.slane %v4245, 5
        %v5196 = vsel %vm1358, %v5194, %v5195
        %v5197 = vrot.slane %v5049, 5
        %v5198 = vrot.slane %v5197, 4
        %v5199 = vrot.slane %v4247, 5
        %v5200 = vsel %vm1358, %v5198, %v5199
        %v5201 = vrot.slane %v5199, 4
        %v5202 = vrot.slane %v4248, 5
        %v5203 = vsel %vm1358, %v5201, %v5202
        %v5204 = vrot.slane %v5050, 5
        %v5205 = vrot.slane %v5204, 4
        %v5206 = vrot.slane %v4250, 5
        %v5207 = vsel %vm1358, %v5205, %v5206
        %v5208 = vrot.slane %v5206, 4
        %v5209 = vrot.slane %v4251, 5
        %v5210 = vsel %vm1358, %v5208, %v5209
        %s5211 = scalar_lea.vmem %s1, 576
        %v5212 = vld [vmem:[%s5211] sm:$0xff]
        %v5213 = vld [vmem:[%s5211 + $0x8] sm:$0xff]
        %v5214 = vld [vmem:[%s5211 + $0x10] sm:$0xff]
        %v5215 = vld [vmem:[%s5211 + $0x18] sm:$0xff]
        %v5216 = vld [vmem:[%s5211 + $0x20] sm:$0xff]
        %v5217 = vld [vmem:[%s5211 + $0x28] sm:$0xff]
        %v5218 = vld [vmem:[%s5211 + $0x30] sm:$0xff]
        %v5219 = vld [vmem:[%s5211 + $0x38] sm:$0xff]
        %v5220 = vld [vmem:[%s5211 + $0x40] sm:$0xff]
        %v5221 = vunpack.c.l.b16 %v5102
        %v5222 = vunpack.c.l.b16 %v5105
        %v5223 = vunpack.c.l.b16 %v5109
        %v5224 = vunpack.c.l.b16 %v5112
        %v5225 = vunpack.c.l.b16 %v5116
        %v5226 = vunpack.c.l.b16 %v5119
        %v5227 = vunpack.c.l.b16 %v5123
        %v5228 = vunpack.c.l.b16 %v5126
        %v5229 = vunpack.c.l.b16 %v5130
        %v5230 = vunpack.c.l.b16 %v5133
        %v5231 = vunpack.c.l.b16 %v5137
        %v5232 = vunpack.c.l.b16 %v5140
        %v5233 = vunpack.c.l.b16 %v5144
        %v5234 = vunpack.c.l.b16 %v5147
        %v5235 = vunpack.c.l.b16 %v5151
        %v5236 = vunpack.c.l.b16 %v5154
        %v5237 = vunpack.c.l.b16 %v5158
        %v5238 = vunpack.c.l.b16 %v5161
        %v5239 = vunpack.c.l.b16 %v5165
        %v5240 = vunpack.c.l.b16 %v5168
        %v5241 = vunpack.c.l.b16 %v5172
        %v5242 = vunpack.c.l.b16 %v5175
        %v5243 = vunpack.c.l.b16 %v5179
        %v5244 = vunpack.c.l.b16 %v5182
        %v5245 = vunpack.c.l.b16 %v5186
        %v5246 = vunpack.c.l.b16 %v5189
        %v5247 = vunpack.c.l.b16 %v5193
        %v5248 = vunpack.c.l.b16 %v5196
        %v5249 = vunpack.c.l.b16 %v5200
        %v5250 = vunpack.c.l.b16 %v5203
        %v5251 = vunpack.c.l.b16 %v5207
        %v5252 = vunpack.c.l.b16 %v5210
        %v5253 = vpack.c.b16 %v5222, %v5221
        %v5254 = vpack.c.b16 %v5224, %v5223
        %v5255 = vpack.c.b16 %v5226, %v5225
        %v5256 = vpack.c.b16 %v5228, %v5227
        %v5257 = vpack.c.b16 %v5230, %v5229
        %v5258 = vpack.c.b16 %v5232, %v5231
        %v5259 = vpack.c.b16 %v5234, %v5233
        %v5260 = vpack.c.b16 %v5236, %v5235
        %v5261 = vpack.c.b16 %v5238, %v5237
        %v5262 = vpack.c.b16 %v5240, %v5239
        %v5263 = vpack.c.b16 %v5242, %v5241
        %v5264 = vpack.c.b16 %v5244, %v5243
        %v5265 = vpack.c.b16 %v5246, %v5245
        %v5266 = vpack.c.b16 %v5248, %v5247
        %v5267 = vpack.c.b16 %v5250, %v5249
        %v5268 = vpack.c.b16 %v5252, %v5251
        %v5278 = vunpack.c.l.b16 %v5212
        %v5279 = vunpack.c.h.b16 %v5212
        %v5280 = vunpack.c.l.b16 %v5213
        %v5281 = vunpack.c.h.b16 %v5213
        %v5282 = vunpack.c.l.b16 %v5214
        %v5283 = vunpack.c.h.b16 %v5214
        %v5284 = vunpack.c.l.b16 %v5215
        %v5285 = vunpack.c.h.b16 %v5215
        %v5286 = vunpack.c.l.b16 %v5216
        %v5287 = vunpack.c.h.b16 %v5216
        %v5288 = vunpack.c.l.b16 %v5217
        %v5289 = vunpack.c.h.b16 %v5217
        %v5290 = vunpack.c.l.b16 %v5218
        %v5291 = vunpack.c.h.b16 %v5218
        %v5292 = vunpack.c.l.b16 %v5219
        %v5293 = vunpack.c.h.b16 %v5219
        %v5294 = vunpack.c.l.b16 %v5220
        %v5295 = vunpack.c.h.b16 %v5220
        %v5296 = vpack.c.b16 %v5280, %v5278
        %v5297 = vpack.c.b16 %v5281, %v5279
        %v5298 = vpack.c.b16 %v5284, %v5282
        %v5299 = vpack.c.b16 %v5285, %v5283
        %v5300 = vpack.c.b16 %v5288, %v5286
        %v5301 = vpack.c.b16 %v5289, %v5287
        %v5302 = vpack.c.b16 %v5292, %v5290
        %v5303 = vpack.c.b16 %v5293, %v5291
        %v5304 = vpack.c.b16 %v5294, %v5294
        %v5305 = vpack.c.b16 %v5295, %v5295
        %v5315 = vsel %vm717, %v5253, 0
        %v5318 = vsel %vm717, %v5254, 0
        %v5321 = vsel %vm717, %v5255, 0
        %v5324 = vsel %vm717, %v5256, 0
        %v5327 = vsel %vm717, %v5257, 0
        %v5330 = vsel %vm717, %v5258, 0
        %v5333 = vsel %vm717, %v5259, 0
        %v5336 = vsel %vm717, %v5260, 0
        %v5339 = vsel %vm717, %v5261, 0
        %v5342 = vsel %vm717, %v5262, 0
        %v5345 = vsel %vm717, %v5263, 0
        %v5348 = vsel %vm717, %v5264, 0
        %v5351 = vsel %vm717, %v5265, 0
        %v5354 = vsel %vm717, %v5266, 0
        %v5357 = vsel %vm717, %v5267, 0
        %v5360 = vsel %vm717, %v5268, 0
        %v5363 = vsel %vm766, %v5304, 0
        %v5366 = vsel %vm766, %v5305, 0
        %5368 = vmatpush.bf16.msra.mxu0 0
        %5369 = vmatpush.bf16.msra.mxu0 0
        %5370 = vmatpush.bf16.msra.mxu0 0
        %5371 = vmatpush.bf16.msra.mxu0 %v5363
        %5372 = vmatpush.bf16.msra.mxu0 %v5302
        %5373 = vmatpush.bf16.msra.mxu0 %v5300
        %5374 = vmatpush.bf16.msra.mxu0 %v5298
        %5375 = vmatpush.bf16.msra.mxu0 %v5296
        %5376 = vmatmul.bf16.gmra.mxu0 %v5315
        %v5377 = vpop.f32.mrf.mxu0
        %v5378 = vadd.f32 0.0, %v5377
        %v5379 = vpop.f32.mrf.mxu0
        %v5380 = vadd.f32 0.0, %v5379
        %5381 = vmatmul.bf16.gmra.mxu0 %v5318
        %v5382 = vpop.f32.mrf.mxu0
        %v5383 = vadd.f32 0.0, %v5382
        %v5384 = vpop.f32.mrf.mxu0
        %v5385 = vadd.f32 0.0, %v5384
        %5386 = vmatmul.bf16.gmra.mxu0 %v5321
        %v5387 = vpop.f32.mrf.mxu0
        %v5388 = vadd.f32 0.0, %v5387
        %v5389 = vpop.f32.mrf.mxu0
        %v5390 = vadd.f32 0.0, %v5389
        %5391 = vmatmul.bf16.gmra.mxu0 %v5324
        %v5392 = vpop.f32.mrf.mxu0
        %v5393 = vadd.f32 0.0, %v5392
        %v5394 = vpop.f32.mrf.mxu0
        %v5395 = vadd.f32 0.0, %v5394
        %5396 = vmatmul.bf16.gmra.mxu0 %v5327
        %v5397 = vpop.f32.mrf.mxu0
        %v5398 = vadd.f32 0.0, %v5397
        %v5399 = vpop.f32.mrf.mxu0
        %v5400 = vadd.f32 0.0, %v5399
        %5401 = vmatmul.bf16.gmra.mxu0 %v5330
        %v5402 = vpop.f32.mrf.mxu0
        %v5403 = vadd.f32 0.0, %v5402
        %v5404 = vpop.f32.mrf.mxu0
        %v5405 = vadd.f32 0.0, %v5404
        %5406 = vmatmul.bf16.gmra.mxu0 %v5333
        %v5407 = vpop.f32.mrf.mxu0
        %v5408 = vadd.f32 0.0, %v5407
        %v5409 = vpop.f32.mrf.mxu0
        %v5410 = vadd.f32 0.0, %v5409
        %5411 = vmatmul.bf16.gmra.mxu0 %v5336
        %v5412 = vpop.f32.mrf.mxu0
        %v5413 = vadd.f32 0.0, %v5412
        %v5414 = vpop.f32.mrf.mxu0
        %v5415 = vadd.f32 0.0, %v5414
        %5416 = vmatmul.bf16.gmra.mxu0 %v5339
        %v5417 = vpop.f32.mrf.mxu0
        %v5418 = vadd.f32 0.0, %v5417
        %v5419 = vpop.f32.mrf.mxu0
        %v5420 = vadd.f32 0.0, %v5419
        %5421 = vmatmul.bf16.gmra.mxu0 %v5342
        %v5422 = vpop.f32.mrf.mxu0
        %v5423 = vadd.f32 0.0, %v5422
        %v5424 = vpop.f32.mrf.mxu0
        %v5425 = vadd.f32 0.0, %v5424
        %5426 = vmatmul.bf16.gmra.mxu0 %v5345
        %v5427 = vpop.f32.mrf.mxu0
        %v5428 = vadd.f32 0.0, %v5427
        %v5429 = vpop.f32.mrf.mxu0
        %v5430 = vadd.f32 0.0, %v5429
        %5431 = vmatmul.bf16.gmra.mxu0 %v5348
        %v5432 = vpop.f32.mrf.mxu0
        %v5433 = vadd.f32 0.0, %v5432
        %v5434 = vpop.f32.mrf.mxu0
        %v5435 = vadd.f32 0.0, %v5434
        %5436 = vmatmul.bf16.gmra.mxu0 %v5351
        %v5437 = vpop.f32.mrf.mxu0
        %v5438 = vadd.f32 0.0, %v5437
        %v5439 = vpop.f32.mrf.mxu0
        %v5440 = vadd.f32 0.0, %v5439
        %5441 = vmatmul.bf16.gmra.mxu0 %v5354
        %v5442 = vpop.f32.mrf.mxu0
        %v5443 = vadd.f32 0.0, %v5442
        %v5444 = vpop.f32.mrf.mxu0
        %v5445 = vadd.f32 0.0, %v5444
        %5446 = vmatmul.bf16.gmra.mxu0 %v5357
        %v5447 = vpop.f32.mrf.mxu0
        %v5448 = vadd.f32 0.0, %v5447
        %v5449 = vpop.f32.mrf.mxu0
        %v5450 = vadd.f32 0.0, %v5449
        %5451 = vmatmul.bf16.gmra.mxu0 %v5360
        %v5452 = vpop.f32.mrf.mxu0
        %v5453 = vadd.f32 0.0, %v5452
        %v5454 = vpop.f32.mrf.mxu0
        %v5455 = vadd.f32 0.0, %v5454
        %5456 = vdwg.mxu0
        %5457 = vmatpush.bf16.msra.mxu0 0
        %5458 = vmatpush.bf16.msra.mxu0 0
        %5459 = vmatpush.bf16.msra.mxu0 0
        %5460 = vmatpush.bf16.msra.mxu0 %v5366
        %5461 = vmatpush.bf16.msra.mxu0 %v5303
        %5462 = vmatpush.bf16.msra.mxu0 %v5301
        %5463 = vmatpush.bf16.msra.mxu0 %v5299
        %5464 = vmatpush.bf16.msra.mxu0 %v5297
        %5465 = vmatmul.bf16.gmra.mxu0 %v5315
        %v5466 = vpop.f32.mrf.mxu0
        %v5467 = vadd.f32 0.0, %v5466
        %v5468 = vpop.f32.mrf.mxu0
        %v5469 = vadd.f32 0.0, %v5468
        %5470 = vmatmul.bf16.gmra.mxu0 %v5318
        %v5471 = vpop.f32.mrf.mxu0
        %v5472 = vadd.f32 0.0, %v5471
        %v5473 = vpop.f32.mrf.mxu0
        %v5474 = vadd.f32 0.0, %v5473
        %5475 = vmatmul.bf16.gmra.mxu0 %v5321
        %v5476 = vpop.f32.mrf.mxu0
        %v5477 = vadd.f32 0.0, %v5476
        %v5478 = vpop.f32.mrf.mxu0
        %v5479 = vadd.f32 0.0, %v5478
        %5480 = vmatmul.bf16.gmra.mxu0 %v5324
        %v5481 = vpop.f32.mrf.mxu0
        %v5482 = vadd.f32 0.0, %v5481
        %v5483 = vpop.f32.mrf.mxu0
        %v5484 = vadd.f32 0.0, %v5483
        %5485 = vmatmul.bf16.gmra.mxu0 %v5327
        %v5486 = vpop.f32.mrf.mxu0
        %v5487 = vadd.f32 0.0, %v5486
        %v5488 = vpop.f32.mrf.mxu0
        %v5489 = vadd.f32 0.0, %v5488
        %5490 = vmatmul.bf16.gmra.mxu0 %v5330
        %v5491 = vpop.f32.mrf.mxu0
        %v5492 = vadd.f32 0.0, %v5491
        %v5493 = vpop.f32.mrf.mxu0
        %v5494 = vadd.f32 0.0, %v5493
        %5495 = vmatmul.bf16.gmra.mxu0 %v5333
        %v5496 = vpop.f32.mrf.mxu0
        %v5497 = vadd.f32 0.0, %v5496
        %v5498 = vpop.f32.mrf.mxu0
        %v5499 = vadd.f32 0.0, %v5498
        %5500 = vmatmul.bf16.gmra.mxu0 %v5336
        %v5501 = vpop.f32.mrf.mxu0
        %v5502 = vadd.f32 0.0, %v5501
        %v5503 = vpop.f32.mrf.mxu0
        %v5504 = vadd.f32 0.0, %v5503
        %5505 = vmatmul.bf16.gmra.mxu0 %v5339
        %v5506 = vpop.f32.mrf.mxu0
        %v5507 = vadd.f32 0.0, %v5506
        %v5508 = vpop.f32.mrf.mxu0
        %v5509 = vadd.f32 0.0, %v5508
        %5510 = vmatmul.bf16.gmra.mxu0 %v5342
        %v5511 = vpop.f32.mrf.mxu0
        %v5512 = vadd.f32 0.0, %v5511
        %v5513 = vpop.f32.mrf.mxu0
        %v5514 = vadd.f32 0.0, %v5513
        %5515 = vmatmul.bf16.gmra.mxu0 %v5345
        %v5516 = vpop.f32.mrf.mxu0
        %v5517 = vadd.f32 0.0, %v5516
        %v5518 = vpop.f32.mrf.mxu0
        %v5519 = vadd.f32 0.0, %v5518
        %5520 = vmatmul.bf16.gmra.mxu0 %v5348
        %v5521 = vpop.f32.mrf.mxu0
        %v5522 = vadd.f32 0.0, %v5521
        %v5523 = vpop.f32.mrf.mxu0
        %v5524 = vadd.f32 0.0, %v5523
        %5525 = vmatmul.bf16.gmra.mxu0 %v5351
        %v5526 = vpop.f32.mrf.mxu0
        %v5527 = vadd.f32 0.0, %v5526
        %v5528 = vpop.f32.mrf.mxu0
        %v5529 = vadd.f32 0.0, %v5528
        %5530 = vmatmul.bf16.gmra.mxu0 %v5354
        %v5531 = vpop.f32.mrf.mxu0
        %v5532 = vadd.f32 0.0, %v5531
        %v5533 = vpop.f32.mrf.mxu0
        %v5534 = vadd.f32 0.0, %v5533
        %5535 = vmatmul.bf16.gmra.mxu0 %v5357
        %v5536 = vpop.f32.mrf.mxu0
        %v5537 = vadd.f32 0.0, %v5536
        %v5538 = vpop.f32.mrf.mxu0
        %v5539 = vadd.f32 0.0, %v5538
        %5540 = vmatmul.bf16.gmra.mxu0 %v5360
        %v5541 = vpop.f32.mrf.mxu0
        %v5542 = vadd.f32 0.0, %v5541
        %v5543 = vpop.f32.mrf.mxu0
        %v5544 = vadd.f32 0.0, %v5543
        %5545 = vdwg.mxu0
        %v5546 = vadd.f32 %v4971, %v5378
        %v5547 = vadd.f32 %v4972, %v5467
        %v5548 = vadd.f32 %v4973, %v5380
        %v5549 = vadd.f32 %v4974, %v5469
        %v5550 = vadd.f32 %v4975, %v5383
        %v5551 = vadd.f32 %v4976, %v5472
        %v5552 = vadd.f32 %v4977, %v5385
        %v5553 = vadd.f32 %v4978, %v5474
        %v5554 = vadd.f32 %v4979, %v5388
        %v5555 = vadd.f32 %v4980, %v5477
        %v5556 = vadd.f32 %v4981, %v5390
        %v5557 = vadd.f32 %v4982, %v5479
        %v5558 = vadd.f32 %v4983, %v5393
        %v5559 = vadd.f32 %v4984, %v5482
        %v5560 = vadd.f32 %v4985, %v5395
        %v5561 = vadd.f32 %v4986, %v5484
        %v5562 = vadd.f32 %v4987, %v5398
        %v5563 = vadd.f32 %v4988, %v5487
        %v5564 = vadd.f32 %v4989, %v5400
        %v5565 = vadd.f32 %v4990, %v5489
        %v5566 = vadd.f32 %v4991, %v5403
        %v5567 = vadd.f32 %v4992, %v5492
        %v5568 = vadd.f32 %v4993, %v5405
        %v5569 = vadd.f32 %v4994, %v5494
        %v5570 = vadd.f32 %v4995, %v5408
        %v5571 = vadd.f32 %v4996, %v5497
        %v5572 = vadd.f32 %v4997, %v5410
        %v5573 = vadd.f32 %v4998, %v5499
        %v5574 = vadd.f32 %v4999, %v5413
        %v5575 = vadd.f32 %v5000, %v5502
        %v5576 = vadd.f32 %v5001, %v5415
        %v5577 = vadd.f32 %v5002, %v5504
        %v5578 = vadd.f32 %v5003, %v5418
        %v5579 = vadd.f32 %v5004, %v5507
        %v5580 = vadd.f32 %v5005, %v5420
        %v5581 = vadd.f32 %v5006, %v5509
        %v5582 = vadd.f32 %v5007, %v5423
        %v5583 = vadd.f32 %v5008, %v5512
        %v5584 = vadd.f32 %v5009, %v5425
        %v5585 = vadd.f32 %v5010, %v5514
        %v5586 = vadd.f32 %v5011, %v5428
        %v5587 = vadd.f32 %v5012, %v5517
        %v5588 = vadd.f32 %v5013, %v5430
        %v5589 = vadd.f32 %v5014, %v5519
        %v5590 = vadd.f32 %v5015, %v5433
        %v5591 = vadd.f32 %v5016, %v5522
        %v5592 = vadd.f32 %v5017, %v5435
        %v5593 = vadd.f32 %v5018, %v5524
        %v5594 = vadd.f32 %v5019, %v5438
        %v5595 = vadd.f32 %v5020, %v5527
        %v5596 = vadd.f32 %v5021, %v5440
        %v5597 = vadd.f32 %v5022, %v5529
        %v5598 = vadd.f32 %v5023, %v5443
        %v5599 = vadd.f32 %v5024, %v5532
        %v5600 = vadd.f32 %v5025, %v5445
        %v5601 = vadd.f32 %v5026, %v5534
        %v5602 = vadd.f32 %v5027, %v5448
        %v5603 = vadd.f32 %v5028, %v5537
        %v5604 = vadd.f32 %v5029, %v5450
        %v5605 = vadd.f32 %v5030, %v5539
        %v5606 = vadd.f32 %v5031, %v5453
        %v5607 = vadd.f32 %v5032, %v5542
        %v5608 = vadd.f32 %v5033, %v5455
        %v5609 = vadd.f32 %v5034, %v5544
        %v5610 = vld [vmem:[%s2] sm:$0x3]
        %v5612 = vperm.slane %v5610, 0
        %v5613 = vperm.slane %v5610, 1
        %v5616 = vadd.f32 %v5546, %v5612
        %v5617 = vadd.f32 %v5547, %v5613
        %v5618 = vadd.f32 %v5548, %v5612
        %v5619 = vadd.f32 %v5549, %v5613
        %v5620 = vadd.f32 %v5550, %v5612
        %v5621 = vadd.f32 %v5551, %v5613
        %v5622 = vadd.f32 %v5552, %v5612
        %v5623 = vadd.f32 %v5553, %v5613
        %v5624 = vadd.f32 %v5554, %v5612
        %v5625 = vadd.f32 %v5555, %v5613
        %v5626 = vadd.f32 %v5556, %v5612
        %v5627 = vadd.f32 %v5557, %v5613
        %v5628 = vadd.f32 %v5558, %v5612
        %v5629 = vadd.f32 %v5559, %v5613
        %v5630 = vadd.f32 %v5560, %v5612
        %v5631 = vadd.f32 %v5561, %v5613
        %v5632 = vadd.f32 %v5562, %v5612
        %v5633 = vadd.f32 %v5563, %v5613
        %v5634 = vadd.f32 %v5564, %v5612
        %v5635 = vadd.f32 %v5565, %v5613
        %v5636 = vadd.f32 %v5566, %v5612
        %v5637 = vadd.f32 %v5567, %v5613
        %v5638 = vadd.f32 %v5568, %v5612
        %v5639 = vadd.f32 %v5569, %v5613
        %v5640 = vadd.f32 %v5570, %v5612
        %v5641 = vadd.f32 %v5571, %v5613
        %v5642 = vadd.f32 %v5572, %v5612
        %v5643 = vadd.f32 %v5573, %v5613
        %v5644 = vadd.f32 %v5574, %v5612
        %v5645 = vadd.f32 %v5575, %v5613
        %v5646 = vadd.f32 %v5576, %v5612
        %v5647 = vadd.f32 %v5577, %v5613
        %v5648 = vadd.f32 %v5578, %v5612
        %v5649 = vadd.f32 %v5579, %v5613
        %v5650 = vadd.f32 %v5580, %v5612
        %v5651 = vadd.f32 %v5581, %v5613
        %v5652 = vadd.f32 %v5582, %v5612
        %v5653 = vadd.f32 %v5583, %v5613
        %v5654 = vadd.f32 %v5584, %v5612
        %v5655 = vadd.f32 %v5585, %v5613
        %v5656 = vadd.f32 %v5586, %v5612
        %v5657 = vadd.f32 %v5587, %v5613
        %v5658 = vadd.f32 %v5588, %v5612
        %v5659 = vadd.f32 %v5589, %v5613
        %v5660 = vadd.f32 %v5590, %v5612
        %v5661 = vadd.f32 %v5591, %v5613
        %v5662 = vadd.f32 %v5592, %v5612
        %v5663 = vadd.f32 %v5593, %v5613
        %v5664 = vadd.f32 %v5594, %v5612
        %v5665 = vadd.f32 %v5595, %v5613
        %v5666 = vadd.f32 %v5596, %v5612
        %v5667 = vadd.f32 %v5597, %v5613
        %v5668 = vadd.f32 %v5598, %v5612
        %v5669 = vadd.f32 %v5599, %v5613
        %v5670 = vadd.f32 %v5600, %v5612
        %v5671 = vadd.f32 %v5601, %v5613
        %v5672 = vadd.f32 %v5602, %v5612
        %v5673 = vadd.f32 %v5603, %v5613
        %v5674 = vadd.f32 %v5604, %v5612
        %v5675 = vadd.f32 %v5605, %v5613
        %v5676 = vadd.f32 %v5606, %v5612
        %v5677 = vadd.f32 %v5607, %v5613
        %v5678 = vadd.f32 %v5608, %v5612
        %v5679 = vadd.f32 %v5609, %v5613
        %v5680 = vmax.f32 %v5616, 0.0
        %v5681 = vmax.f32 %v5617, 0.0
        %v5682 = vmax.f32 %v5618, 0.0
        %v5683 = vmax.f32 %v5619, 0.0
        %v5684 = vmax.f32 %v5620, 0.0
        %v5685 = vmax.f32 %v5621, 0.0
        %v5686 = vmax.f32 %v5622, 0.0
        %v5687 = vmax.f32 %v5623, 0.0
        %v5688 = vmax.f32 %v5624, 0.0
        %v5689 = vmax.f32 %v5625, 0.0
        %v5690 = vmax.f32 %v5626, 0.0
        %v5691 = vmax.f32 %v5627, 0.0
        %v5692 = vmax.f32 %v5628, 0.0
        %v5693 = vmax.f32 %v5629, 0.0
        %v5694 = vmax.f32 %v5630, 0.0
        %v5695 = vmax.f32 %v5631, 0.0
        %v5696 = vmax.f32 %v5632, 0.0
        %v5697 = vmax.f32 %v5633, 0.0
        %v5698 = vmax.f32 %v5634, 0.0
        %v5699 = vmax.f32 %v5635, 0.0
        %v5700 = vmax.f32 %v5636, 0.0
        %v5701 = vmax.f32 %v5637, 0.0
        %v5702 = vmax.f32 %v5638, 0.0
        %v5703 = vmax.f32 %v5639, 0.0
        %v5704 = vmax.f32 %v5640, 0.0
        %v5705 = vmax.f32 %v5641, 0.0
        %v5706 = vmax.f32 %v5642, 0.0
        %v5707 = vmax.f32 %v5643, 0.0
        %v5708 = vmax.f32 %v5644, 0.0
        %v5709 = vmax.f32 %v5645, 0.0
        %v5710 = vmax.f32 %v5646, 0.0
        %v5711 = vmax.f32 %v5647, 0.0
        %v5712 = vmax.f32 %v5648, 0.0
        %v5713 = vmax.f32 %v5649, 0.0
        %v5714 = vmax.f32 %v5650, 0.0
        %v5715 = vmax.f32 %v5651, 0.0
        %v5716 = vmax.f32 %v5652, 0.0
        %v5717 = vmax.f32 %v5653, 0.0
        %v5718 = vmax.f32 %v5654, 0.0
        %v5719 = vmax.f32 %v5655, 0.0
        %v5720 = vmax.f32 %v5656, 0.0
        %v5721 = vmax.f32 %v5657, 0.0
        %v5722 = vmax.f32 %v5658, 0.0
        %v5723 = vmax.f32 %v5659, 0.0
        %v5724 = vmax.f32 %v5660, 0.0
        %v5725 = vmax.f32 %v5661, 0.0
        %v5726 = vmax.f32 %v5662, 0.0
        %v5727 = vmax.f32 %v5663, 0.0
        %v5728 = vmax.f32 %v5664, 0.0
        %v5729 = vmax.f32 %v5665, 0.0
        %v5730 = vmax.f32 %v5666, 0.0
        %v5731 = vmax.f32 %v5667, 0.0
        %v5732 = vmax.f32 %v5668, 0.0
        %v5733 = vmax.f32 %v5669, 0.0
        %v5734 = vmax.f32 %v5670, 0.0
        %v5735 = vmax.f32 %v5671, 0.0
        %v5736 = vmax.f32 %v5672, 0.0
        %v5737 = vmax.f32 %v5673, 0.0
        %v5738 = vmax.f32 %v5674, 0.0
        %v5739 = vmax.f32 %v5675, 0.0
        %v5740 = vmax.f32 %v5676, 0.0
        %v5741 = vmax.f32 %v5677, 0.0
        %v5742 = vmax.f32 %v5678, 0.0
        %v5743 = vmax.f32 %v5679, 0.0
        %5744 = vst [vmem:[%s163] sm:$0xff] %v5680
        %5745 = vst [vmem:[%s163 + $0x8] sm:$0xff] %v5681
        %5746 = vst [vmem:[%s163 + $0x10] sm:$0xff] %v5682
        %5747 = vst [vmem:[%s163 + $0x18] sm:$0xff] %v5683
        %5748 = vst [vmem:[%s163 + $0x20] sm:$0xff] %v5684
        %5749 = vst [vmem:[%s163 + $0x28] sm:$0xff] %v5685
        %5750 = vst [vmem:[%s163 + $0x30] sm:$0xff] %v5686
        %5751 = vst [vmem:[%s163 + $0x38] sm:$0xff] %v5687
        %5752 = vst [vmem:[%s163 + $0x40] sm:$0xff] %v5688
        %5753 = vst [vmem:[%s163 + $0x48] sm:$0xff] %v5689
        %5754 = vst [vmem:[%s163 + $0x50] sm:$0xff] %v5690
        %5755 = vst [vmem:[%s163 + $0x58] sm:$0xff] %v5691
        %5756 = vst [vmem:[%s163 + $0x60] sm:$0xff] %v5692
        %5757 = vst [vmem:[%s163 + $0x68] sm:$0xff] %v5693
        %5758 = vst [vmem:[%s163 + $0x70] sm:$0xff] %v5694
        %5759 = vst [vmem:[%s163 + $0x78] sm:$0xff] %v5695
        %5760 = vst [vmem:[%s163 + $0x80] sm:$0xff] %v5696
        %5761 = vst [vmem:[%s163 + $0x88] sm:$0xff] %v5697
        %5762 = vst [vmem:[%s163 + $0x90] sm:$0xff] %v5698
        %5763 = vst [vmem:[%s163 + $0x98] sm:$0xff] %v5699
        %5764 = vst [vmem:[%s163 + $0xa0] sm:$0xff] %v5700
        %5765 = vst [vmem:[%s163 + $0xa8] sm:$0xff] %v5701
        %5766 = vst [vmem:[%s163 + $0xb0] sm:$0xff] %v5702
        %5767 = vst [vmem:[%s163 + $0xb8] sm:$0xff] %v5703
        %5768 = vst [vmem:[%s163 + $0xc0] sm:$0xff] %v5704
        %5769 = vst [vmem:[%s163 + $0xc8] sm:$0xff] %v5705
        %5770 = vst [vmem:[%s163 + $0xd0] sm:$0xff] %v5706
        %5771 = vst [vmem:[%s163 + $0xd8] sm:$0xff] %v5707
        %5772 = vst [vmem:[%s163 + $0xe0] sm:$0xff] %v5708
        %5773 = vst [vmem:[%s163 + $0xe8] sm:$0xff] %v5709
        %5774 = vst [vmem:[%s163 + $0xf0] sm:$0xff] %v5710
        %5775 = vst [vmem:[%s163 + $0xf8] sm:$0xff] %v5711
        %5776 = vst [vmem:[%s163 + $0x100] sm:$0xff] %v5712
        %5777 = vst [vmem:[%s163 + $0x108] sm:$0xff] %v5713
        %5778 = vst [vmem:[%s163 + $0x110] sm:$0xff] %v5714
        %5779 = vst [vmem:[%s163 + $0x118] sm:$0xff] %v5715
        %5780 = vst [vmem:[%s163 + $0x120] sm:$0xff] %v5716
        %5781 = vst [vmem:[%s163 + $0x128] sm:$0xff] %v5717
        %5782 = vst [vmem:[%s163 + $0x130] sm:$0xff] %v5718
        %5783 = vst [vmem:[%s163 + $0x138] sm:$0xff] %v5719
        %5784 = vst [vmem:[%s163 + $0x140] sm:$0xff] %v5720
        %5785 = vst [vmem:[%s163 + $0x148] sm:$0xff] %v5721
        %5786 = vst [vmem:[%s163 + $0x150] sm:$0xff] %v5722
        %5787 = vst [vmem:[%s163 + $0x158] sm:$0xff] %v5723
        %5788 = vst [vmem:[%s163 + $0x160] sm:$0xff] %v5724
        %5789 = vst [vmem:[%s163 + $0x168] sm:$0xff] %v5725
        %5790 = vst [vmem:[%s163 + $0x170] sm:$0xff] %v5726
        %5791 = vst [vmem:[%s163 + $0x178] sm:$0xff] %v5727
        %5792 = vst [vmem:[%s163 + $0x180] sm:$0xff] %v5728
        %5793 = vst [vmem:[%s163 + $0x188] sm:$0xff] %v5729
        %5794 = vst [vmem:[%s163 + $0x190] sm:$0xff] %v5730
        %5795 = vst [vmem:[%s163 + $0x198] sm:$0xff] %v5731
        %5796 = vst [vmem:[%s163 + $0x1a0] sm:$0xff] %v5732
        %5797 = vst [vmem:[%s163 + $0x1a8] sm:$0xff] %v5733
        %5798 = vst [vmem:[%s163 + $0x1b0] sm:$0xff] %v5734
        %5799 = vst [vmem:[%s163 + $0x1b8] sm:$0xff] %v5735
        %5800 = vst [vmem:[%s163 + $0x1c0] sm:$0xff] %v5736
        %5801 = vst [vmem:[%s163 + $0x1c8] sm:$0xff] %v5737
        %5802 = vst [vmem:[%s163 + $0x1d0] sm:$0xff] %v5738
        %5803 = vst [vmem:[%s163 + $0x1d8] sm:$0xff] %v5739
        %5804 = vst [vmem:[%s163 + $0x1e0] sm:$0xff] %v5740
        %5805 = vst [vmem:[%s163 + $0x1e8] sm:$0xff] %v5741
        %5806 = vst [vmem:[%s163 + $0x1f0] sm:$0xff] %v5742
        %5807 = vst [vmem:[%s163 + $0x1f8] sm:$0xff] %v5743
        %s5808 = sand.u32 %s93, 1
        %s5809 = scalar_lea.sflag [#allocation3], %s5808
        %s5810 = sand.u32 %s93, 1
        %s5811 = smul.addr %s5810, 512
        %s5812 = scalar_lea.vmem [#allocation2], %s5811
        // Predicated region
        $region33: #{tpu_custom_call.1} parent=31 // pred_check
          %p5813 = pneg %p103
        $region34: #{tpu_custom_call.1} parent=31 // pred_check_branch
          %5815 = sbr.rel (%p5813) target = $region36
        $region35: #{tpu_custom_call.1} parent=31 // pred_region
          %5817 = vsyncadd %s5809, 0
          %s5818 = smul.addr %s17, 64
          %s5819 = smul.addr %s5818, 8
          %s5820 = scalar_lea.hbm %s3, %s5819
          %s5821 = sshll.u32 %s5812, 4
          %s5822 = int_to_ptr.vmem [resolvable:$true] %s5821
          %s5823 = sshll.u32 %s5820, 4
          %s5824 = int_to_ptr.hbm [resolvable:$true] %s5823
          %5829 = dma.vmem_to_hbm [thread:$0]  %s5822, 8192, %s5824, %s5809, 256, 256, 16
        $region36: #{tpu_custom_call.1} parent=31 // pred_fallthru
          _
      $region32: #{tpu_custom_call.1} parent=5 // pred_fallthru
        _
      %p5830 = scmp.le.s32.totalorder 2, %s12
      // Predicated region
      $region37: #{tpu_custom_call.1} parent=5 // pred_check
        %p5831 = pneg %p5830
      $region38: #{tpu_custom_call.1} parent=5 // pred_check_branch
        %5833 = sbr.rel (%p5831) target = $region40
      $region39: #{tpu_custom_call.1} parent=5 // pred_region
        %s5834 = ssub.s32 %s12, 2
        // Predicated region
        $region41: #{tpu_custom_call.1} parent=39 // pred_check
          %p5835 = pneg %p109
        $region42: #{tpu_custom_call.1} parent=39 // pred_check_branch
          %5837 = sbr.rel (%p5835) target = $region44
        $region43: #{tpu_custom_call.1} parent=39 // pred_region
          %s5838 = sand.u32 %s94, 1
          %s5839 = scalar_lea.sflag [#allocation3], %s5838
          %s5840 = sand.u32 %s94, 1
          %s5841 = smul.addr %s5840, 512
          %s5842 = scalar_lea.vmem [#allocation2], %s5841
          %5844 = dma.done %s5839, 8192
        $region44: #{tpu_custom_call.1} parent=39 // pred_fallthru
          _
      $region40: #{tpu_custom_call.1} parent=5 // pred_fallthru
        _
    $region6: #{tpu_custom_call.1} parent=1 // loop_footer
      %s16 = sadd.s32 1, %s12
    $region7: #{tpu_custom_call.1} parent=1 // loop_footer_branch
      %11 = sbr.rel target = $region3
    $region8: #{tpu_custom_call.1} parent=1 // loop_exit
      _
    %5845 = vsyncpa [#allocation3], 1
    %s5846 = scalar_lea.sflag [#allocation3], 1
    %5847 = vsyncpa %s5846, 1

</llo_original>
